<compile_context>
chip_gen: v6e
topology: v6e:2x2x1
jax: 0.10.0
libtpu: 0.0.40
codegen_flags: <defaults>
</compile_context>

<pallas_src>
import functools

import jax
import jax.numpy as jnp
from jax.experimental import pallas as pl
from jax.experimental.pallas import tpu as pltpu


# ----------------------------- shared math ---------------------------------
def _layernorm(x, g, b, eps=1e-5):
    mu = jnp.mean(x, axis=-1, keepdims=True)
    xc = x - mu
    var = jnp.mean(xc * xc, axis=-1, keepdims=True)
    return xc * jax.lax.rsqrt(var + eps) * g + b


# ------------------------------- fused kernel --------------------------------
def _vit_kernel(patches_ref, wp_ref, emb_ref, gpre_ref, bpre_ref,
                ln1g_ref, ln1b_ref, wqkv_ref, bqkv_ref, wout_ref, bout_ref,
                ln2g_ref, ln2b_ref, wfc_ref, bfc_ref, wpr_ref, bpr_ref,
                gpost_ref, bpost_ref, proj_ref,
                out_ref, xres_ref, oheads_ref, *, num_heads):
    """grid = (layer, batch): layer outer (weights fetched once per layer),
    batch inner.  Residual stream carried in xres_ref[(B, S, W)]."""
    l = pl.program_id(0)
    b = pl.program_id(1)
    bf16 = jnp.bfloat16
    f32 = jnp.float32

    # ---- layer 0: patch-embed matmul + (CLS + positional) embedding + ln_pre.
    # patches row 0 is all-zero, so the matmul's row 0 is 0 and emb row 0
    # (= class_embedding + pos[0]) supplies the CLS token: one aligned store.
    @pl.when(l == 0)
    def _():
        pe = jnp.dot(patches_ref[...], wp_ref[...], preferred_element_type=f32)   # (S, D)
        xres_ref[b] = _layernorm(pe + emb_ref[...], gpre_ref[...], bpre_ref[...])

    x = xres_ref[b]                                                    # (S, D) f32 residual
    S, D = x.shape
    H = num_heads
    Dh = D // H

    # ---- multi-head self-attention on ln_1(x)
    h1 = _layernorm(x, ln1g_ref[...], ln1b_ref[...]).astype(bf16)
    qkv = jnp.dot(h1, wqkv_ref[...], preferred_element_type=f32) + bqkv_ref[...]
    # 1/sqrt(Dh) already folded into the Q columns of wqkv / bqkv.
    q = qkv[:, 0:D].astype(bf16)
    k = qkv[:, D:2 * D].astype(bf16)
    v = qkv[:, 2 * D:3 * D].astype(bf16)

    # TODO(synk): switch to lax.fori_loop(unroll=2) over heads for real H=16 to
    # bound live ranges of the per-head (S, S) softmax temporaries.
    for hi in range(H):
        sl = slice(hi * Dh, (hi + 1) * Dh)
        s = jnp.einsum('sd,td->st', q[:, sl], k[:, sl],
                       preferred_element_type=f32)                    # (S, S)
        s = s - jnp.max(s, axis=-1, keepdims=True)
        p = jnp.exp(s)
        p = p * pl.reciprocal(jnp.sum(p, axis=-1, keepdims=True), approx=True)
        oheads_ref[:, sl] = jnp.dot(p.astype(bf16), v[:, sl],
                                    preferred_element_type=f32).astype(bf16)
    # single full-K (S, D) @ (D, D) out-projection (MXU fully fed)
    attn = jnp.dot(oheads_ref[...], wout_ref[...],
                   preferred_element_type=f32) + bout_ref[...]
    x1 = x + attn

    # ---- MLP on ln_2(x1): c_fc -> QuickGELU (bf16) -> c_proj
    h2 = _layernorm(x1, ln2g_ref[...], ln2b_ref[...]).astype(bf16)
    f = jnp.dot(h2, wfc_ref[...], preferred_element_type=f32) + bfc_ref[...]
    f = f.astype(bf16)
    f = f * jax.nn.sigmoid(1.702 * f)                                  # QuickGELU (bf16)
    m = jnp.dot(f, wpr_ref[...], preferred_element_type=f32) + bpr_ref[...]
    x2 = x1 + m

    xres_ref[b] = x2             # carry the residual stream to the next layer step

    # ---- last layer: ln_post on the CLS token + (lane-padded) output projection
    @pl.when(l == pl.num_programs(0) - 1)
    def _():
        cls = _layernorm(x2[0:1, :], gpost_ref[...], bpost_ref[...])   # (1, D)
        out_ref[...] = jnp.dot(cls.astype(bf16), proj_ref[...],
                               preferred_element_type=f32)             # (1, Ep)


# ---------------------------- one-time param prep ----------------------------
def prepare_params(params, cfg):
    """Transpose / stack / bf16-cast weights once (not per forward pass)."""
    W = cfg['width']
    p = cfg['patch_size']
    L = cfg['layers']
    H = cfg['heads']
    E = cfg['embed_dim']
    Cpp = 3 * p * p
    Dh = W // H
    scale = Dh ** -0.5
    Ep = ((E + 127) // 128) * 128
    bf16 = jnp.bfloat16
    f32 = jnp.float32

    pos = params['positional_embedding'].astype(f32)                  # (S, W)
    add_embed = jnp.concatenate(
        [(params['class_embedding'] + pos[0])[None, :], pos[1:]], axis=0)

    def stack(key):
        return jnp.stack([lp[key] for lp in params['layers']], axis=0)

    def stack_t(key):            # stacked + pre-transposed to [in, out], bf16
        return jnp.stack([lp[key].T for lp in params['layers']], axis=0).astype(bf16)

    # fold 1/sqrt(Dh) into the Q third of the in-projection (exact: 0.125 etc.)
    qscale = jnp.concatenate(
        [jnp.full((W,), scale, f32), jnp.ones((2 * W,), f32)], axis=0)  # (3W,)
    w_qkv = (jnp.stack([lp['in_proj_w'].T for lp in params['layers']], axis=0)
             * qscale).astype(bf16)                                     # (L, W, 3W)
    b_qkv = (stack('in_proj_b') * qscale).reshape(L, 1, 3 * W).astype(f32)

    proj_pad = jnp.zeros((W, Ep), f32).at[:, :E].set(
        params['proj'].astype(f32)).astype(bf16)

    return dict(
        wp=params['conv_w'].reshape(W, Cpp).T.astype(bf16),            # (Cpp, W)
        add_embed=add_embed.astype(f32),                               # (S, W)
        ln_pre_g=params['ln_pre_g'].reshape(1, W).astype(f32),
        ln_pre_b=params['ln_pre_b'].reshape(1, W).astype(f32),
        ln1_g=stack('ln1_g').reshape(L, 1, W).astype(f32),
        ln1_b=stack('ln1_b').reshape(L, 1, W).astype(f32),
        w_qkv=w_qkv,                                                   # (L, W, 3W) bf16
        b_qkv=b_qkv,                                                   # (L, 1, 3W) f32
        w_out=stack_t('out_proj_w'),                                   # (L, W, W)
        b_out=stack('out_proj_b').reshape(L, 1, W).astype(f32),
        ln2_g=stack('ln2_g').reshape(L, 1, W).astype(f32),
        ln2_b=stack('ln2_b').reshape(L, 1, W).astype(f32),
        w_fc=stack_t('fc_w'),                                          # (L, W, 4W)
        b_fc=stack('fc_b').reshape(L, 1, 4 * W).astype(f32),
        w_pr=stack_t('cproj_w'),                                       # (L, 4W, W)
        b_pr=stack('cproj_b').reshape(L, 1, W).astype(f32),
        ln_post_g=params['ln_post_g'].reshape(1, W).astype(f32),
        ln_post_b=params['ln_post_b'].reshape(1, W).astype(f32),
        proj=proj_pad,                                                 # (W, Ep) bf16
    )


# ------------------------------ forward wrapper -------------------------------
def clip_vision_forward(image, prep, cfg):
    B = image.shape[0]
    p = cfg['patch_size']
    W = cfg['width']
    E = cfg['embed_dim']
    L = cfg['layers']
    H = cfg['heads']
    res = image.shape[2]
    g = res // p
    N = g * g
    S = N + 1
    Cpp = 3 * p * p
    Ep = ((E + 127) // 128) * 128

    # glue: patchify NCHW -> [B, N, 3*p*p] (strided conv == per-patch matmul),
    # then prepend a zero row so the CLS slot is produced by the same matmul.
    patches = image.reshape(B, 3, g, p, g, p).transpose(0, 2, 4, 1, 3, 5).reshape(B, N, Cpp)
    patches = jnp.pad(patches, ((0, 0), (1, 0), (0, 0))).astype(jnp.bfloat16)   # (B, S, Cpp)

    # --- advisory cost hint (weights now streamed once, not once per image) ---
    flops = B * L * (24 * S * W * W + 4 * S * S * W) + B * (2 * S * Cpp * W + 2 * W * Ep)
    transc = B * L * (H * S * S + 4 * S * W)
    weight_bytes = sum(int(v.nbytes) for v in prep.values())
    bytes_accessed = weight_bytes + L * int(patches.nbytes) + B * L * Ep * 4

    # --- VMEM budget from actual block footprint (headroom for intermediates) ---
    stacked_keys = ['ln1_g', 'ln1_b', 'w_qkv', 'b_qkv', 'w_out', 'b_out',
                    'ln2_g', 'ln2_b', 'w_fc', 'b_fc', 'w_pr', 'b_pr']
    per_layer_bytes = sum(int(prep[k].nbytes) for k in stacked_keys) // L
    const_bytes = sum(int(prep[k].nbytes) for k in
                      ['wp', 'add_embed', 'ln_pre_g', 'ln_pre_b',
                       'ln_post_g', 'ln_post_b', 'proj'])
    scratch_bytes = B * S * W * 4 + S * W * 2
    act_bytes = S * (8 * W) * 4 + H * S * S * 4
    vmem_needed = (2 * per_layer_bytes + const_bytes + 2 * S * Cpp * 2
                   + scratch_bytes + 4 * act_bytes + (4 << 20))
    # TODO(synk): on v7x (64 MiB VMEM) tile the 4W MLP weights instead of
    # raising the cap; 96 MiB headroom is fine on v5e/v6e (128 MiB physical).
    vmem_limit = min(96 << 20, max(32 << 20, int(vmem_needed)))

    per_l = lambda l, b: (l, 0, 0)        # stacked per-layer tensors (constant over batch)
    per_b = lambda l, b: (b, 0, 0)        # per-image tensors
    const2 = lambda l, b: (0, 0)          # shared 2-D tensors

    grid_spec = pltpu.PrefetchScalarGridSpec(
        num_scalar_prefetch=0,
        grid=(L, B),                      # layer OUTER (carried), batch INNER
        in_specs=[
            pl.BlockSpec((None, S, Cpp), per_b),       # patches (bf16, zero CLS row)
            pl.BlockSpec((Cpp, W), const2),            # patch-embed weight (bf16)
            pl.BlockSpec((S, W), const2),              # class + positional embedding
            pl.BlockSpec((1, W), const2),              # ln_pre gamma
            pl.BlockSpec((1, W), const2),              # ln_pre beta
            pl.BlockSpec((None, 1, W), per_l),         # ln_1 gamma
            pl.BlockSpec((None, 1, W), per_l),         # ln_1 beta
            pl.BlockSpec((None, W, 3 * W), per_l),     # in_proj weight (bf16, Q pre-scaled)
            pl.BlockSpec((None, 1, 3 * W), per_l),     # in_proj bias   (Q pre-scaled)
            pl.BlockSpec((None, W, W), per_l),         # out_proj weight (bf16)
            pl.BlockSpec((None, 1, W), per_l),         # out_proj bias
            pl.BlockSpec((None, 1, W), per_l),         # ln_2 gamma
            pl.BlockSpec((None, 1, W), per_l),         # ln_2 beta
            pl.BlockSpec((None, W, 4 * W), per_l),     # c_fc weight (bf16)
            pl.BlockSpec((None, 1, 4 * W), per_l),     # c_fc bias
            pl.BlockSpec((None, 4 * W, W), per_l),     # c_proj weight (bf16)
            pl.BlockSpec((None, 1, W), per_l),         # c_proj bias
            pl.BlockSpec((1, W), const2),              # ln_post gamma
            pl.BlockSpec((1, W), const2),              # ln_post beta
            pl.BlockSpec((W, Ep), const2),             # output projection (bf16, lane-padded)
        ],
        out_specs=pl.BlockSpec((None, 1, Ep), per_b),
        scratch_shapes=[pltpu.VMEM((B, S, W), jnp.float32),   # residual-stream carry
                        pltpu.VMEM((S, W), jnp.bfloat16)],    # per-head output staging
    )

    out = pl.pallas_call(
        functools.partial(_vit_kernel, num_heads=H),
        out_shape=jax.ShapeDtypeStruct((B, 1, Ep), jnp.float32),
        grid_spec=grid_spec,
        compiler_params=pltpu.CompilerParams(
            # TODO(synk): "parallel" on the batch axis for v7x megacore once the
            # output blocks are per-core; "arbitrary" keeps the carried residual
            # + single-core iteration order safe on all generations.
            dimension_semantics=("arbitrary", "arbitrary"),
            vmem_limit_bytes=vmem_limit),
        cost_estimate=pl.CostEstimate(
            flops=int(flops), transcendentals=int(transc),
            bytes_accessed=int(bytes_accessed)),
    )(patches,
      prep['wp'], prep['add_embed'], prep['ln_pre_g'], prep['ln_pre_b'],
      prep['ln1_g'], prep['ln1_b'], prep['w_qkv'], prep['b_qkv'],
      prep['w_out'], prep['b_out'], prep['ln2_g'], prep['ln2_b'],
      prep['w_fc'], prep['b_fc'], prep['w_pr'], prep['b_pr'],
      prep['ln_post_g'], prep['ln_post_b'], prep['proj'])

    return out[:, 0, :E]


# ------------------------- pure-JAX f32 reference -----------------------------
def reference_forward(image, params, cfg):
    B = image.shape[0]
    p = cfg['patch_size']
    W = cfg['width']
    res = image.shape[2]
    g = res // p
    N = g * g
    S = N + 1
    Cpp = 3 * p * p
    H = cfg['heads']
    Dh = W // H

    patches = image.reshape(B, 3, g, p, g, p).transpose(0, 2, 4, 1, 3, 5).reshape(B, N, Cpp)
    pe = jnp.einsum('bnc,dc->bnd', patches, params['conv_w'].reshape(W, Cpp))
    cls = jnp.broadcast_to(params['class_embedding'][None, None, :], (B, 1, W))
    tok = jnp.concatenate([cls, pe], axis=1) + params['positional_embedding'][None]
    tok = _layernorm(tok, params['ln_pre_g'], params['ln_pre_b'])
    for lp in params['layers']:
        h = _layernorm(tok, lp['ln1_g'], lp['ln1_b'])
        qkv = h @ lp['in_proj_w'].T + lp['in_proj_b']
        q, k, v = qkv[..., :W], qkv[..., W:2 * W], qkv[..., 2 * W:]
        q = q.reshape(B, S, H, Dh) * (Dh ** -0.5)
        k = k.reshape(B, S, H, Dh)
        v = v.reshape(B, S, H, Dh)
        s = jnp.einsum('bshd,bthd->bhst', q, k)
        a = jax.nn.softmax(s, axis=-1)
        o = jnp.einsum('bhst,bthd->bshd', a, v).reshape(B, S, W)
        tok = tok + (o @ lp['out_proj_w'].T + lp['out_proj_b'])
        h2 = _layernorm(tok, lp['ln2_g'], lp['ln2_b'])
        f = h2 @ lp['fc_w'].T + lp['fc_b']
        f = f * jax.nn.sigmoid(1.702 * f)
        tok = tok + (f @ lp['cproj_w'].T + lp['cproj_b'])
    cls_out = _layernorm(tok[:, 0, :], params['ln_post_g'], params['ln_post_b'])
    return cls_out @ params['proj']


# ------------------------------ param init -----------------------------------
def init_params(key, cfg):
    W = cfg['width']
    E = cfg['embed_dim']
    p = cfg['patch_size']
    res = cfg['image_resolution']
    S = (res // p) ** 2 + 1
    scale = W ** -0.5

    def nrm(k, shape, s):
        return (s * jax.random.normal(k, shape)).astype(jnp.float32)

    keys = iter(jax.random.split(key, 16 + 16 * cfg['layers']))
    params = {
        'conv_w': nrm(next(keys), (W, 3, p, p), 0.02),
        'class_embedding': nrm(next(keys), (W,), scale),
        'positional_embedding': nrm(next(keys), (S, W), scale),
        'ln_pre_g': 1.0 + nrm(next(keys), (W,), 0.02),
        'ln_pre_b': nrm(next(keys), (W,), 0.02),
        'ln_post_g': 1.0 + nrm(next(keys), (W,), 0.02),
        'ln_post_b': nrm(next(keys), (W,), 0.02),
        'proj': nrm(next(keys), (W, E), scale),
        'layers': [],
    }
    for _ in range(cfg['layers']):
        params['layers'].append({
            'ln1_g': 1.0 + nrm(next(keys), (W,), 0.02),
            'ln1_b': nrm(next(keys), (W,), 0.02),
            'in_proj_w': nrm(next(keys), (3 * W, W), 0.02),
            'in_proj_b': nrm(next(keys), (3 * W,), 0.01),
            'out_proj_w': nrm(next(keys), (W, W), 0.02),
            'out_proj_b': nrm(next(keys), (W,), 0.01),
            'ln2_g': 1.0 + nrm(next(keys), (W,), 0.02),
            'ln2_b': nrm(next(keys), (W,), 0.02),
            'fc_w': nrm(next(keys), (4 * W, W), 0.02),
            'fc_b': nrm(next(keys), (4 * W,), 0.01),
            'cproj_w': nrm(next(keys), (W, 4 * W), 0.02),
            'cproj_b': nrm(next(keys), (W,), 0.01),
        })
    return params


# --------------------------------- main ---------------------------------------
if __name__ == "__main__":
    cfg = dict(
        embed_dim=32,
        image_resolution=16,
        layers=2,
        width=128,          # vision_heads = width // 64 = 2
        patch_size=8,
    )
    cfg['heads'] = cfg['width'] // 64

    key = jax.random.PRNGKey(0)
    pkey, xkey = jax.random.split(key)
    params = init_params(pkey, cfg)
    prep = prepare_params(params, cfg)
    x = jax.random.normal(xkey, (2, 3, cfg['image_resolution'], cfg['image_resolution']),
                          dtype=jnp.float32)

    out = jax.block_until_ready(clip_vision_forward(x, prep, cfg))
    ref = jax.block_until_ready(reference_forward(x, params, cfg))

    assert out.shape == (2, cfg['embed_dim']), out.shape
    max_err = float(jnp.max(jnp.abs(out - ref)))
    # bf16 MXU inputs / bf16 QuickGELU (f32 accumulation) vs the pure-f32
    # reference -> slightly looser tolerance; real bugs produce O(1) errors.
    if not jnp.allclose(out, ref, atol=3e-2, rtol=3e-2):
        raise AssertionError(f"Pallas output mismatch vs reference, max abs err={max_err}")
    print("KERNEL_OK")
</pallas_src>

<mosaic_0001>
module attributes {stable_mosaic.version = 11 : i64} {
  func.func @_vit_kernel(%arg0: i32, %arg1: i32, %arg2: memref<1x5x192xbf16, #tpu.memory_space<vmem>>, %arg3: memref<192x128xbf16, #tpu.memory_space<vmem>>, %arg4: memref<5x128xf32, #tpu.memory_space<vmem>>, %arg5: memref<1x128xf32, #tpu.memory_space<vmem>>, %arg6: memref<1x128xf32, #tpu.memory_space<vmem>>, %arg7: memref<1x1x128xf32, #tpu.memory_space<vmem>>, %arg8: memref<1x1x128xf32, #tpu.memory_space<vmem>>, %arg9: memref<1x128x384xbf16, #tpu.memory_space<vmem>>, %arg10: memref<1x1x384xf32, #tpu.memory_space<vmem>>, %arg11: memref<1x128x128xbf16, #tpu.memory_space<vmem>>, %arg12: memref<1x1x128xf32, #tpu.memory_space<vmem>>, %arg13: memref<1x1x128xf32, #tpu.memory_space<vmem>>, %arg14: memref<1x1x128xf32, #tpu.memory_space<vmem>>, %arg15: memref<1x128x512xbf16, #tpu.memory_space<vmem>>, %arg16: memref<1x1x512xf32, #tpu.memory_space<vmem>>, %arg17: memref<1x512x128xbf16, #tpu.memory_space<vmem>>, %arg18: memref<1x1x128xf32, #tpu.memory_space<vmem>>, %arg19: memref<1x128xf32, #tpu.memory_space<vmem>>, %arg20: memref<1x128xf32, #tpu.memory_space<vmem>>, %arg21: memref<128x128xbf16, #tpu.memory_space<vmem>>, %arg22: memref<1x1x128xf32, #tpu.memory_space<vmem>>, %arg23: memref<2x5x128xf32, #tpu.memory_space<vmem>>, %arg24: memref<5x128xbf16, #tpu.memory_space<vmem>>) attributes {dimension_semantics = [#tpu.dimension_semantics<arbitrary>, #tpu.dimension_semantics<arbitrary>], iteration_bounds = array<i64: 2, 2>, scalar_prefetch = 0 : i64, scratch_operands = 2 : i64, tpu.core_type = #tpu.core_type<tc>, window_params = [{transform_indices = @transform_0, window_bounds = array<i64: 1, 5, 192>}, {pipeline_mode = #tpu.pipeline_mode<synchronous>, transform_indices = @transform_1, window_bounds = array<i64: 192, 128>}, {pipeline_mode = #tpu.pipeline_mode<synchronous>, transform_indices = @transform_2, window_bounds = array<i64: 5, 128>}, {pipeline_mode = #tpu.pipeline_mode<synchronous>, transform_indices = @transform_3, window_bounds = array<i64: 1, 128>}, {pipeline_mode = #tpu.pipeline_mode<synchronous>, transform_indices = @transform_4, window_bounds = array<i64: 1, 128>}, {transform_indices = @transform_5, window_bounds = array<i64: 1, 1, 128>}, {transform_indices = @transform_6, window_bounds = array<i64: 1, 1, 128>}, {transform_indices = @transform_7, window_bounds = array<i64: 1, 128, 384>}, {transform_indices = @transform_8, window_bounds = array<i64: 1, 1, 384>}, {transform_indices = @transform_9, window_bounds = array<i64: 1, 128, 128>}, {transform_indices = @transform_10, window_bounds = array<i64: 1, 1, 128>}, {transform_indices = @transform_11, window_bounds = array<i64: 1, 1, 128>}, {transform_indices = @transform_12, window_bounds = array<i64: 1, 1, 128>}, {transform_indices = @transform_13, window_bounds = array<i64: 1, 128, 512>}, {transform_indices = @transform_14, window_bounds = array<i64: 1, 1, 512>}, {transform_indices = @transform_15, window_bounds = array<i64: 1, 512, 128>}, {transform_indices = @transform_16, window_bounds = array<i64: 1, 1, 128>}, {pipeline_mode = #tpu.pipeline_mode<synchronous>, transform_indices = @transform_17, window_bounds = array<i64: 1, 128>}, {pipeline_mode = #tpu.pipeline_mode<synchronous>, transform_indices = @transform_18, window_bounds = array<i64: 1, 128>}, {pipeline_mode = #tpu.pipeline_mode<synchronous>, transform_indices = @transform_19, window_bounds = array<i64: 128, 128>}, {transform_indices = @transform_20, window_bounds = array<i64: 1, 1, 128>}]} {
    %c0_i32 = arith.constant 0 : i32
    %0 = arith.cmpi eq, %arg0, %c0_i32 : i32
    %1 = arith.extui %0 : i1 to i32
    %c0_i32_0 = arith.constant 0 : i32
    %2 = arith.cmpi ne, %1, %c0_i32_0 : i32
    scf.if %2 {
      %c0_69 = arith.constant 0 : index
      %c0_70 = arith.constant 0 : index
      %c0_71 = arith.constant 0 : index
      %145 = vector.load %arg2[%c0_69, %c0_70, %c0_71] : memref<1x5x192xbf16, #tpu.memory_space<vmem>>, vector<1x5x192xbf16>
      %146 = vector.shape_cast %145 : vector<1x5x192xbf16> to vector<5x192xbf16>
      %c0_72 = arith.constant 0 : index
      %c0_73 = arith.constant 0 : index
      %147 = vector.load %arg3[%c0_72, %c0_73] : memref<192x128xbf16, #tpu.memory_space<vmem>>, vector<192x128xbf16>
      %cst_74 = arith.constant dense<0.000000e+00> : vector<5x128xf32>
      %148 = tpu.matmul %146, %147, %cst_74 {dimension_numbers = #tpu.dot_dimension_numbers<[1], [0], [0], [1], [0, 0, 1, 1], [], []>} : vector<5x192xbf16>, vector<192x128xbf16>, vector<5x128xf32> -> vector<5x128xf32>
      %c0_75 = arith.constant 0 : index
      %c0_76 = arith.constant 0 : index
      %149 = vector.load %arg4[%c0_75, %c0_76] : memref<5x128xf32, #tpu.memory_space<vmem>>, vector<5x128xf32>
      %150 = arith.addf %148, %149 : vector<5x128xf32>
      %c0_77 = arith.constant 0 : index
      %c0_78 = arith.constant 0 : index
      %151 = vector.load %arg5[%c0_77, %c0_78] : memref<1x128xf32, #tpu.memory_space<vmem>>, vector<1x128xf32>
      %c0_79 = arith.constant 0 : index
      %c0_80 = arith.constant 0 : index
      %152 = vector.load %arg6[%c0_79, %c0_80] : memref<1x128xf32, #tpu.memory_space<vmem>>, vector<1x128xf32>
      %cst_81 = arith.constant dense<0.000000e+00> : vector<5xf32>
      %153 = vector.multi_reduction <add>, %150, %cst_81 [1] : vector<5x128xf32> to vector<5xf32>
      %154 = vector.shape_cast %153 : vector<5xf32> to vector<5x1xf32>
      %cst_82 = arith.constant 1.280000e+02 : f32
      %155 = vector.broadcast %cst_82 : f32 to vector<5x1xf32>
      %156 = arith.divf %154, %155 : vector<5x1xf32>
      %157 = vector.broadcast %156 : vector<5x1xf32> to vector<5x128xf32>
      %158 = arith.subf %150, %157 : vector<5x128xf32>
      %159 = arith.mulf %158, %158 : vector<5x128xf32>
      %cst_83 = arith.constant dense<0.000000e+00> : vector<5xf32>
      %160 = vector.multi_reduction <add>, %159, %cst_83 [1] : vector<5x128xf32> to vector<5xf32>
      %161 = vector.shape_cast %160 : vector<5xf32> to vector<5x1xf32>
      %cst_84 = arith.constant 1.280000e+02 : f32
      %162 = vector.broadcast %cst_84 : f32 to vector<5x1xf32>
      %163 = arith.divf %161, %162 : vector<5x1xf32>
      %cst_85 = arith.constant 9.99999974E-6 : f32
      %164 = vector.broadcast %cst_85 : f32 to vector<5x1xf32>
      %165 = arith.addf %163, %164 : vector<5x1xf32>
      %166 = math.rsqrt %165 : vector<5x1xf32>
      %167 = vector.broadcast %166 : vector<5x1xf32> to vector<5x128xf32>
      %168 = arith.mulf %158, %167 : vector<5x128xf32>
      %169 = vector.broadcast %151 : vector<1x128xf32> to vector<5x128xf32>
      %170 = arith.mulf %168, %169 : vector<5x128xf32>
      %171 = vector.broadcast %152 : vector<1x128xf32> to vector<5x128xf32>
      %172 = arith.addf %170, %171 : vector<5x128xf32>
      %173 = arith.index_cast %arg1 : i32 to index
      %c0_86 = arith.constant 0 : index
      %c0_87 = arith.constant 0 : index
      %174 = vector.load %arg23[%173, %c0_86, %c0_87] : memref<2x5x128xf32, #tpu.memory_space<vmem>>, vector<1x5x128xf32>
      %175 = vector.shape_cast %174 : vector<1x5x128xf32> to vector<5x128xf32>
      %176 = vector.shape_cast %172 : vector<5x128xf32> to vector<1x5x128xf32>
      tpu.vector_store %arg23[%173, %c0_86, %c0_87], %176 {strides = array<i32>} : memref<2x5x128xf32, #tpu.memory_space<vmem>>, vector<1x5x128xf32>,
    } else {
    }
    %3 = arith.index_cast %arg1 : i32 to index
    %c0 = arith.constant 0 : index
    %c0_1 = arith.constant 0 : index
    %4 = vector.load %arg23[%3, %c0, %c0_1] : memref<2x5x128xf32, #tpu.memory_space<vmem>>, vector<1x5x128xf32>
    %5 = vector.shape_cast %4 : vector<1x5x128xf32> to vector<5x128xf32>
    %c0_2 = arith.constant 0 : index
    %c0_3 = arith.constant 0 : index
    %c0_4 = arith.constant 0 : index
    %6 = vector.load %arg7[%c0_2, %c0_3, %c0_4] : memref<1x1x128xf32, #tpu.memory_space<vmem>>, vector<1x1x128xf32>
    %7 = vector.shape_cast %6 : vector<1x1x128xf32> to vector<1x128xf32>
    %c0_5 = arith.constant 0 : index
    %c0_6 = arith.constant 0 : index
    %c0_7 = arith.constant 0 : index
    %8 = vector.load %arg8[%c0_5, %c0_6, %c0_7] : memref<1x1x128xf32, #tpu.memory_space<vmem>>, vector<1x1x128xf32>
    %9 = vector.shape_cast %8 : vector<1x1x128xf32> to vector<1x128xf32>
    %cst = arith.constant dense<0.000000e+00> : vector<5xf32>
    %10 = vector.multi_reduction <add>, %5, %cst [1] : vector<5x128xf32> to vector<5xf32>
    %11 = vector.shape_cast %10 : vector<5xf32> to vector<5x1xf32>
    %cst_8 = arith.constant 1.280000e+02 : f32
    %12 = vector.broadcast %cst_8 : f32 to vector<5x1xf32>
    %13 = arith.divf %11, %12 : vector<5x1xf32>
    %14 = vector.broadcast %13 : vector<5x1xf32> to vector<5x128xf32>
    %15 = arith.subf %5, %14 : vector<5x128xf32>
    %16 = arith.mulf %15, %15 : vector<5x128xf32>
    %cst_9 = arith.constant dense<0.000000e+00> : vector<5xf32>
    %17 = vector.multi_reduction <add>, %16, %cst_9 [1] : vector<5x128xf32> to vector<5xf32>
    %18 = vector.shape_cast %17 : vector<5xf32> to vector<5x1xf32>
    %cst_10 = arith.constant 1.280000e+02 : f32
    %19 = vector.broadcast %cst_10 : f32 to vector<5x1xf32>
    %20 = arith.divf %18, %19 : vector<5x1xf32>
    %cst_11 = arith.constant 9.99999974E-6 : f32
    %21 = vector.broadcast %cst_11 : f32 to vector<5x1xf32>
    %22 = arith.addf %20, %21 : vector<5x1xf32>
    %23 = math.rsqrt %22 : vector<5x1xf32>
    %24 = vector.broadcast %23 : vector<5x1xf32> to vector<5x128xf32>
    %25 = arith.mulf %15, %24 : vector<5x128xf32>
    %26 = vector.broadcast %7 : vector<1x128xf32> to vector<5x128xf32>
    %27 = arith.mulf %25, %26 : vector<5x128xf32>
    %28 = vector.broadcast %9 : vector<1x128xf32> to vector<5x128xf32>
    %29 = arith.addf %27, %28 : vector<5x128xf32>
    %30 = arith.truncf %29 : vector<5x128xf32> to vector<5x128xbf16>
    %c0_12 = arith.constant 0 : index
    %c0_13 = arith.constant 0 : index
    %c0_14 = arith.constant 0 : index
    %31 = vector.load %arg9[%c0_12, %c0_13, %c0_14] : memref<1x128x384xbf16, #tpu.memory_space<vmem>>, vector<1x128x384xbf16>
    %32 = vector.shape_cast %31 : vector<1x128x384xbf16> to vector<128x384xbf16>
    %cst_15 = arith.constant dense<0.000000e+00> : vector<5x384xf32>
    %33 = tpu.matmul %30, %32, %cst_15 {dimension_numbers = #tpu.dot_dimension_numbers<[1], [0], [0], [1], [0, 0, 1, 1], [], []>} : vector<5x128xbf16>, vector<128x384xbf16>, vector<5x384xf32> -> vector<5x384xf32>
    %c0_16 = arith.constant 0 : index
    %c0_17 = arith.constant 0 : index
    %c0_18 = arith.constant 0 : index
    %34 = vector.load %arg10[%c0_16, %c0_17, %c0_18] : memref<1x1x384xf32, #tpu.memory_space<vmem>>, vector<1x1x384xf32>
    %35 = vector.shape_cast %34 : vector<1x1x384xf32> to vector<1x384xf32>
    %36 = vector.broadcast %35 : vector<1x384xf32> to vector<5x384xf32>
    %37 = arith.addf %33, %36 : vector<5x384xf32>
    %38 = vector.extract_strided_slice %37 {offsets = [0, 0], sizes = [5, 128], strides = [1, 1]} : vector<5x384xf32> to vector<5x128xf32>
    %39 = arith.truncf %38 : vector<5x128xf32> to vector<5x128xbf16>
    %40 = vector.extract_strided_slice %37 {offsets = [0, 128], sizes = [5, 128], strides = [1, 1]} : vector<5x384xf32> to vector<5x128xf32>
    %41 = arith.truncf %40 : vector<5x128xf32> to vector<5x128xbf16>
    %42 = vector.extract_strided_slice %37 {offsets = [0, 256], sizes = [5, 128], strides = [1, 1]} : vector<5x384xf32> to vector<5x128xf32>
    %43 = arith.truncf %42 : vector<5x128xf32> to vector<5x128xbf16>
    %44 = vector.extract_strided_slice %39 {offsets = [0, 0], sizes = [5, 64], strides = [1, 1]} : vector<5x128xbf16> to vector<5x64xbf16>
    %45 = vector.extract_strided_slice %41 {offsets = [0, 0], sizes = [5, 64], strides = [1, 1]} : vector<5x128xbf16> to vector<5x64xbf16>
    "tpu.trace_start"() <{level = 10 : i32, message = "sd,td->st"}> : () -> ()
    %cst_19 = arith.constant dense<0.000000e+00> : vector<5x5xf32>
    %46 = tpu.matmul %44, %45, %cst_19 {dimension_numbers = #tpu.dot_dimension_numbers<[1], [1], [0], [0], [0, 0, 1, 0], [], []>} : vector<5x64xbf16>, vector<5x64xbf16>, vector<5x5xf32> -> vector<5x5xf32>
    "tpu.trace_stop"() : () -> ()
    %cst_20 = arith.constant dense<0xFF800000> : vector<5xf32>
    %47 = vector.multi_reduction <maximumf>, %46, %cst_20 [1] : vector<5x5xf32> to vector<5xf32>
    %48 = vector.shape_cast %47 : vector<5xf32> to vector<5x1xf32>
    %49 = vector.broadcast %48 : vector<5x1xf32> to vector<5x5xf32>
    %50 = arith.subf %46, %49 : vector<5x5xf32>
    %51 = math.exp %50 : vector<5x5xf32>
    %cst_21 = arith.constant dense<0.000000e+00> : vector<5xf32>
    %52 = vector.multi_reduction <add>, %51, %cst_21 [1] : vector<5x5xf32> to vector<5xf32>
    %53 = vector.shape_cast %52 : vector<5xf32> to vector<5x1xf32>
    %54 = tpu.reciprocal %53 {approx = true} : vector<5x1xf32> -> vector<5x1xf32>
    %55 = vector.broadcast %54 : vector<5x1xf32> to vector<5x5xf32>
    %56 = arith.mulf %51, %55 : vector<5x5xf32>
    %57 = arith.truncf %56 : vector<5x5xf32> to vector<5x5xbf16>
    %58 = vector.extract_strided_slice %43 {offsets = [0, 0], sizes = [5, 64], strides = [1, 1]} : vector<5x128xbf16> to vector<5x64xbf16>
    %cst_22 = arith.constant dense<0.000000e+00> : vector<5x64xf32>
    %59 = tpu.matmul %57, %58, %cst_22 {dimension_numbers = #tpu.dot_dimension_numbers<[1], [0], [0], [1], [0, 0, 1, 1], [], []>} : vector<5x5xbf16>, vector<5x64xbf16>, vector<5x64xf32> -> vector<5x64xf32>
    %60 = arith.truncf %59 : vector<5x64xf32> to vector<5x64xbf16>
    %c0_23 = arith.constant 0 : index
    %c0_24 = arith.constant 0 : index
    %61 = vector.load %arg24[%c0_23, %c0_24] : memref<5x128xbf16, #tpu.memory_space<vmem>>, vector<5x64xbf16>
    tpu.vector_store %arg24[%c0_23, %c0_24], %60 {strides = array<i32>} : memref<5x128xbf16, #tpu.memory_space<vmem>>, vector<5x64xbf16>,
    %62 = vector.extract_strided_slice %39 {offsets = [0, 64], sizes = [5, 64], strides = [1, 1]} : vector<5x128xbf16> to vector<5x64xbf16>
    %63 = vector.extract_strided_slice %41 {offsets = [0, 64], sizes = [5, 64], strides = [1, 1]} : vector<5x128xbf16> to vector<5x64xbf16>
    "tpu.trace_start"() <{level = 10 : i32, message = "sd,td->st"}> : () -> ()
    %cst_25 = arith.constant dense<0.000000e+00> : vector<5x5xf32>
    %64 = tpu.matmul %62, %63, %cst_25 {dimension_numbers = #tpu.dot_dimension_numbers<[1], [1], [0], [0], [0, 0, 1, 0], [], []>} : vector<5x64xbf16>, vector<5x64xbf16>, vector<5x5xf32> -> vector<5x5xf32>
    "tpu.trace_stop"() : () -> ()
    %cst_26 = arith.constant dense<0xFF800000> : vector<5xf32>
    %65 = vector.multi_reduction <maximumf>, %64, %cst_26 [1] : vector<5x5xf32> to vector<5xf32>
    %66 = vector.shape_cast %65 : vector<5xf32> to vector<5x1xf32>
    %67 = vector.broadcast %66 : vector<5x1xf32> to vector<5x5xf32>
    %68 = arith.subf %64, %67 : vector<5x5xf32>
    %69 = math.exp %68 : vector<5x5xf32>
    %cst_27 = arith.constant dense<0.000000e+00> : vector<5xf32>
    %70 = vector.multi_reduction <add>, %69, %cst_27 [1] : vector<5x5xf32> to vector<5xf32>
    %71 = vector.shape_cast %70 : vector<5xf32> to vector<5x1xf32>
    %72 = tpu.reciprocal %71 {approx = true} : vector<5x1xf32> -> vector<5x1xf32>
    %73 = vector.broadcast %72 : vector<5x1xf32> to vector<5x5xf32>
    %74 = arith.mulf %69, %73 : vector<5x5xf32>
    %75 = arith.truncf %74 : vector<5x5xf32> to vector<5x5xbf16>
    %76 = vector.extract_strided_slice %43 {offsets = [0, 64], sizes = [5, 64], strides = [1, 1]} : vector<5x128xbf16> to vector<5x64xbf16>
    %cst_28 = arith.constant dense<0.000000e+00> : vector<5x64xf32>
    %77 = tpu.matmul %75, %76, %cst_28 {dimension_numbers = #tpu.dot_dimension_numbers<[1], [0], [0], [1], [0, 0, 1, 1], [], []>} : vector<5x5xbf16>, vector<5x64xbf16>, vector<5x64xf32> -> vector<5x64xf32>
    %78 = arith.truncf %77 : vector<5x64xf32> to vector<5x64xbf16>
    %c0_29 = arith.constant 0 : index
    %c64 = arith.constant 64 : index
    %79 = vector.load %arg24[%c0_29, %c64] : memref<5x128xbf16, #tpu.memory_space<vmem>>, vector<5x64xbf16>
    tpu.vector_store %arg24[%c0_29, %c64], %78 {strides = array<i32>} : memref<5x128xbf16, #tpu.memory_space<vmem>>, vector<5x64xbf16>,
    %c0_30 = arith.constant 0 : index
    %c0_31 = arith.constant 0 : index
    %80 = vector.load %arg24[%c0_30, %c0_31] : memref<5x128xbf16, #tpu.memory_space<vmem>>, vector<5x128xbf16>
    %c0_32 = arith.constant 0 : index
    %c0_33 = arith.constant 0 : index
    %c0_34 = arith.constant 0 : index
    %81 = vector.load %arg11[%c0_32, %c0_33, %c0_34] : memref<1x128x128xbf16, #tpu.memory_space<vmem>>, vector<1x128x128xbf16>
    %82 = vector.shape_cast %81 : vector<1x128x128xbf16> to vector<128x128xbf16>
    %cst_35 = arith.constant dense<0.000000e+00> : vector<5x128xf32>
    %83 = tpu.matmul %80, %82, %cst_35 {dimension_numbers = #tpu.dot_dimension_numbers<[1], [0], [0], [1], [0, 0, 1, 1], [], []>} : vector<5x128xbf16>, vector<128x128xbf16>, vector<5x128xf32> -> vector<5x128xf32>
    %c0_36 = arith.constant 0 : index
    %c0_37 = arith.constant 0 : index
    %c0_38 = arith.constant 0 : index
    %84 = vector.load %arg12[%c0_36, %c0_37, %c0_38] : memref<1x1x128xf32, #tpu.memory_space<vmem>>, vector<1x1x128xf32>
    %85 = vector.shape_cast %84 : vector<1x1x128xf32> to vector<1x128xf32>
    %86 = vector.broadcast %85 : vector<1x128xf32> to vector<5x128xf32>
    %87 = arith.addf %83, %86 : vector<5x128xf32>
    %88 = arith.addf %5, %87 : vector<5x128xf32>
    %c0_39 = arith.constant 0 : index
    %c0_40 = arith.constant 0 : index
    %c0_41 = arith.constant 0 : index
    %89 = vector.load %arg13[%c0_39, %c0_40, %c0_41] : memref<1x1x128xf32, #tpu.memory_space<vmem>>, vector<1x1x128xf32>
    %90 = vector.shape_cast %89 : vector<1x1x128xf32> to vector<1x128xf32>
    %c0_42 = arith.constant 0 : index
    %c0_43 = arith.constant 0 : index
    %c0_44 = arith.constant 0 : index
    %91 = vector.load %arg14[%c0_42, %c0_43, %c0_44] : memref<1x1x128xf32, #tpu.memory_space<vmem>>, vector<1x1x128xf32>
    %92 = vector.shape_cast %91 : vector<1x1x128xf32> to vector<1x128xf32>
    %cst_45 = arith.constant dense<0.000000e+00> : vector<5xf32>
    %93 = vector.multi_reduction <add>, %88, %cst_45 [1] : vector<5x128xf32> to vector<5xf32>
    %94 = vector.shape_cast %93 : vector<5xf32> to vector<5x1xf32>
    %cst_46 = arith.constant 1.280000e+02 : f32
    %95 = vector.broadcast %cst_46 : f32 to vector<5x1xf32>
    %96 = arith.divf %94, %95 : vector<5x1xf32>
    %97 = vector.broadcast %96 : vector<5x1xf32> to vector<5x128xf32>
    %98 = arith.subf %88, %97 : vector<5x128xf32>
    %99 = arith.mulf %98, %98 : vector<5x128xf32>
    %cst_47 = arith.constant dense<0.000000e+00> : vector<5xf32>
    %100 = vector.multi_reduction <add>, %99, %cst_47 [1] : vector<5x128xf32> to vector<5xf32>
    %101 = vector.shape_cast %100 : vector<5xf32> to vector<5x1xf32>
    %cst_48 = arith.constant 1.280000e+02 : f32
    %102 = vector.broadcast %cst_48 : f32 to vector<5x1xf32>
    %103 = arith.divf %101, %102 : vector<5x1xf32>
    %cst_49 = arith.constant 9.99999974E-6 : f32
    %104 = vector.broadcast %cst_49 : f32 to vector<5x1xf32>
    %105 = arith.addf %103, %104 : vector<5x1xf32>
    %106 = math.rsqrt %105 : vector<5x1xf32>
    %107 = vector.broadcast %106 : vector<5x1xf32> to vector<5x128xf32>
    %108 = arith.mulf %98, %107 : vector<5x128xf32>
    %109 = vector.broadcast %90 : vector<1x128xf32> to vector<5x128xf32>
    %110 = arith.mulf %108, %109 : vector<5x128xf32>
    %111 = vector.broadcast %92 : vector<1x128xf32> to vector<5x128xf32>
    %112 = arith.addf %110, %111 : vector<5x128xf32>
    %113 = arith.truncf %112 : vector<5x128xf32> to vector<5x128xbf16>
    %c0_50 = arith.constant 0 : index
    %c0_51 = arith.constant 0 : index
    %c0_52 = arith.constant 0 : index
    %114 = vector.load %arg15[%c0_50, %c0_51, %c0_52] : memref<1x128x512xbf16, #tpu.memory_space<vmem>>, vector<1x128x512xbf16>
    %115 = vector.shape_cast %114 : vector<1x128x512xbf16> to vector<128x512xbf16>
    %cst_53 = arith.constant dense<0.000000e+00> : vector<5x512xf32>
    %116 = tpu.matmul %113, %115, %cst_53 {dimension_numbers = #tpu.dot_dimension_numbers<[1], [0], [0], [1], [0, 0, 1, 1], [], []>} : vector<5x128xbf16>, vector<128x512xbf16>, vector<5x512xf32> -> vector<5x512xf32>
    %c0_54 = arith.constant 0 : index
    %c0_55 = arith.constant 0 : index
    %c0_56 = arith.constant 0 : index
    %117 = vector.load %arg16[%c0_54, %c0_55, %c0_56] : memref<1x1x512xf32, #tpu.memory_space<vmem>>, vector<1x1x512xf32>
    %118 = vector.shape_cast %117 : vector<1x1x512xf32> to vector<1x512xf32>
    %119 = vector.broadcast %118 : vector<1x512xf32> to vector<5x512xf32>
    %120 = arith.addf %116, %119 : vector<5x512xf32>
    %121 = arith.truncf %120 : vector<5x512xf32> to vector<5x512xbf16>
    %cst_57 = arith.constant 1.703130e+00 : bf16
    %122 = vector.broadcast %cst_57 : bf16 to vector<5x512xbf16>
    %123 = arith.mulf %122, %121 : vector<5x512xbf16>
    %124 = arith.negf %123 : vector<5x512xbf16>
    %125 = math.exp %124 : vector<5x512xbf16>
    %cst_58 = arith.constant 1.000000e+00 : bf16
    %126 = vector.broadcast %cst_58 : bf16 to vector<5x512xbf16>
    %127 = arith.addf %126, %125 : vector<5x512xbf16>
    %128 = arith.divf %126, %127 : vector<5x512xbf16>
    %129 = arith.mulf %121, %128 : vector<5x512xbf16>
    %c0_59 = arith.constant 0 : index
    %c0_60 = arith.constant 0 : index
    %c0_61 = arith.constant 0 : index
    %130 = vector.load %arg17[%c0_59, %c0_60, %c0_61] : memref<1x512x128xbf16, #tpu.memory_space<vmem>>, vector<1x512x128xbf16>
    %131 = vector.shape_cast %130 : vector<1x512x128xbf16> to vector<512x128xbf16>
    %cst_62 = arith.constant dense<0.000000e+00> : vector<5x128xf32>
    %132 = tpu.matmul %129, %131, %cst_62 {dimension_numbers = #tpu.dot_dimension_numbers<[1], [0], [0], [1], [0, 0, 1, 1], [], []>} : vector<5x512xbf16>, vector<512x128xbf16>, vector<5x128xf32> -> vector<5x128xf32>
    %c0_63 = arith.constant 0 : index
    %c0_64 = arith.constant 0 : index
    %c0_65 = arith.constant 0 : index
    %133 = vector.load %arg18[%c0_63, %c0_64, %c0_65] : memref<1x1x128xf32, #tpu.memory_space<vmem>>, vector<1x1x128xf32>
    %134 = vector.shape_cast %133 : vector<1x1x128xf32> to vector<1x128xf32>
    %135 = vector.broadcast %134 : vector<1x128xf32> to vector<5x128xf32>
    %136 = arith.addf %132, %135 : vector<5x128xf32>
    %137 = arith.addf %88, %136 : vector<5x128xf32>
    %138 = arith.index_cast %arg1 : i32 to index
    %c0_66 = arith.constant 0 : index
    %c0_67 = arith.constant 0 : index
    %139 = vector.load %arg23[%138, %c0_66, %c0_67] : memref<2x5x128xf32, #tpu.memory_space<vmem>>, vector<1x5x128xf32>
    %140 = vector.shape_cast %139 : vector<1x5x128xf32> to vector<5x128xf32>
    %141 = vector.shape_cast %137 : vector<5x128xf32> to vector<1x5x128xf32>
    tpu.vector_store %arg23[%138, %c0_66, %c0_67], %141 {strides = array<i32>} : memref<2x5x128xf32, #tpu.memory_space<vmem>>, vector<1x5x128xf32>,
    %c1_i32 = arith.constant 1 : i32
    %142 = arith.cmpi eq, %arg0, %c1_i32 : i32
    %143 = arith.extui %142 : i1 to i32
    %c0_i32_68 = arith.constant 0 : i32
    %144 = arith.cmpi ne, %143, %c0_i32_68 : i32
    scf.if %144 {
      %145 = vector.extract_strided_slice %137 {offsets = [0, 0], sizes = [1, 128], strides = [1, 1]} : vector<5x128xf32> to vector<1x128xf32>
      %c0_69 = arith.constant 0 : index
      %c0_70 = arith.constant 0 : index
      %146 = vector.load %arg19[%c0_69, %c0_70] : memref<1x128xf32, #tpu.memory_space<vmem>>, vector<1x128xf32>
      %c0_71 = arith.constant 0 : index
      %c0_72 = arith.constant 0 : index
      %147 = vector.load %arg20[%c0_71, %c0_72] : memref<1x128xf32, #tpu.memory_space<vmem>>, vector<1x128xf32>
      %cst_73 = arith.constant dense<0.000000e+00> : vector<1xf32>
      %148 = vector.multi_reduction <add>, %145, %cst_73 [1] : vector<1x128xf32> to vector<1xf32>
      %149 = vector.shape_cast %148 : vector<1xf32> to vector<1x1xf32>
      %cst_74 = arith.constant 1.280000e+02 : f32
      %150 = vector.broadcast %cst_74 : f32 to vector<1x1xf32>
      %151 = arith.divf %149, %150 : vector<1x1xf32>
      %152 = vector.broadcast %151 : vector<1x1xf32> to vector<1x128xf32>
      %153 = arith.subf %145, %152 : vector<1x128xf32>
      %154 = arith.mulf %153, %153 : vector<1x128xf32>
      %cst_75 = arith.constant dense<0.000000e+00> : vector<1xf32>
      %155 = vector.multi_reduction <add>, %154, %cst_75 [1] : vector<1x128xf32> to vector<1xf32>
      %156 = vector.shape_cast %155 : vector<1xf32> to vector<1x1xf32>
      %cst_76 = arith.constant 1.280000e+02 : f32
      %157 = vector.broadcast %cst_76 : f32 to vector<1x1xf32>
      %158 = arith.divf %156, %157 : vector<1x1xf32>
      %cst_77 = arith.constant 9.99999974E-6 : f32
      %159 = vector.broadcast %cst_77 : f32 to vector<1x1xf32>
      %160 = arith.addf %158, %159 : vector<1x1xf32>
      %161 = math.rsqrt %160 : vector<1x1xf32>
      %162 = vector.broadcast %161 : vector<1x1xf32> to vector<1x128xf32>
      %163 = arith.mulf %153, %162 : vector<1x128xf32>
      %164 = arith.mulf %163, %146 : vector<1x128xf32>
      %165 = arith.addf %164, %147 : vector<1x128xf32>
      %166 = arith.truncf %165 : vector<1x128xf32> to vector<1x128xbf16>
      %c0_78 = arith.constant 0 : index
      %c0_79 = arith.constant 0 : index
      %167 = vector.load %arg21[%c0_78, %c0_79] : memref<128x128xbf16, #tpu.memory_space<vmem>>, vector<128x128xbf16>
      %cst_80 = arith.constant dense<0.000000e+00> : vector<1x128xf32>
      %168 = tpu.matmul %166, %167, %cst_80 {dimension_numbers = #tpu.dot_dimension_numbers<[1], [0], [0], [1], [0, 0, 1, 1], [], []>} : vector<1x128xbf16>, vector<128x128xbf16>, vector<1x128xf32> -> vector<1x128xf32>
      %c0_81 = arith.constant 0 : index
      %c0_82 = arith.constant 0 : index
      %c0_83 = arith.constant 0 : index
      %169 = vector.load %arg22[%c0_81, %c0_82, %c0_83] : memref<1x1x128xf32, #tpu.memory_space<vmem>>, vector<1x1x128xf32>
      %170 = vector.shape_cast %169 : vector<1x1x128xf32> to vector<1x128xf32>
      %171 = vector.shape_cast %168 : vector<1x128xf32> to vector<1x1x128xf32>
      tpu.vector_store %arg22[%c0_81, %c0_82, %c0_83], %171 {strides = array<i32>} : memref<1x1x128xf32, #tpu.memory_space<vmem>>, vector<1x1x128xf32>,
    } else {
    }
    return
  }
  func.func @transform_0(%arg0: i32, %arg1: i32) -> (i32, i32, i32) {
    %c0_i32 = arith.constant 0 : i32
    %c0_i32_0 = arith.constant 0 : i32
    %c0_i32_1 = arith.constant 0 : i32
    return %arg1, %c0_i32, %c0_i32_0 : i32, i32, i32
  }
  func.func @transform_1(%arg0: i32, %arg1: i32) -> (i32, i32) {
    %c0_i32 = arith.constant 0 : i32
    %c0_i32_0 = arith.constant 0 : i32
    %c0_i32_1 = arith.constant 0 : i32
    return %c0_i32, %c0_i32_0 : i32, i32
  }
  func.func @transform_2(%arg0: i32, %arg1: i32) -> (i32, i32) {
    %c0_i32 = arith.constant 0 : i32
    %c0_i32_0 = arith.constant 0 : i32
    %c0_i32_1 = arith.constant 0 : i32
    return %c0_i32, %c0_i32_0 : i32, i32
  }
  func.func @transform_3(%arg0: i32, %arg1: i32) -> (i32, i32) {
    %c0_i32 = arith.constant 0 : i32
    %c0_i32_0 = arith.constant 0 : i32
    %c0_i32_1 = arith.constant 0 : i32
    return %c0_i32, %c0_i32_0 : i32, i32
  }
  func.func @transform_4(%arg0: i32, %arg1: i32) -> (i32, i32) {
    %c0_i32 = arith.constant 0 : i32
    %c0_i32_0 = arith.constant 0 : i32
    %c0_i32_1 = arith.constant 0 : i32
    return %c0_i32, %c0_i32_0 : i32, i32
  }
  func.func @transform_5(%arg0: i32, %arg1: i32) -> (i32, i32, i32) {
    %c0_i32 = arith.constant 0 : i32
    %c0_i32_0 = arith.constant 0 : i32
    %c0_i32_1 = arith.constant 0 : i32
    return %arg0, %c0_i32, %c0_i32_0 : i32, i32, i32
  }
  func.func @transform_6(%arg0: i32, %arg1: i32) -> (i32, i32, i32) {
    %c0_i32 = arith.constant 0 : i32
    %c0_i32_0 = arith.constant 0 : i32
    %c0_i32_1 = arith.constant 0 : i32
    return %arg0, %c0_i32, %c0_i32_0 : i32, i32, i32
  }
  func.func @transform_7(%arg0: i32, %arg1: i32) -> (i32, i32, i32) {
    %c0_i32 = arith.constant 0 : i32
    %c0_i32_0 = arith.constant 0 : i32
    %c0_i32_1 = arith.constant 0 : i32
    return %arg0, %c0_i32, %c0_i32_0 : i32, i32, i32
  }
  func.func @transform_8(%arg0: i32, %arg1: i32) -> (i32, i32, i32) {
    %c0_i32 = arith.constant 0 : i32
    %c0_i32_0 = arith.constant 0 : i32
    %c0_i32_1 = arith.constant 0 : i32
    return %arg0, %c0_i32, %c0_i32_0 : i32, i32, i32
  }
  func.func @transform_9(%arg0: i32, %arg1: i32) -> (i32, i32, i32) {
    %c0_i32 = arith.constant 0 : i32
    %c0_i32_0 = arith.constant 0 : i32
    %c0_i32_1 = arith.constant 0 : i32
    return %arg0, %c0_i32, %c0_i32_0 : i32, i32, i32
  }
  func.func @transform_10(%arg0: i32, %arg1: i32) -> (i32, i32, i32) {
    %c0_i32 = arith.constant 0 : i32
    %c0_i32_0 = arith.constant 0 : i32
    %c0_i32_1 = arith.constant 0 : i32
    return %arg0, %c0_i32, %c0_i32_0 : i32, i32, i32
  }
  func.func @transform_11(%arg0: i32, %arg1: i32) -> (i32, i32, i32) {
    %c0_i32 = arith.constant 0 : i32
    %c0_i32_0 = arith.constant 0 : i32
    %c0_i32_1 = arith.constant 0 : i32
    return %arg0, %c0_i32, %c0_i32_0 : i32, i32, i32
  }
  func.func @transform_12(%arg0: i32, %arg1: i32) -> (i32, i32, i32) {
    %c0_i32 = arith.constant 0 : i32
    %c0_i32_0 = arith.constant 0 : i32
    %c0_i32_1 = arith.constant 0 : i32
    return %arg0, %c0_i32, %c0_i32_0 : i32, i32, i32
  }
  func.func @transform_13(%arg0: i32, %arg1: i32) -> (i32, i32, i32) {
    %c0_i32 = arith.constant 0 : i32
    %c0_i32_0 = arith.constant 0 : i32
    %c0_i32_1 = arith.constant 0 : i32
    return %arg0, %c0_i32, %c0_i32_0 : i32, i32, i32
  }
  func.func @transform_14(%arg0: i32, %arg1: i32) -> (i32, i32, i32) {
    %c0_i32 = arith.constant 0 : i32
    %c0_i32_0 = arith.constant 0 : i32
    %c0_i32_1 = arith.constant 0 : i32
    return %arg0, %c0_i32, %c0_i32_0 : i32, i32, i32
  }
  func.func @transform_15(%arg0: i32, %arg1: i32) -> (i32, i32, i32) {
    %c0_i32 = arith.constant 0 : i32
    %c0_i32_0 = arith.constant 0 : i32
    %c0_i32_1 = arith.constant 0 : i32
    return %arg0, %c0_i32, %c0_i32_0 : i32, i32, i32
  }
  func.func @transform_16(%arg0: i32, %arg1: i32) -> (i32, i32, i32) {
    %c0_i32 = arith.constant 0 : i32
    %c0_i32_0 = arith.constant 0 : i32
    %c0_i32_1 = arith.constant 0 : i32
    return %arg0, %c0_i32, %c0_i32_0 : i32, i32, i32
  }
  func.func @transform_17(%arg0: i32, %arg1: i32) -> (i32, i32) {
    %c0_i32 = arith.constant 0 : i32
    %c0_i32_0 = arith.constant 0 : i32
    %c0_i32_1 = arith.constant 0 : i32
    return %c0_i32, %c0_i32_0 : i32, i32
  }
  func.func @transform_18(%arg0: i32, %arg1: i32) -> (i32, i32) {
    %c0_i32 = arith.constant 0 : i32
    %c0_i32_0 = arith.constant 0 : i32
    %c0_i32_1 = arith.constant 0 : i32
    return %c0_i32, %c0_i32_0 : i32, i32
  }
  func.func @transform_19(%arg0: i32, %arg1: i32) -> (i32, i32) {
    %c0_i32 = arith.constant 0 : i32
    %c0_i32_0 = arith.constant 0 : i32
    %c0_i32_1 = arith.constant 0 : i32
    return %c0_i32, %c0_i32_0 : i32, i32
  }
  func.func @transform_20(%arg0: i32, %arg1: i32) -> (i32, i32, i32) {
    %c0_i32 = arith.constant 0 : i32
    %c0_i32_0 = arith.constant 0 : i32
    %c0_i32_1 = arith.constant 0 : i32
    return %arg1, %c0_i32, %c0_i32_0 : i32, i32, i32
  }
}

</mosaic_0001>

<llo_original>
// kernel: tpu_custom_call.1
$region0: #{tpu_custom_call.1}
  #allocation0 [shape = 'u32[]', space=smem, size = 0x4, offset = 0x4, fixed_abs, tag = 'smem constant byte address 0x4 - core index']
  #allocation1 [shape = 'u32[144,128]{1,0:T(1,128)}', space=vmem, size = 0x12000, scoped, tag = 'internal scratch']
  #allocation2 [shape = 'f32[2,5,128]{2,1,0:T(8,128)}', space=vmem, size = 0x2000, scoped, tag = 'scratch operand']
  #allocation3 [shape = 'bf16[5,128]{1,0:T(8,128)(2,1)}', space=vmem, size = 0x800, scoped, tag = 'scratch operand']
  %s0 = inlined_call_operand.vmem [shape: bf16[2,5,192], index: 0, kind: input, shape index: {}]
  %s1 = inlined_call_operand.hbm [shape: bf16[192,128], index: 1, kind: input, shape index: {}]
  %s2 = inlined_call_operand.vmem [shape: f32[5,128], index: 2, kind: input, shape index: {}]
  %s3 = inlined_call_operand.vmem [shape: f32[1,128], index: 3, kind: input, shape index: {}]
  %s4 = inlined_call_operand.hbm [shape: f32[1,128], index: 4, kind: input, shape index: {}]
  %s5 = inlined_call_operand.vmem [shape: f32[2,1,128], index: 5, kind: input, shape index: {}]
  %s6 = inlined_call_operand.vmem [shape: f32[2,1,128], index: 6, kind: input, shape index: {}]
  %s7 = inlined_call_operand.hbm [shape: bf16[2,128,384], index: 7, kind: input, shape index: {}]
  %s8 = inlined_call_operand.vmem [shape: f32[2,1,384], index: 8, kind: input, shape index: {}]
  %s9 = inlined_call_operand.hbm [shape: bf16[2,128,128], index: 9, kind: input, shape index: {}]
  %s10 = inlined_call_operand.vmem [shape: f32[2,1,128], index: 10, kind: input, shape index: {}]
  %s11 = inlined_call_operand.vmem [shape: f32[2,1,128], index: 11, kind: input, shape index: {}]
  %s12 = inlined_call_operand.vmem [shape: f32[2,1,128], index: 12, kind: input, shape index: {}]
  %s13 = inlined_call_operand.hbm [shape: bf16[2,128,512], index: 13, kind: input, shape index: {}]
  %s14 = inlined_call_operand.vmem [shape: f32[2,1,512], index: 14, kind: input, shape index: {}]
  %s15 = inlined_call_operand.hbm [shape: bf16[2,512,128], index: 15, kind: input, shape index: {}]
  %s16 = inlined_call_operand.vmem [shape: f32[2,1,128], index: 16, kind: input, shape index: {}]
  %s17 = inlined_call_operand.vmem [shape: f32[1,128], index: 17, kind: input, shape index: {}]
  %s18 = inlined_call_operand.vmem [shape: f32[1,128], index: 18, kind: input, shape index: {}]
  %s19 = inlined_call_operand.hbm [shape: bf16[128,128], index: 19, kind: input, shape index: {}]
  %s20 = inlined_call_operand.hbm [shape: f32[2,1,128], index: 20, kind: output, shape index: {}]
  %s21 = sld [smem:[#allocation0]]
  $region149: #{tpu_custom_call.1} parent=0
    _
  %s23 = ssub.s32 1, %s21
  %s24 = scalar_select 0, %s23, %s21
  $region1: #{tpu_custom_call.1} parent=0
    #allocation4 [shape = 'u8[49152]{0}', space=vmem, size = 0xc000, scoped, tag = 'input window, operand 1, single buffered']
    #allocation5 [shape = 's32[2]{0}', space=sflag, size = 0x8, scoped, tag = 'scoped memory for tpu_custom_call.1']
    #allocation6 [shape = 's32[2]{0}', space=sflag, size = 0x8, scoped, tag = 'scoped memory for tpu_custom_call.1']
    #allocation7 [shape = 'u8[512]{0}', space=vmem, size = 0x400, scoped, tag = 'input window, operand 4, single buffered']
    #allocation8 [shape = 's32[1]{0}', space=sflag, size = 0x4, scoped, tag = 'scoped memory for tpu_custom_call.1']
    #allocation9 [shape = 'u8[196608]{0}', space=vmem, size = 0x30000, scoped, tag = 'input window, operand 7']
    #allocation10 [shape = 'u8[65536]{0}', space=vmem, size = 0x10000, scoped, tag = 'input window, operand 9']
    #allocation11 [shape = 'u8[262144]{0}', space=vmem, size = 0x40000, scoped, tag = 'input window, operand 13']
    #allocation12 [shape = 'u8[262144]{0}', space=vmem, size = 0x40000, scoped, tag = 'input window, operand 15']
    #allocation13 [shape = 'u8[32768]{0}', space=vmem, size = 0x8000, scoped, tag = 'input window, operand 19, single buffered']
    #allocation14 [shape = 'u8[1024]{0}', space=vmem, size = 0x400, scoped, tag = 'output window, operand 0']
    %25 = vsyncpa [#allocation5], 0
    %26 = vsyncpa [#allocation8], 0
    %27 = vsyncpa [#allocation6], 0
    %s28 = scalar_lea.sflag [#allocation6], 1
    %29 = vsyncpa %s28, 0
    loop: start=0, step=1, limit=6
    $region2: #{tpu_custom_call.1} parent=1 // loop_pre_header
      _
    $region3: #{tpu_custom_call.1} parent=1 // loop_header
      %s31 = sphi 0, %s35
      %p32 = scmp.ge.s32.totalorder %s31, 6
      %s38 = sphi 0, %s50
      %s39 = sphi 0, %s46
      %s40 = sphi 0, %s38
      %s41 = sphi 0, %s39
      %s42 = sphi 0, %s40
      %s43 = sphi 0, %s41
      %s53 = sphi 0, %s55
      %s56 = sphi 0, %s53
      %s57 = sphi 0, %s56
      %s73 = sphi 0, %s57
      %s77 = sphi 0, %s77
      %s79 = sphi 0, %s77
      %s80 = sphi 0, %s79
      %s94 = sphi 0, %s80
      %s98 = sphi 0, %s98
      %s100 = sphi 0, %s98
      %s101 = sphi 0, %s100
      %s115 = sphi 0, %s101
      %s119 = sphi 0, %s119
      %s121 = sphi 0, %s119
      %s122 = sphi 0, %s121
      %s136 = sphi 0, %s122
      %s140 = sphi 0, %s140
      %s142 = sphi 0, %s140
      %s143 = sphi 0, %s142
      %s157 = sphi 0, %s143
      %s163 = sphi 0, %s165
      %s166 = sphi 0, %s163
      %s167 = sphi 0, %s166
      %s183 = sphi 0, %s167
      %s189 = sphi 0, %s191
      %s192 = sphi 0, %s189
      %s193 = sphi 0, %s192
      %s209 = sphi 0, %s193
      %s215 = sphi 0, %s217
      %s218 = sphi 0, %s215
      %s219 = sphi 0, %s218
      %s235 = sphi 0, %s219
      %s241 = sphi 0, %s243
      %s244 = sphi 0, %s241
      %s245 = sphi 0, %s244
      %s261 = sphi 0, %s245
      %s267 = sphi 0, %s269
      %s270 = sphi 0, %s267
      %s271 = sphi 0, %s270
      %s287 = sphi 0, %s271
      %s293 = sphi 0, %s295
      %s296 = sphi 0, %s293
      %s297 = sphi 0, %s296
      %s313 = sphi 0, %s297
      %s319 = sphi 0, %s321
      %s322 = sphi 0, %s319
      %s323 = sphi 0, %s322
      %s339 = sphi 0, %s323
      %s345 = sphi 0, %s347
      %s348 = sphi 0, %s345
      %s349 = sphi 0, %s348
      %s365 = sphi 0, %s349
      %s371 = sphi 0, %s373
      %s374 = sphi 0, %s371
      %s375 = sphi 0, %s374
      %s391 = sphi 0, %s375
      %s397 = sphi 0, %s399
      %s400 = sphi 0, %s397
      %s401 = sphi 0, %s400
      %s417 = sphi 0, %s401
      %s423 = sphi 0, %s425
      %s426 = sphi 0, %s423
      %s427 = sphi 0, %s426
      %s443 = sphi 0, %s427
      %s449 = sphi 0, %s451
      %s452 = sphi 0, %s449
      %s453 = sphi 0, %s452
      %s469 = sphi 0, %s453
      %s473 = sphi 0, %s473
      %s475 = sphi 0, %s473
      %s476 = sphi 0, %s475
      %s490 = sphi 0, %s476
      %s494 = sphi 0, %s494
      %s496 = sphi 0, %s494
      %s497 = sphi 0, %s496
      %s511 = sphi 0, %s497
      %s515 = sphi 0, %s515
      %s517 = sphi 0, %s515
      %s518 = sphi 0, %s517
      %s532 = sphi 0, %s518
      %s538 = sphi 0, %s540
      %s541 = sphi 0, %s538
      %s542 = sphi 0, %s541
      %s558 = sphi 0, %s542
    $region4: #{tpu_custom_call.1} parent=1 // loop_header_branch
      %34 = sbr.rel (%p32) target = $region8
    $region5: #{tpu_custom_call.1} parent=1 // loop_body
      %s36 = ssub.s32 %s31, 1
      %s37 = ssub.s32 %s31, 2
      %s44 = sadd.s32 1, %s39
      %p45 = scmp.ge.s32.totalorder %s44, 2
      %s46 = scalar_select %p45, 0, %s44
      %s47 = sadd.s32 1, %s38
      %s48 = scalar_select %p45, %s47, %s38
      %p49 = scmp.ge.s32.totalorder %s48, 2
      %s50 = scalar_select %p49, 0, %s48
      %s51 = ssub.s32 %s39, %s46
      %p52 = scmp.eq.s32.totalorder %s51, 0
      %s54 = sadd.s32 %s53, 1
      %s55 = scalar_select %p52, %s53, %s54
      %p58 = pneg %p52
      %p59 = scmp.eq.s32.totalorder %s31, 3
      %p60 = por %p58, %p59
      %p61 = scmp.ne.s32.totalorder %s53, %s56
      %p62 = scmp.eq.s32.totalorder %s31, 0
      %p63 = por %p61, %p62
      %p64 = scmp.ne.s32.totalorder %s53, %s56
      %p65 = scmp.eq.s32.totalorder %s36, 3
      %p66 = por %p64, %p65
      %p67 = scmp.ne.s32.totalorder %s56, %s57
      %p68 = scmp.eq.s32.totalorder %s36, 0
      %p69 = por %p67, %p68
      %p70 = scmp.ne.s32.totalorder %s56, %s57
      %p71 = scmp.eq.s32.totalorder %s37, 3
      %p72 = por %p70, %p71
      %p74 = scmp.ne.s32.totalorder %s57, %s73
      %p75 = scmp.eq.s32.totalorder %s37, 0
      %p76 = por %p74, %p75
      %s78 = sadd.s32 %s77, 1
      %p81 = scmp.eq.s32.totalorder %s31, 3
      %p82 = scmp.ne.s32.totalorder %s77, %s79
      %p83 = scmp.eq.s32.totalorder %s31, 0
      %p84 = por %p82, %p83
      %p85 = scmp.ne.s32.totalorder %s77, %s79
      %p86 = scmp.eq.s32.totalorder %s36, 3
      %p87 = por %p85, %p86
      %p88 = scmp.ne.s32.totalorder %s79, %s80
      %p89 = scmp.eq.s32.totalorder %s36, 0
      %p90 = por %p88, %p89
      %p91 = scmp.ne.s32.totalorder %s79, %s80
      %p92 = scmp.eq.s32.totalorder %s37, 3
      %p93 = por %p91, %p92
      %p95 = scmp.ne.s32.totalorder %s80, %s94
      %p96 = scmp.eq.s32.totalorder %s37, 0
      %p97 = por %p95, %p96
      %s99 = sadd.s32 %s98, 1
      %p102 = scmp.eq.s32.totalorder %s31, 3
      %p103 = scmp.ne.s32.totalorder %s98, %s100
      %p104 = scmp.eq.s32.totalorder %s31, 0
      %p105 = por %p103, %p104
      %p106 = scmp.ne.s32.totalorder %s98, %s100
      %p107 = scmp.eq.s32.totalorder %s36, 3
      %p108 = por %p106, %p107
      %p109 = scmp.ne.s32.totalorder %s100, %s101
      %p110 = scmp.eq.s32.totalorder %s36, 0
      %p111 = por %p109, %p110
      %p112 = scmp.ne.s32.totalorder %s100, %s101
      %p113 = scmp.eq.s32.totalorder %s37, 3
      %p114 = por %p112, %p113
      %p116 = scmp.ne.s32.totalorder %s101, %s115
      %p117 = scmp.eq.s32.totalorder %s37, 0
      %p118 = por %p116, %p117
      %s120 = sadd.s32 %s119, 1
      %p123 = scmp.eq.s32.totalorder %s31, 3
      %p124 = scmp.ne.s32.totalorder %s119, %s121
      %p125 = scmp.eq.s32.totalorder %s31, 0
      %p126 = por %p124, %p125
      %p127 = scmp.ne.s32.totalorder %s119, %s121
      %p128 = scmp.eq.s32.totalorder %s36, 3
      %p129 = por %p127, %p128
      %p130 = scmp.ne.s32.totalorder %s121, %s122
      %p131 = scmp.eq.s32.totalorder %s36, 0
      %p132 = por %p130, %p131
      %p133 = scmp.ne.s32.totalorder %s121, %s122
      %p134 = scmp.eq.s32.totalorder %s37, 3
      %p135 = por %p133, %p134
      %p137 = scmp.ne.s32.totalorder %s122, %s136
      %p138 = scmp.eq.s32.totalorder %s37, 0
      %p139 = por %p137, %p138
      %s141 = sadd.s32 %s140, 1
      %p144 = scmp.eq.s32.totalorder %s31, 3
      %p145 = scmp.ne.s32.totalorder %s140, %s142
      %p146 = scmp.eq.s32.totalorder %s31, 0
      %p147 = por %p145, %p146
      %p148 = scmp.ne.s32.totalorder %s140, %s142
      %p149 = scmp.eq.s32.totalorder %s36, 3
      %p150 = por %p148, %p149
      %p151 = scmp.ne.s32.totalorder %s142, %s143
      %p152 = scmp.eq.s32.totalorder %s36, 0
      %p153 = por %p151, %p152
      %p154 = scmp.ne.s32.totalorder %s142, %s143
      %p155 = scmp.eq.s32.totalorder %s37, 3
      %p156 = por %p154, %p155
      %p158 = scmp.ne.s32.totalorder %s143, %s157
      %p159 = scmp.eq.s32.totalorder %s37, 0
      %p160 = por %p158, %p159
      %s161 = ssub.s32 %s38, %s50
      %p162 = scmp.eq.s32.totalorder %s161, 0
      %s164 = sadd.s32 %s163, 1
      %s165 = scalar_select %p162, %s163, %s164
      %p168 = pneg %p162
      %p169 = scmp.eq.s32.totalorder %s31, 3
      %p170 = por %p168, %p169
      %p171 = scmp.ne.s32.totalorder %s163, %s166
      %p172 = scmp.eq.s32.totalorder %s31, 0
      %p173 = por %p171, %p172
      %p174 = scmp.ne.s32.totalorder %s163, %s166
      %p175 = scmp.eq.s32.totalorder %s36, 3
      %p176 = por %p174, %p175
      %p177 = scmp.ne.s32.totalorder %s166, %s167
      %p178 = scmp.eq.s32.totalorder %s36, 0
      %p179 = por %p177, %p178
      %p180 = scmp.ne.s32.totalorder %s166, %s167
      %p181 = scmp.eq.s32.totalorder %s37, 3
      %p182 = por %p180, %p181
      %p184 = scmp.ne.s32.totalorder %s167, %s183
      %p185 = scmp.eq.s32.totalorder %s37, 0
      %p186 = por %p184, %p185
      %s187 = ssub.s32 %s38, %s50
      %p188 = scmp.eq.s32.totalorder %s187, 0
      %s190 = sadd.s32 %s189, 1
      %s191 = scalar_select %p188, %s189, %s190
      %p194 = pneg %p188
      %p195 = scmp.eq.s32.totalorder %s31, 3
      %p196 = por %p194, %p195
      %p197 = scmp.ne.s32.totalorder %s189, %s192
      %p198 = scmp.eq.s32.totalorder %s31, 0
      %p199 = por %p197, %p198
      %p200 = scmp.ne.s32.totalorder %s189, %s192
      %p201 = scmp.eq.s32.totalorder %s36, 3
      %p202 = por %p200, %p201
      %p203 = scmp.ne.s32.totalorder %s192, %s193
      %p204 = scmp.eq.s32.totalorder %s36, 0
      %p205 = por %p203, %p204
      %p206 = scmp.ne.s32.totalorder %s192, %s193
      %p207 = scmp.eq.s32.totalorder %s37, 3
      %p208 = por %p206, %p207
      %p210 = scmp.ne.s32.totalorder %s193, %s209
      %p211 = scmp.eq.s32.totalorder %s37, 0
      %p212 = por %p210, %p211
      %s213 = ssub.s32 %s38, %s50
      %p214 = scmp.eq.s32.totalorder %s213, 0
      %s216 = sadd.s32 %s215, 1
      %s217 = scalar_select %p214, %s215, %s216
      %p220 = pneg %p214
      %p221 = scmp.eq.s32.totalorder %s31, 3
      %p222 = por %p220, %p221
      %p223 = scmp.ne.s32.totalorder %s215, %s218
      %p224 = scmp.eq.s32.totalorder %s31, 0
      %p225 = por %p223, %p224
      %p226 = scmp.ne.s32.totalorder %s215, %s218
      %p227 = scmp.eq.s32.totalorder %s36, 3
      %p228 = por %p226, %p227
      %p229 = scmp.ne.s32.totalorder %s218, %s219
      %p230 = scmp.eq.s32.totalorder %s36, 0
      %p231 = por %p229, %p230
      %p232 = scmp.ne.s32.totalorder %s218, %s219
      %p233 = scmp.eq.s32.totalorder %s37, 3
      %p234 = por %p232, %p233
      %p236 = scmp.ne.s32.totalorder %s219, %s235
      %p237 = scmp.eq.s32.totalorder %s37, 0
      %p238 = por %p236, %p237
      %s239 = ssub.s32 %s38, %s50
      %p240 = scmp.eq.s32.totalorder %s239, 0
      %s242 = sadd.s32 %s241, 1
      %s243 = scalar_select %p240, %s241, %s242
      %p246 = pneg %p240
      %p247 = scmp.eq.s32.totalorder %s31, 3
      %p248 = por %p246, %p247
      %p249 = scmp.ne.s32.totalorder %s241, %s244
      %p250 = scmp.eq.s32.totalorder %s31, 0
      %p251 = por %p249, %p250
      %p252 = scmp.ne.s32.totalorder %s241, %s244
      %p253 = scmp.eq.s32.totalorder %s36, 3
      %p254 = por %p252, %p253
      %p255 = scmp.ne.s32.totalorder %s244, %s245
      %p256 = scmp.eq.s32.totalorder %s36, 0
      %p257 = por %p255, %p256
      %p258 = scmp.ne.s32.totalorder %s244, %s245
      %p259 = scmp.eq.s32.totalorder %s37, 3
      %p260 = por %p258, %p259
      %p262 = scmp.ne.s32.totalorder %s245, %s261
      %p263 = scmp.eq.s32.totalorder %s37, 0
      %p264 = por %p262, %p263
      %s265 = ssub.s32 %s38, %s50
      %p266 = scmp.eq.s32.totalorder %s265, 0
      %s268 = sadd.s32 %s267, 1
      %s269 = scalar_select %p266, %s267, %s268
      %p272 = pneg %p266
      %p273 = scmp.eq.s32.totalorder %s31, 3
      %p274 = por %p272, %p273
      %p275 = scmp.ne.s32.totalorder %s267, %s270
      %p276 = scmp.eq.s32.totalorder %s31, 0
      %p277 = por %p275, %p276
      %p278 = scmp.ne.s32.totalorder %s267, %s270
      %p279 = scmp.eq.s32.totalorder %s36, 3
      %p280 = por %p278, %p279
      %p281 = scmp.ne.s32.totalorder %s270, %s271
      %p282 = scmp.eq.s32.totalorder %s36, 0
      %p283 = por %p281, %p282
      %p284 = scmp.ne.s32.totalorder %s270, %s271
      %p285 = scmp.eq.s32.totalorder %s37, 3
      %p286 = por %p284, %p285
      %p288 = scmp.ne.s32.totalorder %s271, %s287
      %p289 = scmp.eq.s32.totalorder %s37, 0
      %p290 = por %p288, %p289
      %s291 = ssub.s32 %s38, %s50
      %p292 = scmp.eq.s32.totalorder %s291, 0
      %s294 = sadd.s32 %s293, 1
      %s295 = scalar_select %p292, %s293, %s294
      %p298 = pneg %p292
      %p299 = scmp.eq.s32.totalorder %s31, 3
      %p300 = por %p298, %p299
      %p301 = scmp.ne.s32.totalorder %s293, %s296
      %p302 = scmp.eq.s32.totalorder %s31, 0
      %p303 = por %p301, %p302
      %p304 = scmp.ne.s32.totalorder %s293, %s296
      %p305 = scmp.eq.s32.totalorder %s36, 3
      %p306 = por %p304, %p305
      %p307 = scmp.ne.s32.totalorder %s296, %s297
      %p308 = scmp.eq.s32.totalorder %s36, 0
      %p309 = por %p307, %p308
      %p310 = scmp.ne.s32.totalorder %s296, %s297
      %p311 = scmp.eq.s32.totalorder %s37, 3
      %p312 = por %p310, %p311
      %p314 = scmp.ne.s32.totalorder %s297, %s313
      %p315 = scmp.eq.s32.totalorder %s37, 0
      %p316 = por %p314, %p315
      %s317 = ssub.s32 %s38, %s50
      %p318 = scmp.eq.s32.totalorder %s317, 0
      %s320 = sadd.s32 %s319, 1
      %s321 = scalar_select %p318, %s319, %s320
      %p324 = pneg %p318
      %p325 = scmp.eq.s32.totalorder %s31, 3
      %p326 = por %p324, %p325
      %p327 = scmp.ne.s32.totalorder %s319, %s322
      %p328 = scmp.eq.s32.totalorder %s31, 0
      %p329 = por %p327, %p328
      %p330 = scmp.ne.s32.totalorder %s319, %s322
      %p331 = scmp.eq.s32.totalorder %s36, 3
      %p332 = por %p330, %p331
      %p333 = scmp.ne.s32.totalorder %s322, %s323
      %p334 = scmp.eq.s32.totalorder %s36, 0
      %p335 = por %p333, %p334
      %p336 = scmp.ne.s32.totalorder %s322, %s323
      %p337 = scmp.eq.s32.totalorder %s37, 3
      %p338 = por %p336, %p337
      %p340 = scmp.ne.s32.totalorder %s323, %s339
      %p341 = scmp.eq.s32.totalorder %s37, 0
      %p342 = por %p340, %p341
      %s343 = ssub.s32 %s38, %s50
      %p344 = scmp.eq.s32.totalorder %s343, 0
      %s346 = sadd.s32 %s345, 1
      %s347 = scalar_select %p344, %s345, %s346
      %p350 = pneg %p344
      %p351 = scmp.eq.s32.totalorder %s31, 3
      %p352 = por %p350, %p351
      %p353 = scmp.ne.s32.totalorder %s345, %s348
      %p354 = scmp.eq.s32.totalorder %s31, 0
      %p355 = por %p353, %p354
      %p356 = scmp.ne.s32.totalorder %s345, %s348
      %p357 = scmp.eq.s32.totalorder %s36, 3
      %p358 = por %p356, %p357
      %p359 = scmp.ne.s32.totalorder %s348, %s349
      %p360 = scmp.eq.s32.totalorder %s36, 0
      %p361 = por %p359, %p360
      %p362 = scmp.ne.s32.totalorder %s348, %s349
      %p363 = scmp.eq.s32.totalorder %s37, 3
      %p364 = por %p362, %p363
      %p366 = scmp.ne.s32.totalorder %s349, %s365
      %p367 = scmp.eq.s32.totalorder %s37, 0
      %p368 = por %p366, %p367
      %s369 = ssub.s32 %s38, %s50
      %p370 = scmp.eq.s32.totalorder %s369, 0
      %s372 = sadd.s32 %s371, 1
      %s373 = scalar_select %p370, %s371, %s372
      %p376 = pneg %p370
      %p377 = scmp.eq.s32.totalorder %s31, 3
      %p378 = por %p376, %p377
      %p379 = scmp.ne.s32.totalorder %s371, %s374
      %p380 = scmp.eq.s32.totalorder %s31, 0
      %p381 = por %p379, %p380
      %p382 = scmp.ne.s32.totalorder %s371, %s374
      %p383 = scmp.eq.s32.totalorder %s36, 3
      %p384 = por %p382, %p383
      %p385 = scmp.ne.s32.totalorder %s374, %s375
      %p386 = scmp.eq.s32.totalorder %s36, 0
      %p387 = por %p385, %p386
      %p388 = scmp.ne.s32.totalorder %s374, %s375
      %p389 = scmp.eq.s32.totalorder %s37, 3
      %p390 = por %p388, %p389
      %p392 = scmp.ne.s32.totalorder %s375, %s391
      %p393 = scmp.eq.s32.totalorder %s37, 0
      %p394 = por %p392, %p393
      %s395 = ssub.s32 %s38, %s50
      %p396 = scmp.eq.s32.totalorder %s395, 0
      %s398 = sadd.s32 %s397, 1
      %s399 = scalar_select %p396, %s397, %s398
      %p402 = pneg %p396
      %p403 = scmp.eq.s32.totalorder %s31, 3
      %p404 = por %p402, %p403
      %p405 = scmp.ne.s32.totalorder %s397, %s400
      %p406 = scmp.eq.s32.totalorder %s31, 0
      %p407 = por %p405, %p406
      %p408 = scmp.ne.s32.totalorder %s397, %s400
      %p409 = scmp.eq.s32.totalorder %s36, 3
      %p410 = por %p408, %p409
      %p411 = scmp.ne.s32.totalorder %s400, %s401
      %p412 = scmp.eq.s32.totalorder %s36, 0
      %p413 = por %p411, %p412
      %p414 = scmp.ne.s32.totalorder %s400, %s401
      %p415 = scmp.eq.s32.totalorder %s37, 3
      %p416 = por %p414, %p415
      %p418 = scmp.ne.s32.totalorder %s401, %s417
      %p419 = scmp.eq.s32.totalorder %s37, 0
      %p420 = por %p418, %p419
      %s421 = ssub.s32 %s38, %s50
      %p422 = scmp.eq.s32.totalorder %s421, 0
      %s424 = sadd.s32 %s423, 1
      %s425 = scalar_select %p422, %s423, %s424
      %p428 = pneg %p422
      %p429 = scmp.eq.s32.totalorder %s31, 3
      %p430 = por %p428, %p429
      %p431 = scmp.ne.s32.totalorder %s423, %s426
      %p432 = scmp.eq.s32.totalorder %s31, 0
      %p433 = por %p431, %p432
      %p434 = scmp.ne.s32.totalorder %s423, %s426
      %p435 = scmp.eq.s32.totalorder %s36, 3
      %p436 = por %p434, %p435
      %p437 = scmp.ne.s32.totalorder %s426, %s427
      %p438 = scmp.eq.s32.totalorder %s36, 0
      %p439 = por %p437, %p438
      %p440 = scmp.ne.s32.totalorder %s426, %s427
      %p441 = scmp.eq.s32.totalorder %s37, 3
      %p442 = por %p440, %p441
      %p444 = scmp.ne.s32.totalorder %s427, %s443
      %p445 = scmp.eq.s32.totalorder %s37, 0
      %p446 = por %p444, %p445
      %s447 = ssub.s32 %s38, %s50
      %p448 = scmp.eq.s32.totalorder %s447, 0
      %s450 = sadd.s32 %s449, 1
      %s451 = scalar_select %p448, %s449, %s450
      %p454 = pneg %p448
      %p455 = scmp.eq.s32.totalorder %s31, 3
      %p456 = por %p454, %p455
      %p457 = scmp.ne.s32.totalorder %s449, %s452
      %p458 = scmp.eq.s32.totalorder %s31, 0
      %p459 = por %p457, %p458
      %p460 = scmp.ne.s32.totalorder %s449, %s452
      %p461 = scmp.eq.s32.totalorder %s36, 3
      %p462 = por %p460, %p461
      %p463 = scmp.ne.s32.totalorder %s452, %s453
      %p464 = scmp.eq.s32.totalorder %s36, 0
      %p465 = por %p463, %p464
      %p466 = scmp.ne.s32.totalorder %s452, %s453
      %p467 = scmp.eq.s32.totalorder %s37, 3
      %p468 = por %p466, %p467
      %p470 = scmp.ne.s32.totalorder %s453, %s469
      %p471 = scmp.eq.s32.totalorder %s37, 0
      %p472 = por %p470, %p471
      %s474 = sadd.s32 %s473, 1
      %p477 = scmp.eq.s32.totalorder %s31, 3
      %p478 = scmp.ne.s32.totalorder %s473, %s475
      %p479 = scmp.eq.s32.totalorder %s31, 0
      %p480 = por %p478, %p479
      %p481 = scmp.ne.s32.totalorder %s473, %s475
      %p482 = scmp.eq.s32.totalorder %s36, 3
      %p483 = por %p481, %p482
      %p484 = scmp.ne.s32.totalorder %s475, %s476
      %p485 = scmp.eq.s32.totalorder %s36, 0
      %p486 = por %p484, %p485
      %p487 = scmp.ne.s32.totalorder %s475, %s476
      %p488 = scmp.eq.s32.totalorder %s37, 3
      %p489 = por %p487, %p488
      %p491 = scmp.ne.s32.totalorder %s476, %s490
      %p492 = scmp.eq.s32.totalorder %s37, 0
      %p493 = por %p491, %p492
      %s495 = sadd.s32 %s494, 1
      %p498 = scmp.eq.s32.totalorder %s31, 3
      %p499 = scmp.ne.s32.totalorder %s494, %s496
      %p500 = scmp.eq.s32.totalorder %s31, 0
      %p501 = por %p499, %p500
      %p502 = scmp.ne.s32.totalorder %s494, %s496
      %p503 = scmp.eq.s32.totalorder %s36, 3
      %p504 = por %p502, %p503
      %p505 = scmp.ne.s32.totalorder %s496, %s497
      %p506 = scmp.eq.s32.totalorder %s36, 0
      %p507 = por %p505, %p506
      %p508 = scmp.ne.s32.totalorder %s496, %s497
      %p509 = scmp.eq.s32.totalorder %s37, 3
      %p510 = por %p508, %p509
      %p512 = scmp.ne.s32.totalorder %s497, %s511
      %p513 = scmp.eq.s32.totalorder %s37, 0
      %p514 = por %p512, %p513
      %s516 = sadd.s32 %s515, 1
      %p519 = scmp.eq.s32.totalorder %s31, 3
      %p520 = scmp.ne.s32.totalorder %s515, %s517
      %p521 = scmp.eq.s32.totalorder %s31, 0
      %p522 = por %p520, %p521
      %p523 = scmp.ne.s32.totalorder %s515, %s517
      %p524 = scmp.eq.s32.totalorder %s36, 3
      %p525 = por %p523, %p524
      %p526 = scmp.ne.s32.totalorder %s517, %s518
      %p527 = scmp.eq.s32.totalorder %s36, 0
      %p528 = por %p526, %p527
      %p529 = scmp.ne.s32.totalorder %s517, %s518
      %p530 = scmp.eq.s32.totalorder %s37, 3
      %p531 = por %p529, %p530
      %p533 = scmp.ne.s32.totalorder %s518, %s532
      %p534 = scmp.eq.s32.totalorder %s37, 0
      %p535 = por %p533, %p534
      %s536 = ssub.s32 %s39, %s46
      %p537 = scmp.eq.s32.totalorder %s536, 0
      %s539 = sadd.s32 %s538, 1
      %s540 = scalar_select %p537, %s538, %s539
      %p543 = pneg %p537
      %p544 = scmp.eq.s32.totalorder %s31, 3
      %p545 = por %p543, %p544
      %p546 = scmp.ne.s32.totalorder %s538, %s541
      %p547 = scmp.eq.s32.totalorder %s31, 0
      %p548 = por %p546, %p547
      %p549 = scmp.ne.s32.totalorder %s538, %s541
      %p550 = scmp.eq.s32.totalorder %s36, 3
      %p551 = por %p549, %p550
      %p552 = scmp.ne.s32.totalorder %s541, %s542
      %p553 = scmp.eq.s32.totalorder %s36, 0
      %p554 = por %p552, %p553
      %p555 = scmp.ne.s32.totalorder %s541, %s542
      %p556 = scmp.eq.s32.totalorder %s37, 3
      %p557 = por %p555, %p556
      %p559 = scmp.ne.s32.totalorder %s542, %s558
      %p560 = scmp.eq.s32.totalorder %s37, 0
      %p561 = por %p559, %p560
      %p562 = scmp.le.s32.totalorder 1, %s31
      %p563 = scmp.lt.s32.totalorder %s31, 5
      %p564 = pnand %p562, %p563
      %p565 = pneg %p564
      // Predicated region
      $region9: #{tpu_custom_call.1} parent=5 // pred_check
        _
      $region10: #{tpu_custom_call.1} parent=5 // pred_check_branch
        %567 = sbr.rel (%p564) target = $region12
      $region11: #{tpu_custom_call.1} parent=5 // pred_region
        %s568 = ssub.s32 %s31, 1
        // Predicated region
        $region13: #{tpu_custom_call.1} parent=11 // pred_check
          %p569 = pneg %p90
        $region14: #{tpu_custom_call.1} parent=11 // pred_check_branch
          %571 = sbr.rel (%p569) target = $region16
        $region15: #{tpu_custom_call.1} parent=11 // pred_region
          %s573 = ssub.s32 1536, 1536
          %574 = vsyncadd [#allocation5], %s573
          %s575 = sshll.u32 [#allocation4], 4
          %s576 = int_to_ptr.vmem [resolvable:$true] %s575
          %581 = dma.hbm_to_vmem [thread:$0]  %s1, 1536, %s576, [#allocation5], 64, 64, 4
        $region16: #{tpu_custom_call.1} parent=11 // pred_fallthru
          _
        // Predicated region
        $region17: #{tpu_custom_call.1} parent=11 // pred_check
          %p582 = pneg %p111
        $region18: #{tpu_custom_call.1} parent=11 // pred_check_branch
          %584 = sbr.rel (%p582) target = $region20
        $region19: #{tpu_custom_call.1} parent=11 // pred_region
          _
        $region20: #{tpu_custom_call.1} parent=11 // pred_fallthru
          _
        // Predicated region
        $region21: #{tpu_custom_call.1} parent=11 // pred_check
          %p585 = pneg %p132
        $region22: #{tpu_custom_call.1} parent=11 // pred_check_branch
          %587 = sbr.rel (%p585) target = $region24
        $region23: #{tpu_custom_call.1} parent=11 // pred_region
          _
        $region24: #{tpu_custom_call.1} parent=11 // pred_fallthru
          _
        // Predicated region
        $region25: #{tpu_custom_call.1} parent=11 // pred_check
          %p588 = pneg %p153
        $region26: #{tpu_custom_call.1} parent=11 // pred_check_branch
          %590 = sbr.rel (%p588) target = $region28
        $region27: #{tpu_custom_call.1} parent=11 // pred_region
          %s592 = ssub.s32 16, 16
          %593 = vsyncadd [#allocation8], %s592
          %s595 = sshll.u32 [#allocation7], 4
          %s596 = int_to_ptr.vmem [resolvable:$true] %s595
          %598 = dma.hbm_to_vmem [thread:$0]  %s4, 16, %s596, [#allocation8]
        $region28: #{tpu_custom_call.1} parent=11 // pred_fallthru
          _
        // Predicated region
        $region29: #{tpu_custom_call.1} parent=11 // pred_check
          %p599 = pneg %p486
        $region30: #{tpu_custom_call.1} parent=11 // pred_check_branch
          %601 = sbr.rel (%p599) target = $region32
        $region31: #{tpu_custom_call.1} parent=11 // pred_region
          _
        $region32: #{tpu_custom_call.1} parent=11 // pred_fallthru
          _
        // Predicated region
        $region33: #{tpu_custom_call.1} parent=11 // pred_check
          %p602 = pneg %p507
        $region34: #{tpu_custom_call.1} parent=11 // pred_check_branch
          %604 = sbr.rel (%p602) target = $region36
        $region35: #{tpu_custom_call.1} parent=11 // pred_region
          _
        $region36: #{tpu_custom_call.1} parent=11 // pred_fallthru
          _
        // Predicated region
        $region37: #{tpu_custom_call.1} parent=11 // pred_check
          %p605 = pneg %p528
        $region38: #{tpu_custom_call.1} parent=11 // pred_check_branch
          %607 = sbr.rel (%p605) target = $region40
        $region39: #{tpu_custom_call.1} parent=11 // pred_region
          %s609 = ssub.s32 1024, 1024
          %610 = vsyncadd [#allocation8], %s609
          %s611 = sshll.u32 [#allocation13], 4
          %s612 = int_to_ptr.vmem [resolvable:$true] %s611
          %617 = dma.hbm_to_vmem [thread:$0]  %s19, 1024, %s612, [#allocation8], 64, 64, 4
        $region40: #{tpu_custom_call.1} parent=11 // pred_fallthru
          _
      $region12: #{tpu_custom_call.1} parent=5 // pred_fallthru
        _
      %p618 = scmp.lt.s32.totalorder %s31, 4
      // Predicated region
      $region41: #{tpu_custom_call.1} parent=5 // pred_check
        %p619 = pneg %p618
      $region42: #{tpu_custom_call.1} parent=5 // pred_check_branch
        %621 = sbr.rel (%p619) target = $region44
      $region43: #{tpu_custom_call.1} parent=5 // pred_region
        // Predicated region
        $region45: #{tpu_custom_call.1} parent=43 // pred_check
          %p622 = pneg %p63
        $region46: #{tpu_custom_call.1} parent=43 // pred_check_branch
          %624 = sbr.rel (%p622) target = $region48
        $region47: #{tpu_custom_call.1} parent=43 // pred_region
          %p625 = scmp.lt.s32.totalorder %s39, 1
          %s626 = scalar_select %p625, %s39, 1
          %s627 = smul.addr %s626, 2
          %s628 = smul.addr %s627, 4
          %s629 = scalar_lea.vmem %s0, %s628
        $region48: #{tpu_custom_call.1} parent=43 // pred_fallthru
          _
        // Predicated region
        $region49: #{tpu_custom_call.1} parent=43 // pred_check
          %p630 = pneg %p173
        $region50: #{tpu_custom_call.1} parent=43 // pred_check_branch
          %632 = sbr.rel (%p630) target = $region52
        $region51: #{tpu_custom_call.1} parent=43 // pred_region
          %p633 = scmp.lt.s32.totalorder %s38, 1
          %s634 = scalar_select %p633, %s38, 1
          %s635 = scalar_lea.vmem %s5, %s634
        $region52: #{tpu_custom_call.1} parent=43 // pred_fallthru
          _
        // Predicated region
        $region53: #{tpu_custom_call.1} parent=43 // pred_check
          %p636 = pneg %p199
        $region54: #{tpu_custom_call.1} parent=43 // pred_check_branch
          %638 = sbr.rel (%p636) target = $region56
        $region55: #{tpu_custom_call.1} parent=43 // pred_region
          %p639 = scmp.lt.s32.totalorder %s38, 1
          %s640 = scalar_select %p639, %s38, 1
          %s641 = scalar_lea.vmem %s6, %s640
        $region56: #{tpu_custom_call.1} parent=43 // pred_fallthru
          _
        // Predicated region
        $region57: #{tpu_custom_call.1} parent=43 // pred_check
          %p642 = pneg %p225
        $region58: #{tpu_custom_call.1} parent=43 // pred_check_branch
          %644 = sbr.rel (%p642) target = $region60
        $region59: #{tpu_custom_call.1} parent=43 // pred_region
          %s645 = sand.u32 %s31, 1
          %s646 = scalar_lea.sflag [#allocation5], %s645
          %s647 = sand.u32 %s215, 1
          %s648 = smul.addr %s647, 192
          %s649 = scalar_lea.vmem [#allocation9], %s648
          %s651 = ssub.s32 3072, 3072
          %652 = vsyncadd %s646, %s651
          %s653 = smul.addr %s38, 48
          %s654 = smul.addr %s653, 64
          %s655 = scalar_lea.hbm %s7, %s654
          %s656 = sshll.u32 %s649, 4
          %s657 = int_to_ptr.vmem [resolvable:$true] %s656
          %662 = dma.hbm_to_vmem [thread:$0]  %s655, 3072, %s657, %s646, 192, 192, 12
        $region60: #{tpu_custom_call.1} parent=43 // pred_fallthru
          _
        // Predicated region
        $region61: #{tpu_custom_call.1} parent=43 // pred_check
          %p663 = pneg %p251
        $region62: #{tpu_custom_call.1} parent=43 // pred_check_branch
          %665 = sbr.rel (%p663) target = $region64
        $region63: #{tpu_custom_call.1} parent=43 // pred_region
          %p666 = scmp.lt.s32.totalorder %s38, 1
          %s667 = scalar_select %p666, %s38, 1
          %s668 = smul.addr %s667, 3
          %s669 = scalar_lea.vmem %s8, %s668
        $region64: #{tpu_custom_call.1} parent=43 // pred_fallthru
          _
        // Predicated region
        $region65: #{tpu_custom_call.1} parent=43 // pred_check
          %p670 = pneg %p277
        $region66: #{tpu_custom_call.1} parent=43 // pred_check_branch
          %672 = sbr.rel (%p670) target = $region68
        $region67: #{tpu_custom_call.1} parent=43 // pred_region
          %s673 = sand.u32 %s31, 1
          %s674 = scalar_lea.sflag [#allocation5], %s673
          %s675 = sand.u32 %s267, 1
          %s676 = smul.addr %s675, 64
          %s677 = scalar_lea.vmem [#allocation10], %s676
          %s679 = ssub.s32 1024, 1024
          %680 = vsyncadd %s674, %s679
          %s681 = smul.addr %s38, 16
          %s682 = smul.addr %s681, 64
          %s683 = scalar_lea.hbm %s9, %s682
          %s684 = sshll.u32 %s677, 4
          %s685 = int_to_ptr.vmem [resolvable:$true] %s684
          %690 = dma.hbm_to_vmem [thread:$0]  %s683, 1024, %s685, %s674, 64, 64, 4
        $region68: #{tpu_custom_call.1} parent=43 // pred_fallthru
          _
        // Predicated region
        $region69: #{tpu_custom_call.1} parent=43 // pred_check
          %p691 = pneg %p303
        $region70: #{tpu_custom_call.1} parent=43 // pred_check_branch
          %693 = sbr.rel (%p691) target = $region72
        $region71: #{tpu_custom_call.1} parent=43 // pred_region
          %p694 = scmp.lt.s32.totalorder %s38, 1
          %s695 = scalar_select %p694, %s38, 1
          %s696 = scalar_lea.vmem %s10, %s695
        $region72: #{tpu_custom_call.1} parent=43 // pred_fallthru
          _
        // Predicated region
        $region73: #{tpu_custom_call.1} parent=43 // pred_check
          %p697 = pneg %p329
        $region74: #{tpu_custom_call.1} parent=43 // pred_check_branch
          %699 = sbr.rel (%p697) target = $region76
        $region75: #{tpu_custom_call.1} parent=43 // pred_region
          %p700 = scmp.lt.s32.totalorder %s38, 1
          %s701 = scalar_select %p700, %s38, 1
          %s702 = scalar_lea.vmem %s11, %s701
        $region76: #{tpu_custom_call.1} parent=43 // pred_fallthru
          _
        // Predicated region
        $region77: #{tpu_custom_call.1} parent=43 // pred_check
          %p703 = pneg %p355
        $region78: #{tpu_custom_call.1} parent=43 // pred_check_branch
          %705 = sbr.rel (%p703) target = $region80
        $region79: #{tpu_custom_call.1} parent=43 // pred_region
          %p706 = scmp.lt.s32.totalorder %s38, 1
          %s707 = scalar_select %p706, %s38, 1
          %s708 = scalar_lea.vmem %s12, %s707
        $region80: #{tpu_custom_call.1} parent=43 // pred_fallthru
          _
        // Predicated region
        $region81: #{tpu_custom_call.1} parent=43 // pred_check
          %p709 = pneg %p381
        $region82: #{tpu_custom_call.1} parent=43 // pred_check_branch
          %711 = sbr.rel (%p709) target = $region84
        $region83: #{tpu_custom_call.1} parent=43 // pred_region
          %s712 = sand.u32 %s31, 1
          %s713 = scalar_lea.sflag [#allocation5], %s712
          %s714 = sand.u32 %s371, 1
          %s715 = smul.addr %s714, 256
          %s716 = scalar_lea.vmem [#allocation11], %s715
          %s718 = ssub.s32 4096, 4096
          %719 = vsyncadd %s713, %s718
          %s720 = smul.addr %s38, 64
          %s721 = smul.addr %s720, 64
          %s722 = scalar_lea.hbm %s13, %s721
          %s723 = sshll.u32 %s716, 4
          %s724 = int_to_ptr.vmem [resolvable:$true] %s723
          %729 = dma.hbm_to_vmem [thread:$0]  %s722, 4096, %s724, %s713, 256, 256, 16
        $region84: #{tpu_custom_call.1} parent=43 // pred_fallthru
          _
        // Predicated region
        $region85: #{tpu_custom_call.1} parent=43 // pred_check
          %p730 = pneg %p407
        $region86: #{tpu_custom_call.1} parent=43 // pred_check_branch
          %732 = sbr.rel (%p730) target = $region88
        $region87: #{tpu_custom_call.1} parent=43 // pred_region
          %p733 = scmp.lt.s32.totalorder %s38, 1
          %s734 = scalar_select %p733, %s38, 1
          %s735 = smul.addr %s734, 4
          %s736 = scalar_lea.vmem %s14, %s735
        $region88: #{tpu_custom_call.1} parent=43 // pred_fallthru
          _
        // Predicated region
        $region89: #{tpu_custom_call.1} parent=43 // pred_check
          %p737 = pneg %p433
        $region90: #{tpu_custom_call.1} parent=43 // pred_check_branch
          %739 = sbr.rel (%p737) target = $region92
        $region91: #{tpu_custom_call.1} parent=43 // pred_region
          %s740 = sand.u32 %s31, 1
          %s741 = scalar_lea.sflag [#allocation5], %s740
          %s742 = sand.u32 %s423, 1
          %s743 = smul.addr %s742, 256
          %s744 = scalar_lea.vmem [#allocation12], %s743
          %s746 = ssub.s32 4096, 4096
          %747 = vsyncadd %s741, %s746
          %s748 = smul.addr %s38, 64
          %s749 = smul.addr %s748, 64
          %s750 = scalar_lea.hbm %s15, %s749
          %s751 = sshll.u32 %s744, 4
          %s752 = int_to_ptr.vmem [resolvable:$true] %s751
          %757 = dma.hbm_to_vmem [thread:$0]  %s750, 4096, %s752, %s741, 64, 64, 4
        $region92: #{tpu_custom_call.1} parent=43 // pred_fallthru
          _
        // Predicated region
        $region93: #{tpu_custom_call.1} parent=43 // pred_check
          %p758 = pneg %p459
        $region94: #{tpu_custom_call.1} parent=43 // pred_check_branch
          %760 = sbr.rel (%p758) target = $region96
        $region95: #{tpu_custom_call.1} parent=43 // pred_region
          %p761 = scmp.lt.s32.totalorder %s38, 1
          %s762 = scalar_select %p761, %s38, 1
          %s763 = scalar_lea.vmem %s16, %s762
        $region96: #{tpu_custom_call.1} parent=43 // pred_fallthru
          _
      $region44: #{tpu_custom_call.1} parent=5 // pred_fallthru
        _
      %p764 = scmp.le.s32.totalorder 1, %s31
      %p765 = scmp.lt.s32.totalorder %s31, 5
      %p766 = pnand %p764, %p765
      %p767 = pneg %p766
      // Predicated region
      $region97: #{tpu_custom_call.1} parent=5 // pred_check
        _
      $region98: #{tpu_custom_call.1} parent=5 // pred_check_branch
        %769 = sbr.rel (%p766) target = $region100
      $region99: #{tpu_custom_call.1} parent=5 // pred_region
        %s770 = ssub.s32 %s31, 1
        // Predicated region
        $region101: #{tpu_custom_call.1} parent=99 // pred_check
          %p771 = pneg %p90
        $region102: #{tpu_custom_call.1} parent=99 // pred_check_branch
          %773 = sbr.rel (%p771) target = $region104
        $region103: #{tpu_custom_call.1} parent=99 // pred_region
          %774 = dma.done [#allocation5], 1536
        $region104: #{tpu_custom_call.1} parent=99 // pred_fallthru
          _
        // Predicated region
        $region105: #{tpu_custom_call.1} parent=99 // pred_check
          %p775 = pneg %p153
        $region106: #{tpu_custom_call.1} parent=99 // pred_check_branch
          %777 = sbr.rel (%p775) target = $region108
        $region107: #{tpu_custom_call.1} parent=99 // pred_region
          %778 = dma.done [#allocation8], 16
        $region108: #{tpu_custom_call.1} parent=99 // pred_fallthru
          _
        %s779 = sand.u32 %s36, 1
        %s780 = scalar_lea.sflag [#allocation5], %s779
        %s781 = sand.u32 %s218, 1
        %s782 = smul.addr %s781, 192
        %s783 = scalar_lea.vmem [#allocation9], %s782
        // Predicated region
        $region109: #{tpu_custom_call.1} parent=99 // pred_check
          %p784 = pneg %p231
        $region110: #{tpu_custom_call.1} parent=99 // pred_check_branch
          %786 = sbr.rel (%p784) target = $region112
        $region111: #{tpu_custom_call.1} parent=99 // pred_region
          %787 = dma.done %s780, 3072
        $region112: #{tpu_custom_call.1} parent=99 // pred_fallthru
          _
        %s788 = sand.u32 %s36, 1
        %s789 = scalar_lea.sflag [#allocation5], %s788
        %s790 = sand.u32 %s270, 1
        %s791 = smul.addr %s790, 64
        %s792 = scalar_lea.vmem [#allocation10], %s791
        // Predicated region
        $region113: #{tpu_custom_call.1} parent=99 // pred_check
          %p793 = pneg %p283
        $region114: #{tpu_custom_call.1} parent=99 // pred_check_branch
          %795 = sbr.rel (%p793) target = $region116
        $region115: #{tpu_custom_call.1} parent=99 // pred_region
          %796 = dma.done %s789, 1024
        $region116: #{tpu_custom_call.1} parent=99 // pred_fallthru
          _
        %s797 = sand.u32 %s36, 1
        %s798 = scalar_lea.sflag [#allocation5], %s797
        %s799 = sand.u32 %s374, 1
        %s800 = smul.addr %s799, 256
        %s801 = scalar_lea.vmem [#allocation11], %s800
        // Predicated region
        $region117: #{tpu_custom_call.1} parent=99 // pred_check
          %p802 = pneg %p387
        $region118: #{tpu_custom_call.1} parent=99 // pred_check_branch
          %804 = sbr.rel (%p802) target = $region120
        $region119: #{tpu_custom_call.1} parent=99 // pred_region
          %805 = dma.done %s798, 4096
        $region120: #{tpu_custom_call.1} parent=99 // pred_fallthru
          _
        %s806 = sand.u32 %s36, 1
        %s807 = scalar_lea.sflag [#allocation5], %s806
        %s808 = sand.u32 %s426, 1
        %s809 = smul.addr %s808, 256
        %s810 = scalar_lea.vmem [#allocation12], %s809
        // Predicated region
        $region121: #{tpu_custom_call.1} parent=99 // pred_check
          %p811 = pneg %p439
        $region122: #{tpu_custom_call.1} parent=99 // pred_check_branch
          %813 = sbr.rel (%p811) target = $region124
        $region123: #{tpu_custom_call.1} parent=99 // pred_region
          %814 = dma.done %s807, 4096
        $region124: #{tpu_custom_call.1} parent=99 // pred_fallthru
          _
        // Predicated region
        $region125: #{tpu_custom_call.1} parent=99 // pred_check
          %p815 = pneg %p528
        $region126: #{tpu_custom_call.1} parent=99 // pred_check_branch
          %817 = sbr.rel (%p815) target = $region128
        $region127: #{tpu_custom_call.1} parent=99 // pred_region
          %818 = dma.done [#allocation8], 1024
        $region128: #{tpu_custom_call.1} parent=99 // pred_fallthru
          _
        %p819 = scmp.lt.s32.totalorder %s41, 1
        %s820 = scalar_select %p819, %s41, 1
        %s821 = smul.addr %s820, 2
        %s822 = smul.addr %s821, 4
        %s823 = scalar_lea.vmem %s0, %s822
        %p824 = pneg %p69
        %p825 = pneg %p66
        %p826 = pneg %p90
        %p827 = pneg %p87
        %p828 = pneg %p111
        %p829 = pneg %p108
        %p830 = pneg %p132
        %p831 = pneg %p129
        %p832 = pneg %p153
        %p833 = pneg %p150
        %p834 = scmp.lt.s32.totalorder %s40, 1
        %s835 = scalar_select %p834, %s40, 1
        %s836 = scalar_lea.vmem %s5, %s835
        %p837 = pneg %p179
        %p838 = pneg %p176
        %p839 = scmp.lt.s32.totalorder %s40, 1
        %s840 = scalar_select %p839, %s40, 1
        %s841 = scalar_lea.vmem %s6, %s840
        %p842 = pneg %p205
        %p843 = pneg %p202
        %s844 = sand.u32 %s36, 1
        %s845 = scalar_lea.sflag [#allocation5], %s844
        %s846 = sand.u32 %s218, 1
        %s847 = smul.addr %s846, 192
        %s848 = scalar_lea.vmem [#allocation9], %s847
        %p849 = pneg %p231
        %p850 = pneg %p228
        %p851 = scmp.lt.s32.totalorder %s40, 1
        %s852 = scalar_select %p851, %s40, 1
        %s853 = smul.addr %s852, 3
        %s854 = scalar_lea.vmem %s8, %s853
        %p855 = pneg %p257
        %p856 = pneg %p254
        %s857 = sand.u32 %s36, 1
        %s858 = scalar_lea.sflag [#allocation5], %s857
        %s859 = sand.u32 %s270, 1
        %s860 = smul.addr %s859, 64
        %s861 = scalar_lea.vmem [#allocation10], %s860
        %p862 = pneg %p283
        %p863 = pneg %p280
        %p864 = scmp.lt.s32.totalorder %s40, 1
        %s865 = scalar_select %p864, %s40, 1
        %s866 = scalar_lea.vmem %s10, %s865
        %p867 = pneg %p309
        %p868 = pneg %p306
        %p869 = scmp.lt.s32.totalorder %s40, 1
        %s870 = scalar_select %p869, %s40, 1
        %s871 = scalar_lea.vmem %s11, %s870
        %p872 = pneg %p335
        %p873 = pneg %p332
        %p874 = scmp.lt.s32.totalorder %s40, 1
        %s875 = scalar_select %p874, %s40, 1
        %s876 = scalar_lea.vmem %s12, %s875
        %p877 = pneg %p361
        %p878 = pneg %p358
        %s879 = sand.u32 %s36, 1
        %s880 = scalar_lea.sflag [#allocation5], %s879
        %s881 = sand.u32 %s374, 1
        %s882 = smul.addr %s881, 256
        %s883 = scalar_lea.vmem [#allocation11], %s882
        %p884 = pneg %p387
        %p885 = pneg %p384
        %p886 = scmp.lt.s32.totalorder %s40, 1
        %s887 = scalar_select %p886, %s40, 1
        %s888 = smul.addr %s887, 4
        %s889 = scalar_lea.vmem %s14, %s888
        %p890 = pneg %p413
        %p891 = pneg %p410
        %s892 = sand.u32 %s36, 1
        %s893 = scalar_lea.sflag [#allocation5], %s892
        %s894 = sand.u32 %s426, 1
        %s895 = smul.addr %s894, 256
        %s896 = scalar_lea.vmem [#allocation12], %s895
        %p897 = pneg %p439
        %p898 = pneg %p436
        %p899 = scmp.lt.s32.totalorder %s40, 1
        %s900 = scalar_select %p899, %s40, 1
        %s901 = scalar_lea.vmem %s16, %s900
        %p902 = pneg %p465
        %p903 = pneg %p462
        %p904 = pneg %p486
        %p905 = pneg %p483
        %p906 = pneg %p507
        %p907 = pneg %p504
        %p908 = pneg %p528
        %p909 = pneg %p525
        %p910 = pneg %p554
        %p911 = pneg %p551
        %s912 = sand.u32 %s541, 1
        %s913 = scalar_lea.sflag [#allocation6], %s912
        %s914 = sand.u32 %s541, 1
        %s915 = scalar_lea.vmem [#allocation14], %s914
        %p916 = scmp.lt.s32.totalorder %s41, 1
        %s917 = scalar_select %p916, %s41, 1
        %s918 = smul.addr %s917, 2
        %s919 = smul.addr %s918, 4
        %s920 = scalar_lea.vmem %s0, %s919
        %p921 = scmp.lt.s32.totalorder %s40, 1
        %s922 = scalar_select %p921, %s40, 1
        %s923 = scalar_lea.vmem %s5, %s922
        %p924 = scmp.lt.s32.totalorder %s40, 1
        %s925 = scalar_select %p924, %s40, 1
        %s926 = scalar_lea.vmem %s6, %s925
        %p927 = scmp.lt.s32.totalorder %s40, 1
        %s928 = scalar_select %p927, %s40, 1
        %s929 = smul.addr %s928, 3
        %s930 = scalar_lea.vmem %s8, %s929
        %p931 = scmp.lt.s32.totalorder %s40, 1
        %s932 = scalar_select %p931, %s40, 1
        %s933 = scalar_lea.vmem %s10, %s932
        %p934 = scmp.lt.s32.totalorder %s40, 1
        %s935 = scalar_select %p934, %s40, 1
        %s936 = scalar_lea.vmem %s11, %s935
        %p937 = scmp.lt.s32.totalorder %s40, 1
        %s938 = scalar_select %p937, %s40, 1
        %s939 = scalar_lea.vmem %s12, %s938
        %p940 = scmp.lt.s32.totalorder %s40, 1
        %s941 = scalar_select %p940, %s40, 1
        %s942 = smul.addr %s941, 4
        %s943 = scalar_lea.vmem %s14, %s942
        %p944 = scmp.lt.s32.totalorder %s40, 1
        %s945 = scalar_select %p944, %s40, 1
        %s946 = scalar_lea.vmem %s16, %s945
        %p950 = scmp.eq.s32.totalorder %s40, 0
        // Predicated region
        $region129: #{tpu_custom_call.1} parent=99 // pred_check
          %p951 = pneg %p950
        $region130: #{tpu_custom_call.1} parent=99 // pred_check_branch
          %953 = sbr.rel (%p951) target = $region132
        $region131: #{tpu_custom_call.1} parent=99 // pred_region
          %v954 = vld [vmem:[%s920] sm:$0x77]
          %v955 = vld [vmem:[#allocation4] sm:$0xf]
          %v956 = vld [vmem:[#allocation4 + $0x4] sm:$0xf]
          %v957 = vld [vmem:[#allocation4 + $0x8] sm:$0xf]
          %v958 = vld [vmem:[#allocation4 + $0xc] sm:$0xf]
          %v959 = vld [vmem:[#allocation4 + $0x10] sm:$0xf]
          %v960 = vld [vmem:[#allocation4 + $0x14] sm:$0xf]
          %v961 = vld [vmem:[#allocation4 + $0x18] sm:$0xf]
          %v962 = vld [vmem:[#allocation4 + $0x1c] sm:$0xf]
          %v963 = vld [vmem:[#allocation4 + $0x20] sm:$0xf]
          %v964 = vld [vmem:[#allocation4 + $0x24] sm:$0xf]
          %v965 = vld [vmem:[#allocation4 + $0x28] sm:$0xf]
          %v966 = vld [vmem:[#allocation4 + $0x2c] sm:$0xf]
          %v967 = vld [vmem:[#allocation4 + $0x30] sm:$0xf]
          %v968 = vld [vmem:[#allocation4 + $0x34] sm:$0xf]
          %v969 = vld [vmem:[#allocation4 + $0x38] sm:$0xf]
          %v970 = vld [vmem:[#allocation4 + $0x3c] sm:$0xf]
          %v971 = vld [vmem:[#allocation4 + $0x40] sm:$0xf]
          %v972 = vld [vmem:[#allocation4 + $0x44] sm:$0xf]
          %v973 = vld [vmem:[#allocation4 + $0x48] sm:$0xf]
          %v974 = vld [vmem:[#allocation4 + $0x4c] sm:$0xf]
          %v975 = vld [vmem:[#allocation4 + $0x50] sm:$0xf]
          %v976 = vld [vmem:[#allocation4 + $0x54] sm:$0xf]
          %v977 = vld [vmem:[#allocation4 + $0x58] sm:$0xf]
          %v978 = vld [vmem:[#allocation4 + $0x5c] sm:$0xf]
          %v979 = vld [vmem:[%s2] sm:$0x1f]
          %v981 = vunpack.c.l.b16 %v954
          %v982 = vunpack.c.h.b16 %v954
          %v983 = vpack.c.b16 %v981, %v981
          %v984 = vpack.c.b16 %v982, %v982
          %v1010 = vunpack.c.l.b16 %v955
          %v1011 = vunpack.c.l.b16 %v956
          %v1012 = vunpack.c.l.b16 %v957
          %v1013 = vunpack.c.l.b16 %v958
          %v1014 = vunpack.c.l.b16 %v959
          %v1015 = vunpack.c.l.b16 %v960
          %v1016 = vunpack.c.l.b16 %v961
          %v1017 = vunpack.c.l.b16 %v962
          %v1018 = vunpack.c.l.b16 %v963
          %v1019 = vunpack.c.l.b16 %v964
          %v1020 = vunpack.c.l.b16 %v965
          %v1021 = vunpack.c.l.b16 %v966
          %v1022 = vunpack.c.l.b16 %v967
          %v1023 = vunpack.c.l.b16 %v968
          %v1024 = vunpack.c.l.b16 %v969
          %v1025 = vunpack.c.l.b16 %v970
          %v1026 = vunpack.c.l.b16 %v971
          %v1027 = vunpack.c.l.b16 %v972
          %v1028 = vunpack.c.l.b16 %v973
          %v1029 = vunpack.c.l.b16 %v974
          %v1030 = vunpack.c.l.b16 %v975
          %v1031 = vunpack.c.l.b16 %v976
          %v1032 = vunpack.c.l.b16 %v977
          %v1033 = vunpack.c.l.b16 %v978
          %v1034 = vpack.c.b16 %v1011, %v1010
          %v1035 = vpack.c.b16 %v1013, %v1012
          %v1036 = vpack.c.b16 %v1015, %v1014
          %v1037 = vpack.c.b16 %v1017, %v1016
          %v1038 = vpack.c.b16 %v1019, %v1018
          %v1039 = vpack.c.b16 %v1021, %v1020
          %v1040 = vpack.c.b16 %v1023, %v1022
          %v1041 = vpack.c.b16 %v1025, %v1024
          %v1042 = vpack.c.b16 %v1027, %v1026
          %v1043 = vpack.c.b16 %v1029, %v1028
          %v1044 = vpack.c.b16 %v1031, %v1030
          %v1045 = vpack.c.b16 %v1033, %v1032
          %vm1058 = vcmask 523264
          %v1060 = vsel %vm1058, %v984, 0
          %1062 = vmatprep.subr.bf16.mxu0 0
          %1063 = vmatpush1.bf16.msra.mxu0 %v1041
          %1064 = vmatprep.subr.bf16.mxu0 0
          %1065 = vmatpush1.bf16.msra.mxu0 %v1040
          %1066 = vmatprep.subr.bf16.mxu0 0
          %1067 = vmatpush1.bf16.msra.mxu0 %v1039
          %1068 = vmatprep.subr.bf16.mxu0 0
          %1069 = vmatpush1.bf16.msra.mxu0 %v1038
          %1070 = vmatprep.subr.bf16.mxu0 0
          %1071 = vmatpush1.bf16.msra.mxu0 %v1037
          %1072 = vmatprep.subr.bf16.mxu0 0
          %1073 = vmatpush1.bf16.msra.mxu0 %v1036
          %1074 = vmatprep.subr.bf16.mxu0 0
          %1075 = vmatpush1.bf16.msra.mxu0 %v1035
          %1076 = vmatprep.subr.bf16.mxu0 0
          %1077 = vmatpush1.bf16.msra.mxu0 %v1034
          %1078 = vmatprep.subr.bf16.mxu0 0
          %1079 = vmatpush2.bf16.msra.mxu0 0
          %1080 = vmatprep.subr.bf16.mxu0 0
          %1081 = vmatpush2.bf16.msra.mxu0 0
          %1082 = vmatprep.subr.bf16.mxu0 0
          %1083 = vmatpush2.bf16.msra.mxu0 0
          %1084 = vmatprep.subr.bf16.mxu0 0
          %1085 = vmatpush2.bf16.msra.mxu0 0
          %1086 = vmatprep.subr.bf16.mxu0 0
          %1087 = vmatpush2.bf16.msra.mxu0 %v1045
          %1088 = vmatprep.subr.bf16.mxu0 0
          %1089 = vmatpush2.bf16.msra.mxu0 %v1044
          %1090 = vmatprep.subr.bf16.mxu0 0
          %1091 = vmatpush2.bf16.msra.mxu0 %v1043
          %1092 = vmatprep.subr.bf16.mxu0 0
          %1093 = vmatpush2.bf16.msra.mxu0 %v1042
          %1094 = vmatprep.mubr.bf16.mxu0 %v1060
          %1095 = vmatmul.mubr.bf16.gmra.mxu0 %v983
          %v1096 = vpop.f32.mrf.mxu0
          %v1097 = vadd.f32 %v979, %v1096
          %v1098 = vpop.f32.mrf.mxu0
          %v1099 = vpop.f32.mrf.mxu0
          %v1100 = vpop.f32.mrf.mxu0
          %1101 = vdwg.mxu0
          %v1102 = vld [vmem:[%s3] sm:$0x1]
          %v1103 = vld [vmem:[#allocation7] sm:$0x1]
          %vm1104 = vcmask 1044480
          %v1105 = vsel %vm1104, %v1097, 0.0
          %1106 = vadd.xlane.f32.xlu0 %v1105
          %v1107 = vpop.xlane.xlu0 %1106
          %v1108 = vrcp.pop 128.0
          %v1109 = vmul.f32 %v1107, %v1108
          %v1110 = vsub.f32 %v1097, %v1109
          %v1111 = vmul.f32 %v1110, %v1110
          %v1112 = vsel %vm1104, %v1111, 0.0
          %1113 = vadd.xlane.f32.xlu0 %v1112
          %v1114 = vpop.xlane.xlu0 %1113
          %v1115 = vmul.f32 %v1114, %v1108
          %v1116 = vadd.f32 %v1115, 1e-05
          %v1117 = vrsqrt.pop %v1116
          %v1118 = vmul.f32 %v1110, %v1117
          %v1120 = vlaneseq
          %v1121 = vshrl.u32 %v1120, 7
          %v1122 = vsub.s32 0, %v1121
          %v1123 = vrot.slane %v1102, %v1122
          %v1125 = vmul.f32 %v1118, %v1123
          %v1127 = vlaneseq
          %v1128 = vshrl.u32 %v1127, 7
          %v1129 = vsub.s32 0, %v1128
          %v1130 = vrot.slane %v1103, %v1129
          %v1132 = vadd.f32 %v1125, %v1130
          %s1133 = smul.u32 %s41, 8
          %s1134 = scalar_lea.vmem [#allocation2], %s1133
          %1135 = vst [vmem:[%s1134] sm:$0x1f] %v1132
        $region132: #{tpu_custom_call.1} parent=99 // pred_fallthru
          _
        %s1136 = smul.u32 %s41, 8
        %s1137 = scalar_lea.vmem [#allocation2], %s1136
        %v1138 = vld [vmem:[%s1137] sm:$0x1f]
        %v1139 = vld [vmem:[%s923] sm:$0x1]
        %v1140 = vld [vmem:[%s926] sm:$0x1]
        %vm1141 = vcmask 1044480
        %v1142 = vsel %vm1141, %v1138, 0.0
        %1143 = vadd.xlane.f32.xlu0 %v1142
        %v1144 = vpop.xlane.xlu0 %1143
        %v1145 = vrcp.pop 128.0
        %v1146 = vmul.f32 %v1144, %v1145
        %v1147 = vsub.f32 %v1138, %v1146
        %v1148 = vmul.f32 %v1147, %v1147
        %v1149 = vsel %vm1141, %v1148, 0.0
        %1150 = vadd.xlane.f32.xlu0 %v1149
        %v1151 = vpop.xlane.xlu0 %1150
        %v1152 = vmul.f32 %v1151, %v1145
        %v1153 = vadd.f32 %v1152, 1e-05
        %v1154 = vrsqrt.pop %v1153
        %v1155 = vmul.f32 %v1147, %v1154
        %v1157 = vlaneseq
        %v1158 = vshrl.u32 %v1157, 7
        %v1159 = vsub.s32 0, %v1158
        %v1160 = vrot.slane %v1139, %v1159
        %v1162 = vmul.f32 %v1155, %v1160
        %v1164 = vlaneseq
        %v1165 = vshrl.u32 %v1164, 7
        %v1166 = vsub.s32 0, %v1165
        %v1167 = vrot.slane %v1140, %v1166
        %v1169 = vadd.f32 %v1162, %v1167
        %v1170 = vpack.c.bf16 %v1169, %v1169
        %v1171 = vld [vmem:[%s783] sm:$0xff]
        %v1172 = vld [vmem:[%s783 + $0x8] sm:$0xf]
        %v1173 = vld [vmem:[%s783 + $0xc] sm:$0xff]
        %v1174 = vld [vmem:[%s783 + $0x14] sm:$0xf]
        %v1175 = vld [vmem:[%s783 + $0x18] sm:$0xff]
        %v1176 = vld [vmem:[%s783 + $0x20] sm:$0xf]
        %v1177 = vld [vmem:[%s783 + $0x24] sm:$0xff]
        %v1178 = vld [vmem:[%s783 + $0x2c] sm:$0xf]
        %v1179 = vld [vmem:[%s783 + $0x30] sm:$0xff]
        %v1180 = vld [vmem:[%s783 + $0x38] sm:$0xf]
        %v1181 = vld [vmem:[%s783 + $0x3c] sm:$0xff]
        %v1182 = vld [vmem:[%s783 + $0x44] sm:$0xf]
        %v1183 = vld [vmem:[%s783 + $0x48] sm:$0xff]
        %v1184 = vld [vmem:[%s783 + $0x50] sm:$0xf]
        %v1185 = vld [vmem:[%s783 + $0x54] sm:$0xff]
        %v1186 = vld [vmem:[%s783 + $0x5c] sm:$0xf]
        %v1187 = vld [vmem:[%s783 + $0x60] sm:$0xff]
        %v1188 = vld [vmem:[%s783 + $0x68] sm:$0xf]
        %v1189 = vld [vmem:[%s783 + $0x6c] sm:$0xff]
        %v1190 = vld [vmem:[%s783 + $0x74] sm:$0xf]
        %v1191 = vld [vmem:[%s783 + $0x78] sm:$0xff]
        %v1192 = vld [vmem:[%s783 + $0x80] sm:$0xf]
        %v1193 = vld [vmem:[%s783 + $0x84] sm:$0xff]
        %v1194 = vld [vmem:[%s783 + $0x8c] sm:$0xf]
        %v1195 = vld [vmem:[%s783 + $0x90] sm:$0xff]
        %v1196 = vld [vmem:[%s783 + $0x98] sm:$0xf]
        %v1197 = vld [vmem:[%s783 + $0x9c] sm:$0xff]
        %v1198 = vld [vmem:[%s783 + $0xa4] sm:$0xf]
        %v1199 = vld [vmem:[%s783 + $0xa8] sm:$0xff]
        %v1200 = vld [vmem:[%s783 + $0xb0] sm:$0xf]
        %v1201 = vld [vmem:[%s783 + $0xb4] sm:$0xff]
        %v1202 = vld [vmem:[%s783 + $0xbc] sm:$0xf]
        %v1203 = vld [vmem:[%s930] sm:$0x7]
        %v1205 = vlaneseq
        %v1206 = vshrl.u32 %v1205, 7
        %v1207 = vsub.s32 0, %v1206
        %v1208 = vrot.slane %v1203, %v1207
        %v1209 = vlaneseq
        %v1210 = vshrl.u32 %v1209, 7
        %v1211 = vsub.s32 1, %v1210
        %v1212 = vrot.slane %v1203, %v1211
        %v1213 = vlaneseq
        %v1214 = vshrl.u32 %v1213, 7
        %v1215 = vsub.s32 2, %v1214
        %v1216 = vrot.slane %v1203, %v1215
        %v1252 = vunpack.c.l.b16 %v1171
        %v1253 = vunpack.c.h.b16 %v1171
        %v1254 = vunpack.c.l.b16 %v1172
        %v1255 = vunpack.c.l.b16 %v1173
        %v1256 = vunpack.c.h.b16 %v1173
        %v1257 = vunpack.c.l.b16 %v1174
        %v1258 = vunpack.c.l.b16 %v1175
        %v1259 = vunpack.c.h.b16 %v1175
        %v1260 = vunpack.c.l.b16 %v1176
        %v1261 = vunpack.c.l.b16 %v1177
        %v1262 = vunpack.c.h.b16 %v1177
        %v1263 = vunpack.c.l.b16 %v1178
        %v1264 = vunpack.c.l.b16 %v1179
        %v1265 = vunpack.c.h.b16 %v1179
        %v1266 = vunpack.c.l.b16 %v1180
        %v1267 = vunpack.c.l.b16 %v1181
        %v1268 = vunpack.c.h.b16 %v1181
        %v1269 = vunpack.c.l.b16 %v1182
        %v1270 = vunpack.c.l.b16 %v1183
        %v1271 = vunpack.c.h.b16 %v1183
        %v1272 = vunpack.c.l.b16 %v1184
        %v1273 = vunpack.c.l.b16 %v1185
        %v1274 = vunpack.c.h.b16 %v1185
        %v1275 = vunpack.c.l.b16 %v1186
        %v1276 = vunpack.c.l.b16 %v1187
        %v1277 = vunpack.c.h.b16 %v1187
        %v1278 = vunpack.c.l.b16 %v1188
        %v1279 = vunpack.c.l.b16 %v1189
        %v1280 = vunpack.c.h.b16 %v1189
        %v1281 = vunpack.c.l.b16 %v1190
        %v1282 = vunpack.c.l.b16 %v1191
        %v1283 = vunpack.c.h.b16 %v1191
        %v1284 = vunpack.c.l.b16 %v1192
        %v1285 = vunpack.c.l.b16 %v1193
        %v1286 = vunpack.c.h.b16 %v1193
        %v1287 = vunpack.c.l.b16 %v1194
        %v1288 = vunpack.c.l.b16 %v1195
        %v1289 = vunpack.c.h.b16 %v1195
        %v1290 = vunpack.c.l.b16 %v1196
        %v1291 = vunpack.c.l.b16 %v1197
        %v1292 = vunpack.c.h.b16 %v1197
        %v1293 = vunpack.c.l.b16 %v1198
        %v1294 = vunpack.c.l.b16 %v1199
        %v1295 = vunpack.c.h.b16 %v1199
        %v1296 = vunpack.c.l.b16 %v1200
        %v1297 = vunpack.c.l.b16 %v1201
        %v1298 = vunpack.c.h.b16 %v1201
        %v1299 = vunpack.c.l.b16 %v1202
        %v1300 = vpack.c.b16 %v1255, %v1252
        %v1301 = vpack.c.b16 %v1256, %v1253
        %v1302 = vpack.c.b16 %v1257, %v1254
        %v1303 = vpack.c.b16 %v1261, %v1258
        %v1304 = vpack.c.b16 %v1262, %v1259
        %v1305 = vpack.c.b16 %v1263, %v1260
        %v1306 = vpack.c.b16 %v1267, %v1264
        %v1307 = vpack.c.b16 %v1268, %v1265
        %v1308 = vpack.c.b16 %v1269, %v1266
        %v1309 = vpack.c.b16 %v1273, %v1270
        %v1310 = vpack.c.b16 %v1274, %v1271
        %v1311 = vpack.c.b16 %v1275, %v1272
        %v1312 = vpack.c.b16 %v1279, %v1276
        %v1313 = vpack.c.b16 %v1280, %v1277
        %v1314 = vpack.c.b16 %v1281, %v1278
        %v1315 = vpack.c.b16 %v1285, %v1282
        %v1316 = vpack.c.b16 %v1286, %v1283
        %v1317 = vpack.c.b16 %v1287, %v1284
        %v1318 = vpack.c.b16 %v1291, %v1288
        %v1319 = vpack.c.b16 %v1292, %v1289
        %v1320 = vpack.c.b16 %v1293, %v1290
        %v1321 = vpack.c.b16 %v1297, %v1294
        %v1322 = vpack.c.b16 %v1298, %v1295
        %v1323 = vpack.c.b16 %v1299, %v1296
        %1348 = vmatprep.subr.bf16.mxu0 %v1322
        %1349 = vmatpush1.bf16.msra.mxu0 %v1321
        %1350 = vmatprep.subr.bf16.mxu0 %v1319
        %1351 = vmatpush1.bf16.msra.mxu0 %v1318
        %1352 = vmatprep.subr.bf16.mxu0 %v1316
        %1353 = vmatpush1.bf16.msra.mxu0 %v1315
        %1354 = vmatprep.subr.bf16.mxu0 %v1313
        %1355 = vmatpush1.bf16.msra.mxu0 %v1312
        %1356 = vmatprep.subr.bf16.mxu0 %v1310
        %1357 = vmatpush1.bf16.msra.mxu0 %v1309
        %1358 = vmatprep.subr.bf16.mxu0 %v1307
        %1359 = vmatpush1.bf16.msra.mxu0 %v1306
        %1360 = vmatprep.subr.bf16.mxu0 %v1304
        %1361 = vmatpush1.bf16.msra.mxu0 %v1303
        %1362 = vmatprep.subr.bf16.mxu0 %v1301
        %1363 = vmatpush1.bf16.msra.mxu0 %v1300
        %1364 = vmatprep.subr.bf16.mxu0 0
        %1365 = vmatpush2.bf16.msra.mxu0 0
        %1366 = vmatprep.subr.bf16.mxu0 0
        %1367 = vmatpush2.bf16.msra.mxu0 0
        %1368 = vmatprep.subr.bf16.mxu0 0
        %1369 = vmatpush2.bf16.msra.mxu0 0
        %1370 = vmatprep.subr.bf16.mxu0 0
        %1371 = vmatpush2.bf16.msra.mxu0 0
        %1372 = vmatprep.subr.bf16.mxu0 0
        %1373 = vmatpush2.bf16.msra.mxu0 0
        %1374 = vmatprep.subr.bf16.mxu0 0
        %1375 = vmatpush2.bf16.msra.mxu0 0
        %1376 = vmatprep.subr.bf16.mxu0 0
        %1377 = vmatpush2.bf16.msra.mxu0 0
        %1378 = vmatprep.subr.bf16.mxu0 0
        %1379 = vmatpush2.bf16.msra.mxu0 0
        %1380 = vmatprep.mubr.bf16.mxu0 0
        %1381 = vmatmul.mubr.bf16.gmra.mxu0 %v1170
        %v1382 = vpop.f32.mrf.mxu0
        %v1383 = vadd.f32 %v1208, %v1382
        %v1384 = vpop.f32.mrf.mxu0
        %v1385 = vadd.f32 %v1212, %v1384
        %v1386 = vpop.f32.mrf.mxu0
        %v1387 = vpop.f32.mrf.mxu0
        %1388 = vdwg.mxu0
        %1389 = vmatprep.subr.bf16.mxu0 0
        %1390 = vmatpush1.bf16.msra.mxu0 %v1323
        %1391 = vmatprep.subr.bf16.mxu0 0
        %1392 = vmatpush1.bf16.msra.mxu0 %v1320
        %1393 = vmatprep.subr.bf16.mxu0 0
        %1394 = vmatpush1.bf16.msra.mxu0 %v1317
        %1395 = vmatprep.subr.bf16.mxu0 0
        %1396 = vmatpush1.bf16.msra.mxu0 %v1314
        %1397 = vmatprep.subr.bf16.mxu0 0
        %1398 = vmatpush1.bf16.msra.mxu0 %v1311
        %1399 = vmatprep.subr.bf16.mxu0 0
        %1400 = vmatpush1.bf16.msra.mxu0 %v1308
        %1401 = vmatprep.subr.bf16.mxu0 0
        %1402 = vmatpush1.bf16.msra.mxu0 %v1305
        %1403 = vmatprep.subr.bf16.mxu0 0
        %1404 = vmatpush1.bf16.msra.mxu0 %v1302
        %1405 = vmatprep.subr.bf16.mxu0 0
        %1406 = vmatpush2.bf16.msra.mxu0 0
        %1407 = vmatprep.subr.bf16.mxu0 0
        %1408 = vmatpush2.bf16.msra.mxu0 0
        %1409 = vmatprep.subr.bf16.mxu0 0
        %1410 = vmatpush2.bf16.msra.mxu0 0
        %1411 = vmatprep.subr.bf16.mxu0 0
        %1412 = vmatpush2.bf16.msra.mxu0 0
        %1413 = vmatprep.subr.bf16.mxu0 0
        %1414 = vmatpush2.bf16.msra.mxu0 0
        %1415 = vmatprep.subr.bf16.mxu0 0
        %1416 = vmatpush2.bf16.msra.mxu0 0
        %1417 = vmatprep.subr.bf16.mxu0 0
        %1418 = vmatpush2.bf16.msra.mxu0 0
        %1419 = vmatprep.subr.bf16.mxu0 0
        %1420 = vmatpush2.bf16.msra.mxu0 0
        %1421 = vmatprep.mubr.bf16.mxu0 0
        %1422 = vmatmul.mubr.bf16.gmra.mxu0 %v1170
        %v1423 = vpop.f32.mrf.mxu0
        %v1424 = vadd.f32 %v1216, %v1423
        %v1425 = vpop.f32.mrf.mxu0
        %v1426 = vpop.f32.mrf.mxu0
        %v1427 = vpop.f32.mrf.mxu0
        %1428 = vdwg.mxu0
        %v1429 = vpack.c.bf16 %v1383, %v1383
        %v1430 = vpack.c.bf16 %v1385, %v1385
        %v1431 = vpack.c.bf16 %v1424, %v1424
        %vm1432 = vcmask 523264
        %v1434 = vsel %vm1432, %v1429, 0
        %v1437 = vsel %vm1432, %v1430, 0
        %1439 = vmatprep.subr.bf16.mxu0 0
        %1440 = vmatpush1.bf16.xpose.msra.mxu0 0
        %1441 = vmatprep.subr.bf16.mxu0 0
        %1442 = vmatpush1.bf16.xpose.msra.mxu0 0
        %1443 = vmatprep.subr.bf16.mxu0 0
        %1444 = vmatpush1.bf16.xpose.msra.mxu0 0
        %1445 = vmatprep.subr.bf16.mxu0 0
        %1446 = vmatpush1.bf16.xpose.msra.mxu0 0
        %1447 = vmatprep.subr.bf16.mxu0 0
        %1448 = vmatpush1.bf16.xpose.msra.mxu0 0
        %1449 = vmatprep.subr.bf16.mxu0 0
        %1450 = vmatpush1.bf16.xpose.msra.mxu0 0
        %1451 = vmatprep.subr.bf16.mxu0 0
        %1452 = vmatpush1.bf16.xpose.msra.mxu0 0
        %1453 = vmatprep.subr.bf16.mxu0 0
        %1454 = vmatpush1.bf16.xpose.msra.mxu0 %v1437
        %1455 = vmatprep.subr.bf16.mxu0 0
        %1456 = vmatpush2.bf16.xpose.msra.mxu0 0
        %1457 = vmatprep.subr.bf16.mxu0 0
        %1458 = vmatpush2.bf16.xpose.msra.mxu0 0
        %1459 = vmatprep.subr.bf16.mxu0 0
        %1460 = vmatpush2.bf16.xpose.msra.mxu0 0
        %1461 = vmatprep.subr.bf16.mxu0 0
        %1462 = vmatpush2.bf16.xpose.msra.mxu0 0
        %1463 = vmatprep.subr.bf16.mxu0 0
        %1464 = vmatpush2.bf16.xpose.msra.mxu0 0
        %1465 = vmatprep.subr.bf16.mxu0 0
        %1466 = vmatpush2.bf16.xpose.msra.mxu0 0
        %1467 = vmatprep.subr.bf16.mxu0 0
        %1468 = vmatpush2.bf16.xpose.msra.mxu0 0
        %1469 = vmatprep.subr.bf16.mxu0 0
        %1470 = vmatpush2.bf16.xpose.msra.mxu0 0
        %1471 = vmatprep.mubr.bf16.mxu0 0
        %1472 = vmatmul.mubr.bf16.gmra.mxu0 %v1434
        %v1473 = vpop.f32.mrf.mxu0
        %v1474 = vadd.f32 0.0, %v1473
        %v1475 = vpop.f32.mrf.mxu0
        %v1476 = vpop.f32.mrf.mxu0
        %v1477 = vpop.f32.mrf.mxu0
        %1478 = vdwg.mxu0
        %vm1479 = vcmask 36864
        %v1480 = vsel %vm1479, %v1474, -inf
        %1481 = vmax.xlane.f32.xlu0 %v1480
        %v1482 = vpop.xlane.xlu0 %1481
        %v1483 = vsub.f32 %v1474, %v1482
        %v1484 = vmul.f32 %v1483, 1.442695
        %v1485 = vpow.pop %v1484
        %v1486 = vsel %vm1479, %v1485, 0.0
        %1487 = vadd.xlane.f32.xlu0 %v1486
        %v1488 = vpop.xlane.xlu0 %1487
        %v1489 = vrcp.pop %v1488
        %v1490 = vmul.f32 %v1485, %v1489
        %v1491 = vpack.c.bf16 %v1490, %v1490
        %vm1492 = vcmask 39936
        %v1494 = vsel %vm1492, %v1491, 0
        %vm1496 = vcmask 1041408
        %vm1497 = vcmask 1042432
        %v1498 = vsel %vm1496, 4294967295, 65535
        %v1499 = vsel %vm1497, %v1498, 0
        %v1501 = vand.u32 %v1431, %v1499
        %1503 = vmatprep.subr.bf16.mxu0 0
        %1504 = vmatpush1.bf16.msra.mxu0 0
        %1505 = vmatprep.subr.bf16.mxu0 0
        %1506 = vmatpush1.bf16.msra.mxu0 0
        %1507 = vmatprep.subr.bf16.mxu0 0
        %1508 = vmatpush1.bf16.msra.mxu0 0
        %1509 = vmatprep.subr.bf16.mxu0 0
        %1510 = vmatpush1.bf16.msra.mxu0 0
        %1511 = vmatprep.subr.bf16.mxu0 0
        %1512 = vmatpush1.bf16.msra.mxu0 0
        %1513 = vmatprep.subr.bf16.mxu0 0
        %1514 = vmatpush1.bf16.msra.mxu0 0
        %1515 = vmatprep.subr.bf16.mxu0 0
        %1516 = vmatpush1.bf16.msra.mxu0 0
        %1517 = vmatprep.subr.bf16.mxu0 0
        %1518 = vmatpush1.bf16.msra.mxu0 %v1501
        %1519 = vmatprep.subr.bf16.mxu0 0
        %1520 = vmatpush2.bf16.msra.mxu0 0
        %1521 = vmatprep.subr.bf16.mxu0 0
        %1522 = vmatpush2.bf16.msra.mxu0 0
        %1523 = vmatprep.subr.bf16.mxu0 0
        %1524 = vmatpush2.bf16.msra.mxu0 0
        %1525 = vmatprep.subr.bf16.mxu0 0
        %1526 = vmatpush2.bf16.msra.mxu0 0
        %1527 = vmatprep.subr.bf16.mxu0 0
        %1528 = vmatpush2.bf16.msra.mxu0 0
        %1529 = vmatprep.subr.bf16.mxu0 0
        %1530 = vmatpush2.bf16.msra.mxu0 0
        %1531 = vmatprep.subr.bf16.mxu0 0
        %1532 = vmatpush2.bf16.msra.mxu0 0
        %1533 = vmatprep.subr.bf16.mxu0 0
        %1534 = vmatpush2.bf16.msra.mxu0 0
        %1535 = vmatprep.mubr.bf16.mxu0 0
        %1536 = vmatmul.mubr.bf16.gmra.mxu0 %v1494
        %v1537 = vpop.f32.mrf.mxu0
        %v1538 = vadd.f32 0.0, %v1537
        %v1539 = vpop.f32.mrf.mxu0
        %v1540 = vpop.f32.mrf.mxu0
        %v1541 = vpop.f32.mrf.mxu0
        %1542 = vdwg.mxu0
        %v1543 = vpack.c.bf16 %v1538, %v1538
        %vm1544 = vcmask 518144
        %vm1545 = vsmask.f32 2304
        %vm1546 = vmand %vm1544, %vm1545
        %v1547 = vld [vmem:[#allocation3] sm:$0x7]
        %v1548 = vsel %vm1546, %v1543, %v1547
        %1549 = vst [vmem:[#allocation3] sm:$0x7] %v1548
        %1551 = vrot.lane.b32.xlu0 %v1429, 64
        %v1552 = vpop.permute.xlu0 %1551
        %1554 = vrot.lane.b32.xlu0 %v1430, 64
        %v1555 = vpop.permute.xlu0 %1554
        %v1557 = vsel %vm1432, %v1552, 0
        %v1560 = vsel %vm1432, %v1555, 0
        %1562 = vmatprep.subr.bf16.mxu0 0
        %1563 = vmatpush1.bf16.xpose.msra.mxu0 0
        %1564 = vmatprep.subr.bf16.mxu0 0
        %1565 = vmatpush1.bf16.xpose.msra.mxu0 0
        %1566 = vmatprep.subr.bf16.mxu0 0
        %1567 = vmatpush1.bf16.xpose.msra.mxu0 0
        %1568 = vmatprep.subr.bf16.mxu0 0
        %1569 = vmatpush1.bf16.xpose.msra.mxu0 0
        %1570 = vmatprep.subr.bf16.mxu0 0
        %1571 = vmatpush1.bf16.xpose.msra.mxu0 0
        %1572 = vmatprep.subr.bf16.mxu0 0
        %1573 = vmatpush1.bf16.xpose.msra.mxu0 0
        %1574 = vmatprep.subr.bf16.mxu0 0
        %1575 = vmatpush1.bf16.xpose.msra.mxu0 0
        %1576 = vmatprep.subr.bf16.mxu0 0
        %1577 = vmatpush1.bf16.xpose.msra.mxu0 %v1560
        %1578 = vmatprep.subr.bf16.mxu0 0
        %1579 = vmatpush2.bf16.xpose.msra.mxu0 0
        %1580 = vmatprep.subr.bf16.mxu0 0
        %1581 = vmatpush2.bf16.xpose.msra.mxu0 0
        %1582 = vmatprep.subr.bf16.mxu0 0
        %1583 = vmatpush2.bf16.xpose.msra.mxu0 0
        %1584 = vmatprep.subr.bf16.mxu0 0
        %1585 = vmatpush2.bf16.xpose.msra.mxu0 0
        %1586 = vmatprep.subr.bf16.mxu0 0
        %1587 = vmatpush2.bf16.xpose.msra.mxu0 0
        %1588 = vmatprep.subr.bf16.mxu0 0
        %1589 = vmatpush2.bf16.xpose.msra.mxu0 0
        %1590 = vmatprep.subr.bf16.mxu0 0
        %1591 = vmatpush2.bf16.xpose.msra.mxu0 0
        %1592 = vmatprep.subr.bf16.mxu0 0
        %1593 = vmatpush2.bf16.xpose.msra.mxu0 0
        %1594 = vmatprep.mubr.bf16.mxu0 0
        %1595 = vmatmul.mubr.bf16.gmra.mxu0 %v1557
        %v1596 = vpop.f32.mrf.mxu0
        %v1597 = vadd.f32 0.0, %v1596
        %v1598 = vpop.f32.mrf.mxu0
        %v1599 = vpop.f32.mrf.mxu0
        %v1600 = vpop.f32.mrf.mxu0
        %1601 = vdwg.mxu0
        %v1602 = vsel %vm1479, %v1597, -inf
        %1603 = vmax.xlane.f32.xlu0 %v1602
        %v1604 = vpop.xlane.xlu0 %1603
        %v1605 = vsub.f32 %v1597, %v1604
        %v1606 = vmul.f32 %v1605, 1.442695
        %v1607 = vpow.pop %v1606
        %v1608 = vsel %vm1479, %v1607, 0.0
        %1609 = vadd.xlane.f32.xlu0 %v1608
        %v1610 = vpop.xlane.xlu0 %1609
        %v1611 = vrcp.pop %v1610
        %v1612 = vmul.f32 %v1607, %v1611
        %v1613 = vpack.c.bf16 %v1612, %v1612
        %1615 = vrot.lane.b32.xlu0 %v1431, 64
        %v1616 = vpop.permute.xlu0 %1615
        %v1618 = vsel %vm1492, %v1613, 0
        %v1621 = vand.u32 %v1616, %v1499
        %1623 = vmatprep.subr.bf16.mxu0 0
        %1624 = vmatpush1.bf16.msra.mxu0 0
        %1625 = vmatprep.subr.bf16.mxu0 0
        %1626 = vmatpush1.bf16.msra.mxu0 0
        %1627 = vmatprep.subr.bf16.mxu0 0
        %1628 = vmatpush1.bf16.msra.mxu0 0
        %1629 = vmatprep.subr.bf16.mxu0 0
        %1630 = vmatpush1.bf16.msra.mxu0 0
        %1631 = vmatprep.subr.bf16.mxu0 0
        %1632 = vmatpush1.bf16.msra.mxu0 0
        %1633 = vmatprep.subr.bf16.mxu0 0
        %1634 = vmatpush1.bf16.msra.mxu0 0
        %1635 = vmatprep.subr.bf16.mxu0 0
        %1636 = vmatpush1.bf16.msra.mxu0 0
        %1637 = vmatprep.subr.bf16.mxu0 0
        %1638 = vmatpush1.bf16.msra.mxu0 %v1621
        %1639 = vmatprep.subr.bf16.mxu0 0
        %1640 = vmatpush2.bf16.msra.mxu0 0
        %1641 = vmatprep.subr.bf16.mxu0 0
        %1642 = vmatpush2.bf16.msra.mxu0 0
        %1643 = vmatprep.subr.bf16.mxu0 0
        %1644 = vmatpush2.bf16.msra.mxu0 0
        %1645 = vmatprep.subr.bf16.mxu0 0
        %1646 = vmatpush2.bf16.msra.mxu0 0
        %1647 = vmatprep.subr.bf16.mxu0 0
        %1648 = vmatpush2.bf16.msra.mxu0 0
        %1649 = vmatprep.subr.bf16.mxu0 0
        %1650 = vmatpush2.bf16.msra.mxu0 0
        %1651 = vmatprep.subr.bf16.mxu0 0
        %1652 = vmatpush2.bf16.msra.mxu0 0
        %1653 = vmatprep.subr.bf16.mxu0 0
        %1654 = vmatpush2.bf16.msra.mxu0 0
        %1655 = vmatprep.mubr.bf16.mxu0 0
        %1656 = vmatmul.mubr.bf16.gmra.mxu0 %v1618
        %v1657 = vpop.f32.mrf.mxu0
        %v1658 = vadd.f32 0.0, %v1657
        %v1659 = vpop.f32.mrf.mxu0
        %v1660 = vpop.f32.mrf.mxu0
        %v1661 = vpop.f32.mrf.mxu0
        %1662 = vdwg.mxu0
        %v1663 = vpack.c.bf16 %v1658, %v1658
        %v1665 = vunpack.c.l.b16 %v1663
        %v1666 = vpack.c.b16 %v1665, %v1665
        %1667 = vrot.lane.b32.xlu0 %v1666, 64
        %v1668 = vpop.permute.xlu0 %1667
        %vm1670 = vcmask 1042944
        %vm1671 = vmand %vm1670, %vm1545
        %v1672 = vld [vmem:[#allocation3] sm:$0x7]
        %v1673 = vsel %vm1671, %v1668, %v1672
        %1674 = vst [vmem:[#allocation3] sm:$0x7] %v1673
        %v1675 = vld [vmem:[#allocation3] sm:$0x7]
        %v1676 = vld [vmem:[%s792] sm:$0xf]
        %v1677 = vld [vmem:[%s792 + $0x4] sm:$0xf]
        %v1678 = vld [vmem:[%s792 + $0x8] sm:$0xf]
        %v1679 = vld [vmem:[%s792 + $0xc] sm:$0xf]
        %v1680 = vld [vmem:[%s792 + $0x10] sm:$0xf]
        %v1681 = vld [vmem:[%s792 + $0x14] sm:$0xf]
        %v1682 = vld [vmem:[%s792 + $0x18] sm:$0xf]
        %v1683 = vld [vmem:[%s792 + $0x1c] sm:$0xf]
        %v1684 = vld [vmem:[%s792 + $0x20] sm:$0xf]
        %v1685 = vld [vmem:[%s792 + $0x24] sm:$0xf]
        %v1686 = vld [vmem:[%s792 + $0x28] sm:$0xf]
        %v1687 = vld [vmem:[%s792 + $0x2c] sm:$0xf]
        %v1688 = vld [vmem:[%s792 + $0x30] sm:$0xf]
        %v1689 = vld [vmem:[%s792 + $0x34] sm:$0xf]
        %v1690 = vld [vmem:[%s792 + $0x38] sm:$0xf]
        %v1691 = vld [vmem:[%s792 + $0x3c] sm:$0xf]
        %v1692 = vld [vmem:[%s933] sm:$0x1]
        %v1694 = vlaneseq
        %v1695 = vshrl.u32 %v1694, 7
        %v1696 = vsub.s32 0, %v1695
        %v1697 = vrot.slane %v1692, %v1696
        %v1715 = vunpack.c.l.b16 %v1676
        %v1716 = vunpack.c.l.b16 %v1677
        %v1717 = vunpack.c.l.b16 %v1678
        %v1718 = vunpack.c.l.b16 %v1679
        %v1719 = vunpack.c.l.b16 %v1680
        %v1720 = vunpack.c.l.b16 %v1681
        %v1721 = vunpack.c.l.b16 %v1682
        %v1722 = vunpack.c.l.b16 %v1683
        %v1723 = vunpack.c.l.b16 %v1684
        %v1724 = vunpack.c.l.b16 %v1685
        %v1725 = vunpack.c.l.b16 %v1686
        %v1726 = vunpack.c.l.b16 %v1687
        %v1727 = vunpack.c.l.b16 %v1688
        %v1728 = vunpack.c.l.b16 %v1689
        %v1729 = vunpack.c.l.b16 %v1690
        %v1730 = vunpack.c.l.b16 %v1691
        %v1731 = vpack.c.b16 %v1716, %v1715
        %v1732 = vpack.c.b16 %v1718, %v1717
        %v1733 = vpack.c.b16 %v1720, %v1719
        %v1734 = vpack.c.b16 %v1722, %v1721
        %v1735 = vpack.c.b16 %v1724, %v1723
        %v1736 = vpack.c.b16 %v1726, %v1725
        %v1737 = vpack.c.b16 %v1728, %v1727
        %v1738 = vpack.c.b16 %v1730, %v1729
        %1747 = vmatprep.subr.bf16.mxu0 0
        %1748 = vmatpush1.bf16.msra.mxu0 %v1738
        %1749 = vmatprep.subr.bf16.mxu0 0
        %1750 = vmatpush1.bf16.msra.mxu0 %v1737
        %1751 = vmatprep.subr.bf16.mxu0 0
        %1752 = vmatpush1.bf16.msra.mxu0 %v1736
        %1753 = vmatprep.subr.bf16.mxu0 0
        %1754 = vmatpush1.bf16.msra.mxu0 %v1735
        %1755 = vmatprep.subr.bf16.mxu0 0
        %1756 = vmatpush1.bf16.msra.mxu0 %v1734
        %1757 = vmatprep.subr.bf16.mxu0 0
        %1758 = vmatpush1.bf16.msra.mxu0 %v1733
        %1759 = vmatprep.subr.bf16.mxu0 0
        %1760 = vmatpush1.bf16.msra.mxu0 %v1732
        %1761 = vmatprep.subr.bf16.mxu0 0
        %1762 = vmatpush1.bf16.msra.mxu0 %v1731
        %1763 = vmatprep.subr.bf16.mxu0 0
        %1764 = vmatpush2.bf16.msra.mxu0 0
        %1765 = vmatprep.subr.bf16.mxu0 0
        %1766 = vmatpush2.bf16.msra.mxu0 0
        %1767 = vmatprep.subr.bf16.mxu0 0
        %1768 = vmatpush2.bf16.msra.mxu0 0
        %1769 = vmatprep.subr.bf16.mxu0 0
        %1770 = vmatpush2.bf16.msra.mxu0 0
        %1771 = vmatprep.subr.bf16.mxu0 0
        %1772 = vmatpush2.bf16.msra.mxu0 0
        %1773 = vmatprep.subr.bf16.mxu0 0
        %1774 = vmatpush2.bf16.msra.mxu0 0
        %1775 = vmatprep.subr.bf16.mxu0 0
        %1776 = vmatpush2.bf16.msra.mxu0 0
        %1777 = vmatprep.subr.bf16.mxu0 0
        %1778 = vmatpush2.bf16.msra.mxu0 0
        %1779 = vmatprep.mubr.bf16.mxu0 0
        %1780 = vmatmul.mubr.bf16.gmra.mxu0 %v1675
        %v1781 = vpop.f32.mrf.mxu0
        %v1782 = vadd.f32 %v1697, %v1781
        %v1783 = vpop.f32.mrf.mxu0
        %v1784 = vpop.f32.mrf.mxu0
        %v1785 = vpop.f32.mrf.mxu0
        %1786 = vdwg.mxu0
        %v1787 = vadd.f32 %v1138, %v1782
        %v1788 = vld [vmem:[%s936] sm:$0x1]
        %v1789 = vld [vmem:[%s939] sm:$0x1]
        %v1790 = vsel %vm1141, %v1787, 0.0
        %1791 = vadd.xlane.f32.xlu0 %v1790
        %v1792 = vpop.xlane.xlu0 %1791
        %v1793 = vmul.f32 %v1792, %v1145
        %v1794 = vsub.f32 %v1787, %v1793
        %v1795 = vmul.f32 %v1794, %v1794
        %v1796 = vsel %vm1141, %v1795, 0.0
        %1797 = vadd.xlane.f32.xlu0 %v1796
        %v1798 = vpop.xlane.xlu0 %1797
        %v1799 = vmul.f32 %v1798, %v1145
        %v1800 = vadd.f32 %v1799, 1e-05
        %v1801 = vrsqrt.pop %v1800
        %v1802 = vmul.f32 %v1794, %v1801
        %v1804 = vlaneseq
        %v1805 = vshrl.u32 %v1804, 7
        %v1806 = vsub.s32 0, %v1805
        %v1807 = vrot.slane %v1788, %v1806
        %v1809 = vmul.f32 %v1802, %v1807
        %v1811 = vlaneseq
        %v1812 = vshrl.u32 %v1811, 7
        %v1813 = vsub.s32 0, %v1812
        %v1814 = vrot.slane %v1789, %v1813
        %v1816 = vadd.f32 %v1809, %v1814
        %v1817 = vpack.c.bf16 %v1816, %v1816
        %v1818 = vld [vmem:[%s801] sm:$0xff]
        %v1819 = vld [vmem:[%s801 + $0x8] sm:$0xff]
        %v1820 = vld [vmem:[%s801 + $0x10] sm:$0xff]
        %v1821 = vld [vmem:[%s801 + $0x18] sm:$0xff]
        %v1822 = vld [vmem:[%s801 + $0x20] sm:$0xff]
        %v1823 = vld [vmem:[%s801 + $0x28] sm:$0xff]
        %v1824 = vld [vmem:[%s801 + $0x30] sm:$0xff]
        %v1825 = vld [vmem:[%s801 + $0x38] sm:$0xff]
        %v1826 = vld [vmem:[%s801 + $0x40] sm:$0xff]
        %v1827 = vld [vmem:[%s801 + $0x48] sm:$0xff]
        %v1828 = vld [vmem:[%s801 + $0x50] sm:$0xff]
        %v1829 = vld [vmem:[%s801 + $0x58] sm:$0xff]
        %v1830 = vld [vmem:[%s801 + $0x60] sm:$0xff]
        %v1831 = vld [vmem:[%s801 + $0x68] sm:$0xff]
        %v1832 = vld [vmem:[%s801 + $0x70] sm:$0xff]
        %v1833 = vld [vmem:[%s801 + $0x78] sm:$0xff]
        %v1834 = vld [vmem:[%s801 + $0x80] sm:$0xff]
        %v1835 = vld [vmem:[%s801 + $0x88] sm:$0xff]
        %v1836 = vld [vmem:[%s801 + $0x90] sm:$0xff]
        %v1837 = vld [vmem:[%s801 + $0x98] sm:$0xff]
        %v1838 = vld [vmem:[%s801 + $0xa0] sm:$0xff]
        %v1839 = vld [vmem:[%s801 + $0xa8] sm:$0xff]
        %v1840 = vld [vmem:[%s801 + $0xb0] sm:$0xff]
        %v1841 = vld [vmem:[%s801 + $0xb8] sm:$0xff]
        %v1842 = vld [vmem:[%s801 + $0xc0] sm:$0xff]
        %v1843 = vld [vmem:[%s801 + $0xc8] sm:$0xff]
        %v1844 = vld [vmem:[%s801 + $0xd0] sm:$0xff]
        %v1845 = vld [vmem:[%s801 + $0xd8] sm:$0xff]
        %v1846 = vld [vmem:[%s801 + $0xe0] sm:$0xff]
        %v1847 = vld [vmem:[%s801 + $0xe8] sm:$0xff]
        %v1848 = vld [vmem:[%s801 + $0xf0] sm:$0xff]
        %v1849 = vld [vmem:[%s801 + $0xf8] sm:$0xff]
        %v1850 = vld [vmem:[%s943] sm:$0xf]
        %v1852 = vlaneseq
        %v1853 = vshrl.u32 %v1852, 7
        %v1854 = vsub.s32 0, %v1853
        %v1855 = vrot.slane %v1850, %v1854
        %v1856 = vlaneseq
        %v1857 = vshrl.u32 %v1856, 7
        %v1858 = vsub.s32 1, %v1857
        %v1859 = vrot.slane %v1850, %v1858
        %v1860 = vlaneseq
        %v1861 = vshrl.u32 %v1860, 7
        %v1862 = vsub.s32 2, %v1861
        %v1863 = vrot.slane %v1850, %v1862
        %v1864 = vlaneseq
        %v1865 = vshrl.u32 %v1864, 7
        %v1866 = vsub.s32 3, %v1865
        %v1867 = vrot.slane %v1850, %v1866
        %v1904 = vunpack.c.l.b16 %v1818
        %v1905 = vunpack.c.h.b16 %v1818
        %v1906 = vunpack.c.l.b16 %v1819
        %v1907 = vunpack.c.h.b16 %v1819
        %v1908 = vunpack.c.l.b16 %v1820
        %v1909 = vunpack.c.h.b16 %v1820
        %v1910 = vunpack.c.l.b16 %v1821
        %v1911 = vunpack.c.h.b16 %v1821
        %v1912 = vunpack.c.l.b16 %v1822
        %v1913 = vunpack.c.h.b16 %v1822
        %v1914 = vunpack.c.l.b16 %v1823
        %v1915 = vunpack.c.h.b16 %v1823
        %v1916 = vunpack.c.l.b16 %v1824
        %v1917 = vunpack.c.h.b16 %v1824
        %v1918 = vunpack.c.l.b16 %v1825
        %v1919 = vunpack.c.h.b16 %v1825
        %v1920 = vunpack.c.l.b16 %v1826
        %v1921 = vunpack.c.h.b16 %v1826
        %v1922 = vunpack.c.l.b16 %v1827
        %v1923 = vunpack.c.h.b16 %v1827
        %v1924 = vunpack.c.l.b16 %v1828
        %v1925 = vunpack.c.h.b16 %v1828
        %v1926 = vunpack.c.l.b16 %v1829
        %v1927 = vunpack.c.h.b16 %v1829
        %v1928 = vunpack.c.l.b16 %v1830
        %v1929 = vunpack.c.h.b16 %v1830
        %v1930 = vunpack.c.l.b16 %v1831
        %v1931 = vunpack.c.h.b16 %v1831
        %v1932 = vunpack.c.l.b16 %v1832
        %v1933 = vunpack.c.h.b16 %v1832
        %v1934 = vunpack.c.l.b16 %v1833
        %v1935 = vunpack.c.h.b16 %v1833
        %v1936 = vunpack.c.l.b16 %v1834
        %v1937 = vunpack.c.h.b16 %v1834
        %v1938 = vunpack.c.l.b16 %v1835
        %v1939 = vunpack.c.h.b16 %v1835
        %v1940 = vunpack.c.l.b16 %v1836
        %v1941 = vunpack.c.h.b16 %v1836
        %v1942 = vunpack.c.l.b16 %v1837
        %v1943 = vunpack.c.h.b16 %v1837
        %v1944 = vunpack.c.l.b16 %v1838
        %v1945 = vunpack.c.h.b16 %v1838
        %v1946 = vunpack.c.l.b16 %v1839
        %v1947 = vunpack.c.h.b16 %v1839
        %v1948 = vunpack.c.l.b16 %v1840
        %v1949 = vunpack.c.h.b16 %v1840
        %v1950 = vunpack.c.l.b16 %v1841
        %v1951 = vunpack.c.h.b16 %v1841
        %v1952 = vunpack.c.l.b16 %v1842
        %v1953 = vunpack.c.h.b16 %v1842
        %v1954 = vunpack.c.l.b16 %v1843
        %v1955 = vunpack.c.h.b16 %v1843
        %v1956 = vunpack.c.l.b16 %v1844
        %v1957 = vunpack.c.h.b16 %v1844
        %v1958 = vunpack.c.l.b16 %v1845
        %v1959 = vunpack.c.h.b16 %v1845
        %v1960 = vunpack.c.l.b16 %v1846
        %v1961 = vunpack.c.h.b16 %v1846
        %v1962 = vunpack.c.l.b16 %v1847
        %v1963 = vunpack.c.h.b16 %v1847
        %v1964 = vunpack.c.l.b16 %v1848
        %v1965 = vunpack.c.h.b16 %v1848
        %v1966 = vunpack.c.l.b16 %v1849
        %v1967 = vunpack.c.h.b16 %v1849
        %v1968 = vpack.c.b16 %v1908, %v1904
        %v1969 = vpack.c.b16 %v1909, %v1905
        %v1970 = vpack.c.b16 %v1910, %v1906
        %v1971 = vpack.c.b16 %v1911, %v1907
        %v1972 = vpack.c.b16 %v1916, %v1912
        %v1973 = vpack.c.b16 %v1917, %v1913
        %v1974 = vpack.c.b16 %v1918, %v1914
        %v1975 = vpack.c.b16 %v1919, %v1915
        %v1976 = vpack.c.b16 %v1924, %v1920
        %v1977 = vpack.c.b16 %v1925, %v1921
        %v1978 = vpack.c.b16 %v1926, %v1922
        %v1979 = vpack.c.b16 %v1927, %v1923
        %v1980 = vpack.c.b16 %v1932, %v1928
        %v1981 = vpack.c.b16 %v1933, %v1929
        %v1982 = vpack.c.b16 %v1934, %v1930
        %v1983 = vpack.c.b16 %v1935, %v1931
        %v1984 = vpack.c.b16 %v1940, %v1936
        %v1985 = vpack.c.b16 %v1941, %v1937
        %v1986 = vpack.c.b16 %v1942, %v1938
        %v1987 = vpack.c.b16 %v1943, %v1939
        %v1988 = vpack.c.b16 %v1948, %v1944
        %v1989 = vpack.c.b16 %v1949, %v1945
        %v1990 = vpack.c.b16 %v1950, %v1946
        %v1991 = vpack.c.b16 %v1951, %v1947
        %v1992 = vpack.c.b16 %v1956, %v1952
        %v1993 = vpack.c.b16 %v1957, %v1953
        %v1994 = vpack.c.b16 %v1958, %v1954
        %v1995 = vpack.c.b16 %v1959, %v1955
        %v1996 = vpack.c.b16 %v1964, %v1960
        %v1997 = vpack.c.b16 %v1965, %v1961
        %v1998 = vpack.c.b16 %v1966, %v1962
        %v1999 = vpack.c.b16 %v1967, %v1963
        %2032 = vmatprep.subr.bf16.mxu0 %v1997
        %2033 = vmatpush1.bf16.msra.mxu0 %v1996
        %2034 = vmatprep.subr.bf16.mxu0 %v1993
        %2035 = vmatpush1.bf16.msra.mxu0 %v1992
        %2036 = vmatprep.subr.bf16.mxu0 %v1989
        %2037 = vmatpush1.bf16.msra.mxu0 %v1988
        %2038 = vmatprep.subr.bf16.mxu0 %v1985
        %2039 = vmatpush1.bf16.msra.mxu0 %v1984
        %2040 = vmatprep.subr.bf16.mxu0 %v1981
        %2041 = vmatpush1.bf16.msra.mxu0 %v1980
        %2042 = vmatprep.subr.bf16.mxu0 %v1977
        %2043 = vmatpush1.bf16.msra.mxu0 %v1976
        %2044 = vmatprep.subr.bf16.mxu0 %v1973
        %2045 = vmatpush1.bf16.msra.mxu0 %v1972
        %2046 = vmatprep.subr.bf16.mxu0 %v1969
        %2047 = vmatpush1.bf16.msra.mxu0 %v1968
        %2048 = vmatprep.subr.bf16.mxu0 0
        %2049 = vmatpush2.bf16.msra.mxu0 0
        %2050 = vmatprep.subr.bf16.mxu0 0
        %2051 = vmatpush2.bf16.msra.mxu0 0
        %2052 = vmatprep.subr.bf16.mxu0 0
        %2053 = vmatpush2.bf16.msra.mxu0 0
        %2054 = vmatprep.subr.bf16.mxu0 0
        %2055 = vmatpush2.bf16.msra.mxu0 0
        %2056 = vmatprep.subr.bf16.mxu0 0
        %2057 = vmatpush2.bf16.msra.mxu0 0
        %2058 = vmatprep.subr.bf16.mxu0 0
        %2059 = vmatpush2.bf16.msra.mxu0 0
        %2060 = vmatprep.subr.bf16.mxu0 0
        %2061 = vmatpush2.bf16.msra.mxu0 0
        %2062 = vmatprep.subr.bf16.mxu0 0
        %2063 = vmatpush2.bf16.msra.mxu0 0
        %2064 = vmatprep.mubr.bf16.mxu0 0
        %2065 = vmatmul.mubr.bf16.gmra.mxu0 %v1817
        %v2066 = vpop.f32.mrf.mxu0
        %v2067 = vadd.f32 %v1855, %v2066
        %v2068 = vpop.f32.mrf.mxu0
        %v2069 = vadd.f32 %v1859, %v2068
        %v2070 = vpop.f32.mrf.mxu0
        %v2071 = vpop.f32.mrf.mxu0
        %2072 = vdwg.mxu0
        %2073 = vmatprep.subr.bf16.mxu0 %v1999
        %2074 = vmatpush1.bf16.msra.mxu0 %v1998
        %2075 = vmatprep.subr.bf16.mxu0 %v1995
        %2076 = vmatpush1.bf16.msra.mxu0 %v1994
        %2077 = vmatprep.subr.bf16.mxu0 %v1991
        %2078 = vmatpush1.bf16.msra.mxu0 %v1990
        %2079 = vmatprep.subr.bf16.mxu0 %v1987
        %2080 = vmatpush1.bf16.msra.mxu0 %v1986
        %2081 = vmatprep.subr.bf16.mxu0 %v1983
        %2082 = vmatpush1.bf16.msra.mxu0 %v1982
        %2083 = vmatprep.subr.bf16.mxu0 %v1979
        %2084 = vmatpush1.bf16.msra.mxu0 %v1978
        %2085 = vmatprep.subr.bf16.mxu0 %v1975
        %2086 = vmatpush1.bf16.msra.mxu0 %v1974
        %2087 = vmatprep.subr.bf16.mxu0 %v1971
        %2088 = vmatpush1.bf16.msra.mxu0 %v1970
        %2089 = vmatprep.subr.bf16.mxu0 0
        %2090 = vmatpush2.bf16.msra.mxu0 0
        %2091 = vmatprep.subr.bf16.mxu0 0
        %2092 = vmatpush2.bf16.msra.mxu0 0
        %2093 = vmatprep.subr.bf16.mxu0 0
        %2094 = vmatpush2.bf16.msra.mxu0 0
        %2095 = vmatprep.subr.bf16.mxu0 0
        %2096 = vmatpush2.bf16.msra.mxu0 0
        %2097 = vmatprep.subr.bf16.mxu0 0
        %2098 = vmatpush2.bf16.msra.mxu0 0
        %2099 = vmatprep.subr.bf16.mxu0 0
        %2100 = vmatpush2.bf16.msra.mxu0 0
        %2101 = vmatprep.subr.bf16.mxu0 0
        %2102 = vmatpush2.bf16.msra.mxu0 0
        %2103 = vmatprep.subr.bf16.mxu0 0
        %2104 = vmatpush2.bf16.msra.mxu0 0
        %2105 = vmatprep.mubr.bf16.mxu0 0
        %2106 = vmatmul.mubr.bf16.gmra.mxu0 %v1817
        %v2107 = vpop.f32.mrf.mxu0
        %v2108 = vadd.f32 %v1863, %v2107
        %v2109 = vpop.f32.mrf.mxu0
        %v2110 = vadd.f32 %v1867, %v2109
        %v2111 = vpop.f32.mrf.mxu0
        %v2112 = vpop.f32.mrf.mxu0
        %2113 = vdwg.mxu0
        %v2114 = vpack.c.bf16 %v2067, %v2067
        %v2115 = vpack.c.bf16 %v2069, %v2069
        %v2116 = vpack.c.bf16 %v2108, %v2108
        %v2117 = vpack.c.bf16 %v2110, %v2110
        %v2118 = vmul.bf16 %v2114, 1071267802
        %v2119 = vmul.bf16 %v2115, 1071267802
        %v2120 = vmul.bf16 %v2116, 1071267802
        %v2121 = vmul.bf16 %v2117, 1071267802
        %v2122 = vxor.u32 %v2118, 2147516416
        %v2123 = vxor.u32 %v2119, 2147516416
        %v2124 = vxor.u32 %v2120, 2147516416
        %v2125 = vxor.u32 %v2121, 2147516416
        %v2127 = vmul.bf16 %v2122, 1069105081
        %v2128 = vpow.bf16.pop %v2127
        %v2130 = vmul.bf16 %v2123, 1069105081
        %v2131 = vpow.bf16.pop %v2130
        %v2133 = vmul.bf16 %v2124, 1069105081
        %v2134 = vpow.bf16.pop %v2133
        %v2136 = vmul.bf16 %v2125, 1069105081
        %v2137 = vpow.bf16.pop %v2136
        %v2138 = vadd.bf16 %v2128, 1065369472
        %v2139 = vadd.bf16 %v2131, 1065369472
        %v2140 = vadd.bf16 %v2134, 1065369472
        %v2141 = vadd.bf16 %v2137, 1065369472
        %v2142 = vrcp.bf16.pop %v2138
        %v2143 = vmul.bf16 1065369472, %v2142
        %v2144 = vrcp.bf16.pop %v2139
        %v2145 = vmul.bf16 1065369472, %v2144
        %v2146 = vrcp.bf16.pop %v2140
        %v2147 = vmul.bf16 1065369472, %v2146
        %v2148 = vrcp.bf16.pop %v2141
        %v2149 = vmul.bf16 1065369472, %v2148
        %v2150 = vmul.bf16 %v2114, %v2143
        %v2151 = vmul.bf16 %v2115, %v2145
        %v2152 = vmul.bf16 %v2116, %v2147
        %v2153 = vmul.bf16 %v2117, %v2149
        %v2154 = vld [vmem:[%s810] sm:$0xf]
        %v2155 = vld [vmem:[%s810 + $0x4] sm:$0xf]
        %v2156 = vld [vmem:[%s810 + $0x8] sm:$0xf]
        %v2157 = vld [vmem:[%s810 + $0xc] sm:$0xf]
        %v2158 = vld [vmem:[%s810 + $0x10] sm:$0xf]
        %v2159 = vld [vmem:[%s810 + $0x14] sm:$0xf]
        %v2160 = vld [vmem:[%s810 + $0x18] sm:$0xf]
        %v2161 = vld [vmem:[%s810 + $0x1c] sm:$0xf]
        %v2162 = vld [vmem:[%s810 + $0x20] sm:$0xf]
        %v2163 = vld [vmem:[%s810 + $0x24] sm:$0xf]
        %v2164 = vld [vmem:[%s810 + $0x28] sm:$0xf]
        %v2165 = vld [vmem:[%s810 + $0x2c] sm:$0xf]
        %v2166 = vld [vmem:[%s810 + $0x30] sm:$0xf]
        %v2167 = vld [vmem:[%s810 + $0x34] sm:$0xf]
        %v2168 = vld [vmem:[%s810 + $0x38] sm:$0xf]
        %v2169 = vld [vmem:[%s810 + $0x3c] sm:$0xf]
        %v2170 = vld [vmem:[%s810 + $0x40] sm:$0xf]
        %v2171 = vld [vmem:[%s810 + $0x44] sm:$0xf]
        %v2172 = vld [vmem:[%s810 + $0x48] sm:$0xf]
        %v2173 = vld [vmem:[%s810 + $0x4c] sm:$0xf]
        %v2174 = vld [vmem:[%s810 + $0x50] sm:$0xf]
        %v2175 = vld [vmem:[%s810 + $0x54] sm:$0xf]
        %v2176 = vld [vmem:[%s810 + $0x58] sm:$0xf]
        %v2177 = vld [vmem:[%s810 + $0x5c] sm:$0xf]
        %v2178 = vld [vmem:[%s810 + $0x60] sm:$0xf]
        %v2179 = vld [vmem:[%s810 + $0x64] sm:$0xf]
        %v2180 = vld [vmem:[%s810 + $0x68] sm:$0xf]
        %v2181 = vld [vmem:[%s810 + $0x6c] sm:$0xf]
        %v2182 = vld [vmem:[%s810 + $0x70] sm:$0xf]
        %v2183 = vld [vmem:[%s810 + $0x74] sm:$0xf]
        %v2184 = vld [vmem:[%s810 + $0x78] sm:$0xf]
        %v2185 = vld [vmem:[%s810 + $0x7c] sm:$0xf]
        %v2186 = vld [vmem:[%s810 + $0x80] sm:$0xf]
        %v2187 = vld [vmem:[%s810 + $0x84] sm:$0xf]
        %v2188 = vld [vmem:[%s810 + $0x88] sm:$0xf]
        %v2189 = vld [vmem:[%s810 + $0x8c] sm:$0xf]
        %v2190 = vld [vmem:[%s810 + $0x90] sm:$0xf]
        %v2191 = vld [vmem:[%s810 + $0x94] sm:$0xf]
        %v2192 = vld [vmem:[%s810 + $0x98] sm:$0xf]
        %v2193 = vld [vmem:[%s810 + $0x9c] sm:$0xf]
        %v2194 = vld [vmem:[%s810 + $0xa0] sm:$0xf]
        %v2195 = vld [vmem:[%s810 + $0xa4] sm:$0xf]
        %v2196 = vld [vmem:[%s810 + $0xa8] sm:$0xf]
        %v2197 = vld [vmem:[%s810 + $0xac] sm:$0xf]
        %v2198 = vld [vmem:[%s810 + $0xb0] sm:$0xf]
        %v2199 = vld [vmem:[%s810 + $0xb4] sm:$0xf]
        %v2200 = vld [vmem:[%s810 + $0xb8] sm:$0xf]
        %v2201 = vld [vmem:[%s810 + $0xbc] sm:$0xf]
        %v2202 = vld [vmem:[%s810 + $0xc0] sm:$0xf]
        %v2203 = vld [vmem:[%s810 + $0xc4] sm:$0xf]
        %v2204 = vld [vmem:[%s810 + $0xc8] sm:$0xf]
        %v2205 = vld [vmem:[%s810 + $0xcc] sm:$0xf]
        %v2206 = vld [vmem:[%s810 + $0xd0] sm:$0xf]
        %v2207 = vld [vmem:[%s810 + $0xd4] sm:$0xf]
        %v2208 = vld [vmem:[%s810 + $0xd8] sm:$0xf]
        %v2209 = vld [vmem:[%s810 + $0xdc] sm:$0xf]
        %v2210 = vld [vmem:[%s810 + $0xe0] sm:$0xf]
        %v2211 = vld [vmem:[%s810 + $0xe4] sm:$0xf]
        %v2212 = vld [vmem:[%s810 + $0xe8] sm:$0xf]
        %v2213 = vld [vmem:[%s810 + $0xec] sm:$0xf]
        %v2214 = vld [vmem:[%s810 + $0xf0] sm:$0xf]
        %v2215 = vld [vmem:[%s810 + $0xf4] sm:$0xf]
        %v2216 = vld [vmem:[%s810 + $0xf8] sm:$0xf]
        %v2217 = vld [vmem:[%s810 + $0xfc] sm:$0xf]
        %v2218 = vld [vmem:[%s946] sm:$0x1]
        %v2220 = vlaneseq
        %v2221 = vshrl.u32 %v2220, 7
        %v2222 = vsub.s32 0, %v2221
        %v2223 = vrot.slane %v2218, %v2222
        %v2289 = vunpack.c.l.b16 %v2154
        %v2290 = vunpack.c.l.b16 %v2155
        %v2291 = vunpack.c.l.b16 %v2156
        %v2292 = vunpack.c.l.b16 %v2157
        %v2293 = vunpack.c.l.b16 %v2158
        %v2294 = vunpack.c.l.b16 %v2159
        %v2295 = vunpack.c.l.b16 %v2160
        %v2296 = vunpack.c.l.b16 %v2161
        %v2297 = vunpack.c.l.b16 %v2162
        %v2298 = vunpack.c.l.b16 %v2163
        %v2299 = vunpack.c.l.b16 %v2164
        %v2300 = vunpack.c.l.b16 %v2165
        %v2301 = vunpack.c.l.b16 %v2166
        %v2302 = vunpack.c.l.b16 %v2167
        %v2303 = vunpack.c.l.b16 %v2168
        %v2304 = vunpack.c.l.b16 %v2169
        %v2305 = vunpack.c.l.b16 %v2170
        %v2306 = vunpack.c.l.b16 %v2171
        %v2307 = vunpack.c.l.b16 %v2172
        %v2308 = vunpack.c.l.b16 %v2173
        %v2309 = vunpack.c.l.b16 %v2174
        %v2310 = vunpack.c.l.b16 %v2175
        %v2311 = vunpack.c.l.b16 %v2176
        %v2312 = vunpack.c.l.b16 %v2177
        %v2313 = vunpack.c.l.b16 %v2178
        %v2314 = vunpack.c.l.b16 %v2179
        %v2315 = vunpack.c.l.b16 %v2180
        %v2316 = vunpack.c.l.b16 %v2181
        %v2317 = vunpack.c.l.b16 %v2182
        %v2318 = vunpack.c.l.b16 %v2183
        %v2319 = vunpack.c.l.b16 %v2184
        %v2320 = vunpack.c.l.b16 %v2185
        %v2321 = vunpack.c.l.b16 %v2186
        %v2322 = vunpack.c.l.b16 %v2187
        %v2323 = vunpack.c.l.b16 %v2188
        %v2324 = vunpack.c.l.b16 %v2189
        %v2325 = vunpack.c.l.b16 %v2190
        %v2326 = vunpack.c.l.b16 %v2191
        %v2327 = vunpack.c.l.b16 %v2192
        %v2328 = vunpack.c.l.b16 %v2193
        %v2329 = vunpack.c.l.b16 %v2194
        %v2330 = vunpack.c.l.b16 %v2195
        %v2331 = vunpack.c.l.b16 %v2196
        %v2332 = vunpack.c.l.b16 %v2197
        %v2333 = vunpack.c.l.b16 %v2198
        %v2334 = vunpack.c.l.b16 %v2199
        %v2335 = vunpack.c.l.b16 %v2200
        %v2336 = vunpack.c.l.b16 %v2201
        %v2337 = vunpack.c.l.b16 %v2202
        %v2338 = vunpack.c.l.b16 %v2203
        %v2339 = vunpack.c.l.b16 %v2204
        %v2340 = vunpack.c.l.b16 %v2205
        %v2341 = vunpack.c.l.b16 %v2206
        %v2342 = vunpack.c.l.b16 %v2207
        %v2343 = vunpack.c.l.b16 %v2208
        %v2344 = vunpack.c.l.b16 %v2209
        %v2345 = vunpack.c.l.b16 %v2210
        %v2346 = vunpack.c.l.b16 %v2211
        %v2347 = vunpack.c.l.b16 %v2212
        %v2348 = vunpack.c.l.b16 %v2213
        %v2349 = vunpack.c.l.b16 %v2214
        %v2350 = vunpack.c.l.b16 %v2215
        %v2351 = vunpack.c.l.b16 %v2216
        %v2352 = vunpack.c.l.b16 %v2217
        %v2353 = vpack.c.b16 %v2290, %v2289
        %v2354 = vpack.c.b16 %v2292, %v2291
        %v2355 = vpack.c.b16 %v2294, %v2293
        %v2356 = vpack.c.b16 %v2296, %v2295
        %v2357 = vpack.c.b16 %v2298, %v2297
        %v2358 = vpack.c.b16 %v2300, %v2299
        %v2359 = vpack.c.b16 %v2302, %v2301
        %v2360 = vpack.c.b16 %v2304, %v2303
        %v2361 = vpack.c.b16 %v2306, %v2305
        %v2362 = vpack.c.b16 %v2308, %v2307
        %v2363 = vpack.c.b16 %v2310, %v2309
        %v2364 = vpack.c.b16 %v2312, %v2311
        %v2365 = vpack.c.b16 %v2314, %v2313
        %v2366 = vpack.c.b16 %v2316, %v2315
        %v2367 = vpack.c.b16 %v2318, %v2317
        %v2368 = vpack.c.b16 %v2320, %v2319
        %v2369 = vpack.c.b16 %v2322, %v2321
        %v2370 = vpack.c.b16 %v2324, %v2323
        %v2371 = vpack.c.b16 %v2326, %v2325
        %v2372 = vpack.c.b16 %v2328, %v2327
        %v2373 = vpack.c.b16 %v2330, %v2329
        %v2374 = vpack.c.b16 %v2332, %v2331
        %v2375 = vpack.c.b16 %v2334, %v2333
        %v2376 = vpack.c.b16 %v2336, %v2335
        %v2377 = vpack.c.b16 %v2338, %v2337
        %v2378 = vpack.c.b16 %v2340, %v2339
        %v2379 = vpack.c.b16 %v2342, %v2341
        %v2380 = vpack.c.b16 %v2344, %v2343
        %v2381 = vpack.c.b16 %v2346, %v2345
        %v2382 = vpack.c.b16 %v2348, %v2347
        %v2383 = vpack.c.b16 %v2350, %v2349
        %v2384 = vpack.c.b16 %v2352, %v2351
        %2417 = vmatprep.subr.bf16.mxu0 0
        %2418 = vmatpush1.bf16.msra.mxu0 %v2360
        %2419 = vmatprep.subr.bf16.mxu0 0
        %2420 = vmatpush1.bf16.msra.mxu0 %v2359
        %2421 = vmatprep.subr.bf16.mxu0 0
        %2422 = vmatpush1.bf16.msra.mxu0 %v2358
        %2423 = vmatprep.subr.bf16.mxu0 0
        %2424 = vmatpush1.bf16.msra.mxu0 %v2357
        %2425 = vmatprep.subr.bf16.mxu0 0
        %2426 = vmatpush1.bf16.msra.mxu0 %v2356
        %2427 = vmatprep.subr.bf16.mxu0 0
        %2428 = vmatpush1.bf16.msra.mxu0 %v2355
        %2429 = vmatprep.subr.bf16.mxu0 0
        %2430 = vmatpush1.bf16.msra.mxu0 %v2354
        %2431 = vmatprep.subr.bf16.mxu0 0
        %2432 = vmatpush1.bf16.msra.mxu0 %v2353
        %2433 = vmatprep.subr.bf16.mxu0 0
        %2434 = vmatpush2.bf16.msra.mxu0 %v2368
        %2435 = vmatprep.subr.bf16.mxu0 0
        %2436 = vmatpush2.bf16.msra.mxu0 %v2367
        %2437 = vmatprep.subr.bf16.mxu0 0
        %2438 = vmatpush2.bf16.msra.mxu0 %v2366
        %2439 = vmatprep.subr.bf16.mxu0 0
        %2440 = vmatpush2.bf16.msra.mxu0 %v2365
        %2441 = vmatprep.subr.bf16.mxu0 0
        %2442 = vmatpush2.bf16.msra.mxu0 %v2364
        %2443 = vmatprep.subr.bf16.mxu0 0
        %2444 = vmatpush2.bf16.msra.mxu0 %v2363
        %2445 = vmatprep.subr.bf16.mxu0 0
        %2446 = vmatpush2.bf16.msra.mxu0 %v2362
        %2447 = vmatprep.subr.bf16.mxu0 0
        %2448 = vmatpush2.bf16.msra.mxu0 %v2361
        %2449 = vmatprep.mubr.bf16.mxu0 %v2151
        %2450 = vmatmul.mubr.bf16.gmra.mxu0 %v2150
        %v2451 = vpop.f32.mrf.mxu0
        %v2452 = vadd.f32 %v2223, %v2451
        %v2453 = vpop.f32.mrf.mxu0
        %v2454 = vpop.f32.mrf.mxu0
        %v2455 = vpop.f32.mrf.mxu0
        %2456 = vdwg.mxu0
        %2457 = vmatprep.subr.bf16.mxu0 0
        %2458 = vmatpush1.bf16.msra.mxu0 %v2376
        %2459 = vmatprep.subr.bf16.mxu0 0
        %2460 = vmatpush1.bf16.msra.mxu0 %v2375
        %2461 = vmatprep.subr.bf16.mxu0 0
        %2462 = vmatpush1.bf16.msra.mxu0 %v2374
        %2463 = vmatprep.subr.bf16.mxu0 0
        %2464 = vmatpush1.bf16.msra.mxu0 %v2373
        %2465 = vmatprep.subr.bf16.mxu0 0
        %2466 = vmatpush1.bf16.msra.mxu0 %v2372
        %2467 = vmatprep.subr.bf16.mxu0 0
        %2468 = vmatpush1.bf16.msra.mxu0 %v2371
        %2469 = vmatprep.subr.bf16.mxu0 0
        %2470 = vmatpush1.bf16.msra.mxu0 %v2370
        %2471 = vmatprep.subr.bf16.mxu0 0
        %2472 = vmatpush1.bf16.msra.mxu0 %v2369
        %2473 = vmatprep.subr.bf16.mxu0 0
        %2474 = vmatpush2.bf16.msra.mxu0 %v2384
        %2475 = vmatprep.subr.bf16.mxu0 0
        %2476 = vmatpush2.bf16.msra.mxu0 %v2383
        %2477 = vmatprep.subr.bf16.mxu0 0
        %2478 = vmatpush2.bf16.msra.mxu0 %v2382
        %2479 = vmatprep.subr.bf16.mxu0 0
        %2480 = vmatpush2.bf16.msra.mxu0 %v2381
        %2481 = vmatprep.subr.bf16.mxu0 0
        %2482 = vmatpush2.bf16.msra.mxu0 %v2380
        %2483 = vmatprep.subr.bf16.mxu0 0
        %2484 = vmatpush2.bf16.msra.mxu0 %v2379
        %2485 = vmatprep.subr.bf16.mxu0 0
        %2486 = vmatpush2.bf16.msra.mxu0 %v2378
        %2487 = vmatprep.subr.bf16.mxu0 0
        %2488 = vmatpush2.bf16.msra.mxu0 %v2377
        %2489 = vmatprep.mubr.bf16.mxu0 %v2153
        %2490 = vmatmul.mubr.bf16.gmra.mxu0 %v2152
        %v2491 = vpop.f32.mrf.mxu0
        %v2492 = vadd.f32 %v2452, %v2491
        %v2493 = vpop.f32.mrf.mxu0
        %v2494 = vpop.f32.mrf.mxu0
        %v2495 = vpop.f32.mrf.mxu0
        %2496 = vdwg.mxu0
        %v2497 = vadd.f32 %v1787, %v2492
        %2498 = vst [vmem:[%s1137] sm:$0x1f] %v2497
        %p2499 = scmp.eq.s32.totalorder %s40, 1
        // Predicated region
        $region133: #{tpu_custom_call.1} parent=99 // pred_check
          %p2500 = pneg %p2499
        $region134: #{tpu_custom_call.1} parent=99 // pred_check_branch
          %2502 = sbr.rel (%p2500) target = $region136
        $region135: #{tpu_custom_call.1} parent=99 // pred_region
          %v2503 = vld [vmem:[%s17] sm:$0x1]
          %v2504 = vld [vmem:[%s18] sm:$0x1]
          %vm2505 = vcmask 1040384
          %v2506 = vsel %vm2505, %v2497, 0.0
          %2507 = vadd.xlane.f32.xlu0 %v2506
          %v2508 = vpop.xlane.xlu0 %2507
          %v2509 = vmul.f32 %v2508, %v1145
          %v2510 = vsub.f32 %v2497, %v2509
          %v2511 = vmul.f32 %v2510, %v2510
          %v2512 = vsel %vm2505, %v2511, 0.0
          %2513 = vadd.xlane.f32.xlu0 %v2512
          %v2514 = vpop.xlane.xlu0 %2513
          %v2515 = vmul.f32 %v2514, %v1145
          %v2516 = vadd.f32 %v2515, 1e-05
          %v2517 = vrsqrt.pop %v2516
          %v2518 = vmul.f32 %v2510, %v2517
          %v2519 = vmul.f32 %v2518, %v2503
          %v2520 = vadd.f32 %v2519, %v2504
          %v2521 = vpack.c.bf16 %v2520, %v2520
          %v2522 = vld [vmem:[#allocation13] sm:$0xf]
          %v2523 = vld [vmem:[#allocation13 + $0x4] sm:$0xf]
          %v2524 = vld [vmem:[#allocation13 + $0x8] sm:$0xf]
          %v2525 = vld [vmem:[#allocation13 + $0xc] sm:$0xf]
          %v2526 = vld [vmem:[#allocation13 + $0x10] sm:$0xf]
          %v2527 = vld [vmem:[#allocation13 + $0x14] sm:$0xf]
          %v2528 = vld [vmem:[#allocation13 + $0x18] sm:$0xf]
          %v2529 = vld [vmem:[#allocation13 + $0x1c] sm:$0xf]
          %v2530 = vld [vmem:[#allocation13 + $0x20] sm:$0xf]
          %v2531 = vld [vmem:[#allocation13 + $0x24] sm:$0xf]
          %v2532 = vld [vmem:[#allocation13 + $0x28] sm:$0xf]
          %v2533 = vld [vmem:[#allocation13 + $0x2c] sm:$0xf]
          %v2534 = vld [vmem:[#allocation13 + $0x30] sm:$0xf]
          %v2535 = vld [vmem:[#allocation13 + $0x34] sm:$0xf]
          %v2536 = vld [vmem:[#allocation13 + $0x38] sm:$0xf]
          %v2537 = vld [vmem:[#allocation13 + $0x3c] sm:$0xf]
          %v2554 = vunpack.c.l.b16 %v2522
          %v2555 = vunpack.c.l.b16 %v2523
          %v2556 = vunpack.c.l.b16 %v2524
          %v2557 = vunpack.c.l.b16 %v2525
          %v2558 = vunpack.c.l.b16 %v2526
          %v2559 = vunpack.c.l.b16 %v2527
          %v2560 = vunpack.c.l.b16 %v2528
          %v2561 = vunpack.c.l.b16 %v2529
          %v2562 = vunpack.c.l.b16 %v2530
          %v2563 = vunpack.c.l.b16 %v2531
          %v2564 = vunpack.c.l.b16 %v2532
          %v2565 = vunpack.c.l.b16 %v2533
          %v2566 = vunpack.c.l.b16 %v2534
          %v2567 = vunpack.c.l.b16 %v2535
          %v2568 = vunpack.c.l.b16 %v2536
          %v2569 = vunpack.c.l.b16 %v2537
          %v2570 = vpack.c.b16 %v2555, %v2554
          %v2571 = vpack.c.b16 %v2557, %v2556
          %v2572 = vpack.c.b16 %v2559, %v2558
          %v2573 = vpack.c.b16 %v2561, %v2560
          %v2574 = vpack.c.b16 %v2563, %v2562
          %v2575 = vpack.c.b16 %v2565, %v2564
          %v2576 = vpack.c.b16 %v2567, %v2566
          %v2577 = vpack.c.b16 %v2569, %v2568
          %2586 = vmatprep.subr.bf16.mxu0 0
          %2587 = vmatpush1.bf16.msra.mxu0 %v2577
          %2588 = vmatprep.subr.bf16.mxu0 0
          %2589 = vmatpush1.bf16.msra.mxu0 %v2576
          %2590 = vmatprep.subr.bf16.mxu0 0
          %2591 = vmatpush1.bf16.msra.mxu0 %v2575
          %2592 = vmatprep.subr.bf16.mxu0 0
          %2593 = vmatpush1.bf16.msra.mxu0 %v2574
          %2594 = vmatprep.subr.bf16.mxu0 0
          %2595 = vmatpush1.bf16.msra.mxu0 %v2573
          %2596 = vmatprep.subr.bf16.mxu0 0
          %2597 = vmatpush1.bf16.msra.mxu0 %v2572
          %2598 = vmatprep.subr.bf16.mxu0 0
          %2599 = vmatpush1.bf16.msra.mxu0 %v2571
          %2600 = vmatprep.subr.bf16.mxu0 0
          %2601 = vmatpush1.bf16.msra.mxu0 %v2570
          %2602 = vmatprep.subr.bf16.mxu0 0
          %2603 = vmatpush2.bf16.msra.mxu0 0
          %2604 = vmatprep.subr.bf16.mxu0 0
          %2605 = vmatpush2.bf16.msra.mxu0 0
          %2606 = vmatprep.subr.bf16.mxu0 0
          %2607 = vmatpush2.bf16.msra.mxu0 0
          %2608 = vmatprep.subr.bf16.mxu0 0
          %2609 = vmatpush2.bf16.msra.mxu0 0
          %2610 = vmatprep.subr.bf16.mxu0 0
          %2611 = vmatpush2.bf16.msra.mxu0 0
          %2612 = vmatprep.subr.bf16.mxu0 0
          %2613 = vmatpush2.bf16.msra.mxu0 0
          %2614 = vmatprep.subr.bf16.mxu0 0
          %2615 = vmatpush2.bf16.msra.mxu0 0
          %2616 = vmatprep.subr.bf16.mxu0 0
          %2617 = vmatpush2.bf16.msra.mxu0 0
          %2618 = vmatprep.mubr.bf16.mxu0 0
          %2619 = vmatmul.mubr.bf16.gmra.mxu0 %v2521
          %v2620 = vpop.f32.mrf.mxu0
          %v2621 = vadd.f32 0.0, %v2620
          %v2622 = vpop.f32.mrf.mxu0
          %v2623 = vpop.f32.mrf.mxu0
          %v2624 = vpop.f32.mrf.mxu0
          %2625 = vdwg.mxu0
          %2626 = vst [vmem:[%s915] sm:$0x1] %v2621
        $region136: #{tpu_custom_call.1} parent=99 // pred_fallthru
          _
        %s2627 = sand.u32 %s541, 1
        %s2628 = scalar_lea.sflag [#allocation6], %s2627
        %s2629 = sand.u32 %s541, 1
        %s2630 = scalar_lea.vmem [#allocation14], %s2629
        // Predicated region
        $region137: #{tpu_custom_call.1} parent=99 // pred_check
          %p2631 = pneg %p551
        $region138: #{tpu_custom_call.1} parent=99 // pred_check_branch
          %2633 = sbr.rel (%p2631) target = $region140
        $region139: #{tpu_custom_call.1} parent=99 // pred_region
          %s2635 = ssub.s32 16, 16
          %2636 = vsyncadd %s2628, %s2635
          %s2637 = smul.addr %s41, 16
          %s2638 = scalar_lea.hbm %s20, %s2637
          %s2640 = sshll.u32 %s2630, 4
          %s2641 = int_to_ptr.vmem [resolvable:$true] %s2640
          %2643 = dma.vmem_to_hbm [thread:$0]  %s2641, 16, %s2638, %s2628
        $region140: #{tpu_custom_call.1} parent=99 // pred_fallthru
          _
      $region100: #{tpu_custom_call.1} parent=5 // pred_fallthru
        _
      %p2644 = scmp.le.s32.totalorder 2, %s31
      // Predicated region
      $region141: #{tpu_custom_call.1} parent=5 // pred_check
        %p2645 = pneg %p2644
      $region142: #{tpu_custom_call.1} parent=5 // pred_check_branch
        %2647 = sbr.rel (%p2645) target = $region144
      $region143: #{tpu_custom_call.1} parent=5 // pred_region
        %s2648 = ssub.s32 %s31, 2
        // Predicated region
        $region145: #{tpu_custom_call.1} parent=143 // pred_check
          %p2649 = pneg %p557
        $region146: #{tpu_custom_call.1} parent=143 // pred_check_branch
          %2651 = sbr.rel (%p2649) target = $region148
        $region147: #{tpu_custom_call.1} parent=143 // pred_region
          %s2652 = sand.u32 %s542, 1
          %s2653 = scalar_lea.sflag [#allocation6], %s2652
          %s2654 = sand.u32 %s542, 1
          %s2655 = scalar_lea.vmem [#allocation14], %s2654
          %2656 = dma.done %s2653, 16
        $region148: #{tpu_custom_call.1} parent=143 // pred_fallthru
          _
      $region144: #{tpu_custom_call.1} parent=5 // pred_fallthru
        _
    $region6: #{tpu_custom_call.1} parent=1 // loop_footer
      %s35 = sadd.s32 1, %s31
    $region7: #{tpu_custom_call.1} parent=1 // loop_footer_branch
      %30 = sbr.rel target = $region3
    $region8: #{tpu_custom_call.1} parent=1 // loop_exit
      _
    %2657 = vsyncpa [#allocation5], 1
    %s2658 = scalar_lea.sflag [#allocation5], 1
    %2659 = vsyncpa %s2658, 1
    %2660 = vsyncpa [#allocation8], 1
    %2661 = vsyncpa [#allocation6], 1
    %s2662 = scalar_lea.sflag [#allocation6], 1
    %2663 = vsyncpa %s2662, 1

</llo_original>
